<compile_context>
chip_gen: v7x
topology: tpu7x:2x2x1
jax: 0.10.0
libtpu: 0.0.40
codegen_flags: <defaults>
</compile_context>

<pallas_src>
import math

import jax
import jax.numpy as jnp
from jax.experimental import pallas as pl
from jax.experimental.pallas import tpu as pltpu

NUM_HEADS = 4
LN_EPS = 1e-5
NUM_KERNEL_PARAMS = 24  # stacked per-layer parameter arrays fed to the kernel


# ---------------------------------------------------------------------------
# In-kernel math. Activations are 2D (seq, d) f32; weight matrices are bf16.
# ---------------------------------------------------------------------------
def _layer_norm(x, g, b):
    mu = jnp.mean(x, axis=-1, keepdims=True)
    var = jnp.mean((x - mu) ** 2, axis=-1, keepdims=True)
    return (x - mu) * jax.lax.rsqrt(var + LN_EPS) * g + b


def _mm(x, w):
    """Lane-dense 2D matmul: bf16 operands, f32 accumulation on the MXU."""
    return jnp.dot(x.astype(jnp.bfloat16), w.astype(jnp.bfloat16),
                   preferred_element_type=jnp.float32)


def _split_heads(x2d, num_heads):
    """(n, H*dh) -> (H, n, dh) via static lane slices + leading-axis concat."""
    n, d = x2d.shape
    dh = d // num_heads
    return jnp.concatenate(
        [x2d[None, :, h * dh:(h + 1) * dh] for h in range(num_heads)], axis=0)


def _merge_heads(x3d):
    """(H, n, dh) -> (n, H*dh) via static leading index + lane concat."""
    return jnp.concatenate([x3d[h] for h in range(x3d.shape[0])], axis=-1)


def _attn_core(qp, kp, vp, wo, bo):
    """qp: (H, nq, dh)  kp, vp: (H, nk, dh)  wo: (d, d) bf16  bo: (1, d).

    The 1/sqrt(dh) score scale is already folded into the Q projection.
    """
    s = jnp.einsum('hqd,hkd->hqk', qp.astype(jnp.bfloat16),
                   kp.astype(jnp.bfloat16),
                   preferred_element_type=jnp.float32)
    s = s - jnp.max(s, axis=-1, keepdims=True)
    p = jnp.exp(s)
    inv = pl.reciprocal(jnp.sum(p, axis=-1, keepdims=True), approx=True)
    p = p * inv
    o = jnp.einsum('hqk,hkd->hqd', p.astype(jnp.bfloat16),
                   vp.astype(jnp.bfloat16),
                   preferred_element_type=jnp.float32)
    # Merge heads once (XLU relayout), then a single lane-dense output matmul.
    return _mm(_merge_heads(o), wo) + bo


def _self_attn(q, qpos, wqk, bqk, wv, bv, wo, bo, num_heads):
    """Fused lane-dense Q/K projection (both consume q + qpos); V reads q."""
    x = q + qpos
    qk2 = _mm(x, wqk) + bqk                    # (nq, 2d); Q half pre-scaled
    v2 = _mm(q, wv) + bv                       # (nq, d)
    qk_h = _split_heads(qk2, 2 * num_heads)    # (2H, nq, dh)
    qp = qk_h[:num_heads]
    kp = qk_h[num_heads:]
    vp = _split_heads(v2, num_heads)
    return _attn_core(qp, kp, vp, wo, bo)


def _cross_attn(q, qpos, k, kpos, v, wq, bq, wk, bk, wv, bv, wo, bo,
                num_heads):
    qp = _split_heads(_mm(q + qpos, wq) + bq, num_heads)
    kp = _split_heads(_mm(k + kpos, wk) + bk, num_heads)
    vp = _split_heads(_mm(v, wv) + bv, num_heads)
    return _attn_core(qp, kp, vp, wo, bo)


# ---------------------------------------------------------------------------
# Fused kernel: grid = (batch, layer).  One batch element per parallel step,
# layers streamed on the inner (arbitrary) axis; q carried in VMEM scratch.
# ---------------------------------------------------------------------------
def _decoder_stack_kernel(*refs):
    # refs: [q, k, v, qpos, kpos] + NUM_KERNEL_PARAMS per-layer weight blocks
    #       + [out_ref] + [q_scratch]
    q_ref, k_ref, v_ref, qpos_ref, kpos_ref = refs[:5]
    param_refs = refs[5:5 + NUM_KERNEL_PARAMS]
    out_ref = refs[5 + NUM_KERNEL_PARAMS]
    q_scr = refs[5 + NUM_KERNEL_PARAMS + 1]

    layer = pl.program_id(1)
    num_layers = pl.num_programs(1)

    @pl.when(layer == 0)
    def _init():
        q_scr[...] = q_ref[0].astype(jnp.float32)

    (sa_wqk, sa_bqk, sa_wv, sa_bv, sa_wo, sa_bo,
     ca_wq, ca_bq, ca_wk, ca_bk, ca_wv, ca_bv, ca_wo, ca_bo,
     f_w1, f_b1, f_w2, f_b2,
     n1g, n1b, n2g, n2b, n3g, n3b) = (r[0] for r in param_refs)

    q = q_scr[...]
    k = k_ref[0]
    v = v_ref[0]
    qpos = qpos_ref[0]
    kpos = kpos_ref[0]

    # self_attn -> norm
    sa = _self_attn(q, qpos, sa_wqk, sa_bqk, sa_wv, sa_bv, sa_wo, sa_bo,
                    NUM_HEADS)
    q = _layer_norm(q + sa, n1g, n1b)

    # cross_attn -> norm
    ca = _cross_attn(q, qpos, k, kpos, v,
                     ca_wq, ca_bq, ca_wk, ca_bk, ca_wv, ca_bv, ca_wo, ca_bo,
                     NUM_HEADS)
    q = _layer_norm(q + ca, n2g, n2b)

    # ffn -> norm  (dropout inside attention / FFN is identity at inference)
    hdn = jnp.maximum(_mm(q, f_w1) + f_b1, 0.0)
    ff = _mm(hdn, f_w2) + f_b2
    q = _layer_norm(q + ff, n3g, n3b)

    q_scr[...] = q

    @pl.when(layer == num_layers - 1)
    def _finish():
        out_ref[0] = q.astype(out_ref.dtype)


def _run_stack(q_bsd, k_bsd, v_bsd, qp_bsd, kp_bsd, stacked_params):
    bs, nq, d = q_bsd.shape
    nk = k_bsd.shape[1]
    num_layers = stacked_params[0].shape[0]

    # Activation blocks depend only on the batch grid index -> DMA'd once per
    # batch element, kept resident across the layer steps.
    data_specs = [
        pl.BlockSpec((1, nq, d), lambda b, l: (b, 0, 0)),   # query
        pl.BlockSpec((1, nk, d), lambda b, l: (b, 0, 0)),   # key
        pl.BlockSpec((1, nk, d), lambda b, l: (b, 0, 0)),   # value
        pl.BlockSpec((1, nq, d), lambda b, l: (b, 0, 0)),   # query_pos
        pl.BlockSpec((1, nk, d), lambda b, l: (b, 0, 0)),   # key_pos
    ]
    # One layer of weights per grid step (default Buffered(2) double-buffering
    # streams layer l+1 while layer l computes; only ~2 layers are resident).
    param_specs = [
        pl.BlockSpec((1,) + p.shape[1:],
                     lambda b, l, _n=p.ndim: (l,) + (0,) * (_n - 1))
        for p in stacked_params
    ]

    return pl.pallas_call(
        _decoder_stack_kernel,
        out_shape=jax.ShapeDtypeStruct((bs, nq, d), q_bsd.dtype),
        grid_spec=pltpu.PrefetchScalarGridSpec(
            num_scalar_prefetch=0,
            grid=(bs, num_layers),
            in_specs=data_specs + param_specs,
            out_specs=pl.BlockSpec((1, nq, d), lambda b, l: (b, 0, 0)),
            scratch_shapes=[pltpu.VMEM((nq, d), jnp.float32)]),
        compiler_params=pltpu.CompilerParams(
            dimension_semantics=("parallel", "arbitrary"),
            vmem_limit_bytes=32 * 1024 * 1024),
    )(q_bsd, k_bsd, v_bsd, qp_bsd, kp_bsd, *stacked_params)


@jax.jit
def transformer_layer_sequence(query, key, value, query_pos, key_pos,
                               stacked_params):
    """query: (num_queries, bs, d); key/value/key_pos: (num_keys, bs, d)."""
    q = jnp.transpose(query, (1, 0, 2))
    k = jnp.transpose(key, (1, 0, 2))
    v = jnp.transpose(value, (1, 0, 2))
    qp = jnp.transpose(query_pos, (1, 0, 2))
    kp = jnp.transpose(key_pos, (1, 0, 2))
    out = _run_stack(q, k, v, qp, kp, stacked_params)
    return jnp.transpose(out, (1, 0, 2))


# ---------------------------------------------------------------------------
# Parameter init (canonical x @ W + b layout) and kernel re-layout.
# ---------------------------------------------------------------------------
def init_layer_params(key, d, ffn_dim):
    ks = jax.random.split(key, 20)

    def mat(k_, shape, s=0.05):
        return jax.random.normal(k_, shape, jnp.float32) * s

    sa = (mat(ks[0], (d, d)), mat(ks[10], (1, d), 0.02),
          mat(ks[1], (d, d)), mat(ks[11], (1, d), 0.02),
          mat(ks[2], (d, d)), mat(ks[12], (1, d), 0.02),
          mat(ks[3], (d, d)), mat(ks[13], (1, d), 0.02))
    ca = (mat(ks[4], (d, d)), mat(ks[14], (1, d), 0.02),
          mat(ks[5], (d, d)), mat(ks[15], (1, d), 0.02),
          mat(ks[6], (d, d)), mat(ks[16], (1, d), 0.02),
          mat(ks[7], (d, d)), mat(ks[17], (1, d), 0.02))
    ffn = (mat(ks[8], (d, ffn_dim)), mat(ks[18], (1, ffn_dim), 0.02),
           mat(ks[9], (ffn_dim, d)), mat(ks[19], (1, d), 0.02))
    norms = (jnp.ones((1, d)), jnp.zeros((1, d)),
             jnp.ones((1, d)), jnp.zeros((1, d)),
             jnp.ones((1, d)), jnp.zeros((1, d)))
    return sa + ca + ffn + norms


def prepare_kernel_params(layer_params, num_heads, weight_dtype=jnp.bfloat16):
    """Fused/scale-folded bf16 weight matrices (biases/norms stay f32),
    stacked along a leading layer axis for per-layer streaming."""
    per_layer = []
    for p in layer_params:
        (sa_wq, sa_bq, sa_wk, sa_bk, sa_wv, sa_bv, sa_wo, sa_bo,
         ca_wq, ca_bq, ca_wk, ca_bk, ca_wv, ca_bv, ca_wo, ca_bo,
         f_w1, f_b1, f_w2, f_b2,
         n1g, n1b, n2g, n2b, n3g, n3b) = p
        d = sa_wq.shape[0]
        scale = 1.0 / math.sqrt(d // num_heads)

        # Self-attn: fuse Q and K projections (both consume q + qpos) and fold
        # the 1/sqrt(dh) score scale into the Q-side weights and bias.
        sa_wqk = jnp.concatenate([sa_wq * scale, sa_wk], axis=1)   # (d, 2d)
        sa_bqk = jnp.concatenate([sa_bq * scale, sa_bk], axis=1)   # (1, 2d)

        per_layer.append((
            sa_wqk.astype(weight_dtype), sa_bqk,
            sa_wv.astype(weight_dtype), sa_bv,
            sa_wo.astype(weight_dtype), sa_bo,
            (ca_wq * scale).astype(weight_dtype), ca_bq * scale,
            ca_wk.astype(weight_dtype), ca_bk,
            ca_wv.astype(weight_dtype), ca_bv,
            ca_wo.astype(weight_dtype), ca_bo,
            f_w1.astype(weight_dtype), f_b1,
            f_w2.astype(weight_dtype), f_b2,
            n1g, n1b, n2g, n2b, n3g, n3b))

    stacked = tuple(jnp.stack([lp[i] for lp in per_layer], axis=0)
                    for i in range(len(per_layer[0])))
    assert len(stacked) == NUM_KERNEL_PARAMS
    return stacked


# ---------------------------------------------------------------------------
# Independent pure-JAX f32 reference using the canonical weights / standard MHA.
# ---------------------------------------------------------------------------
def _mha_ref(q_in, k_in, v_in, wq, bq, wk, bk, wv, bv, wo, bo, num_heads):
    d = q_in.shape[-1]
    dh = d // num_heads
    scale = 1.0 / math.sqrt(dh)
    qp = q_in @ wq + bq
    kp = k_in @ wk + bk
    vp = v_in @ wv + bv
    heads = []
    for h in range(num_heads):
        sl = slice(h * dh, (h + 1) * dh)
        s = (qp[:, sl] * scale) @ kp[:, sl].T
        s = s - jnp.max(s, axis=-1, keepdims=True)
        p = jnp.exp(s)
        p = p / jnp.sum(p, axis=-1, keepdims=True)
        heads.append(p @ vp[:, sl])
    o = jnp.concatenate(heads, axis=-1)
    return o @ wo + bo


def _layer_ref(q, k, v, qpos, kpos, p, num_heads):
    (sa_wq, sa_bq, sa_wk, sa_bk, sa_wv, sa_bv, sa_wo, sa_bo,
     ca_wq, ca_bq, ca_wk, ca_bk, ca_wv, ca_bv, ca_wo, ca_bo,
     f_w1, f_b1, f_w2, f_b2,
     n1g, n1b, n2g, n2b, n3g, n3b) = p
    sa = _mha_ref(q + qpos, q + qpos, q,
                  sa_wq, sa_bq, sa_wk, sa_bk, sa_wv, sa_bv, sa_wo, sa_bo,
                  num_heads)
    q = _layer_norm(q + sa, n1g, n1b)
    ca = _mha_ref(q + qpos, k + kpos, v,
                  ca_wq, ca_bq, ca_wk, ca_bk, ca_wv, ca_bv, ca_wo, ca_bo,
                  num_heads)
    q = _layer_norm(q + ca, n2g, n2b)
    hdn = jnp.maximum(q @ f_w1 + f_b1, 0.0)
    ff = hdn @ f_w2 + f_b2
    q = _layer_norm(q + ff, n3g, n3b)
    return q


def reference(query, key, value, query_pos, key_pos, layer_params, num_heads):
    q = jnp.transpose(query, (1, 0, 2))
    k = jnp.transpose(key, (1, 0, 2))
    v = jnp.transpose(value, (1, 0, 2))
    qp = jnp.transpose(query_pos, (1, 0, 2))
    kp = jnp.transpose(key_pos, (1, 0, 2))
    for p in layer_params:
        q = jax.vmap(lambda qb, kb, vb, qpb, kpb: _layer_ref(
            qb, kb, vb, qpb, kpb, p, num_heads))(q, k, v, qp, kp)
    return jnp.transpose(q, (1, 0, 2))


if __name__ == "__main__":
    num_layers = 2
    embed_dims = 32
    ffn_dim = 64
    bs = 2
    num_queries = 8
    num_keys = 16

    root = jax.random.PRNGKey(0)
    keys = jax.random.split(root, 5 + num_layers)
    query = jax.random.normal(keys[0], (num_queries, bs, embed_dims), jnp.float32)
    key_t = jax.random.normal(keys[1], (num_keys, bs, embed_dims), jnp.float32)
    value = jax.random.normal(keys[2], (num_keys, bs, embed_dims), jnp.float32)
    query_pos = jax.random.normal(keys[3], (num_queries, bs, embed_dims), jnp.float32)
    key_pos = jax.random.normal(keys[4], (num_keys, bs, embed_dims), jnp.float32)

    layer_params = [init_layer_params(keys[5 + i], embed_dims, ffn_dim)
                    for i in range(num_layers)]
    stacked_params = prepare_kernel_params(layer_params, NUM_HEADS)

    out = transformer_layer_sequence(query, key_t, value, query_pos, key_pos,
                                     stacked_params)
    out = jax.block_until_ready(out)
    assert out.shape == (num_queries, bs, embed_dims)

    ref = jax.block_until_ready(
        reference(query, key_t, value, query_pos, key_pos, layer_params,
                  NUM_HEADS))
    # Kernel matmuls use bf16 operands (f32 accumulation), so the check
    # against the f32 reference is at bf16-level tolerance.
    assert jnp.allclose(out, ref, atol=3e-2, rtol=3e-2), "mismatch vs reference"

    print("KERNEL_OK")
</pallas_src>

<mosaic_0001>
module attributes {stable_mosaic.version = 11 : i64} {
  func.func @_decoder_stack_kernel(%arg0: i32, %arg1: i32, %arg2: memref<1x8x32xf32, #tpu.memory_space<vmem>>, %arg3: memref<1x16x32xf32, #tpu.memory_space<vmem>>, %arg4: memref<1x16x32xf32, #tpu.memory_space<vmem>>, %arg5: memref<1x8x32xf32, #tpu.memory_space<vmem>>, %arg6: memref<1x16x32xf32, #tpu.memory_space<vmem>>, %arg7: memref<1x32x64xbf16, #tpu.memory_space<vmem>>, %arg8: memref<1x1x64xf32, #tpu.memory_space<vmem>>, %arg9: memref<1x32x32xbf16, #tpu.memory_space<vmem>>, %arg10: memref<1x1x32xf32, #tpu.memory_space<vmem>>, %arg11: memref<1x32x32xbf16, #tpu.memory_space<vmem>>, %arg12: memref<1x1x32xf32, #tpu.memory_space<vmem>>, %arg13: memref<1x32x32xbf16, #tpu.memory_space<vmem>>, %arg14: memref<1x1x32xf32, #tpu.memory_space<vmem>>, %arg15: memref<1x32x32xbf16, #tpu.memory_space<vmem>>, %arg16: memref<1x1x32xf32, #tpu.memory_space<vmem>>, %arg17: memref<1x32x32xbf16, #tpu.memory_space<vmem>>, %arg18: memref<1x1x32xf32, #tpu.memory_space<vmem>>, %arg19: memref<1x32x32xbf16, #tpu.memory_space<vmem>>, %arg20: memref<1x1x32xf32, #tpu.memory_space<vmem>>, %arg21: memref<1x32x64xbf16, #tpu.memory_space<vmem>>, %arg22: memref<1x1x64xf32, #tpu.memory_space<vmem>>, %arg23: memref<1x64x32xbf16, #tpu.memory_space<vmem>>, %arg24: memref<1x1x32xf32, #tpu.memory_space<vmem>>, %arg25: memref<1x1x32xf32, #tpu.memory_space<vmem>>, %arg26: memref<1x1x32xf32, #tpu.memory_space<vmem>>, %arg27: memref<1x1x32xf32, #tpu.memory_space<vmem>>, %arg28: memref<1x1x32xf32, #tpu.memory_space<vmem>>, %arg29: memref<1x1x32xf32, #tpu.memory_space<vmem>>, %arg30: memref<1x1x32xf32, #tpu.memory_space<vmem>>, %arg31: memref<1x8x32xf32, #tpu.memory_space<vmem>>, %arg32: memref<8x32xf32, #tpu.memory_space<vmem>>) attributes {dimension_semantics = [#tpu.dimension_semantics<parallel>, #tpu.dimension_semantics<arbitrary>], iteration_bounds = array<i64: 2, 2>, scalar_prefetch = 0 : i64, scratch_operands = 1 : i64, tpu.core_type = #tpu.core_type<tc>, window_params = [{transform_indices = @transform_0, window_bounds = array<i64: 1, 8, 32>}, {transform_indices = @transform_1, window_bounds = array<i64: 1, 16, 32>}, {transform_indices = @transform_2, window_bounds = array<i64: 1, 16, 32>}, {transform_indices = @transform_3, window_bounds = array<i64: 1, 8, 32>}, {transform_indices = @transform_4, window_bounds = array<i64: 1, 16, 32>}, {transform_indices = @transform_5, window_bounds = array<i64: 1, 32, 64>}, {transform_indices = @transform_6, window_bounds = array<i64: 1, 1, 64>}, {transform_indices = @transform_7, window_bounds = array<i64: 1, 32, 32>}, {transform_indices = @transform_8, window_bounds = array<i64: 1, 1, 32>}, {transform_indices = @transform_9, window_bounds = array<i64: 1, 32, 32>}, {transform_indices = @transform_10, window_bounds = array<i64: 1, 1, 32>}, {transform_indices = @transform_11, window_bounds = array<i64: 1, 32, 32>}, {transform_indices = @transform_12, window_bounds = array<i64: 1, 1, 32>}, {transform_indices = @transform_13, window_bounds = array<i64: 1, 32, 32>}, {transform_indices = @transform_14, window_bounds = array<i64: 1, 1, 32>}, {transform_indices = @transform_15, window_bounds = array<i64: 1, 32, 32>}, {transform_indices = @transform_16, window_bounds = array<i64: 1, 1, 32>}, {transform_indices = @transform_17, window_bounds = array<i64: 1, 32, 32>}, {transform_indices = @transform_18, window_bounds = array<i64: 1, 1, 32>}, {transform_indices = @transform_19, window_bounds = array<i64: 1, 32, 64>}, {transform_indices = @transform_20, window_bounds = array<i64: 1, 1, 64>}, {transform_indices = @transform_21, window_bounds = array<i64: 1, 64, 32>}, {transform_indices = @transform_22, window_bounds = array<i64: 1, 1, 32>}, {transform_indices = @transform_23, window_bounds = array<i64: 1, 1, 32>}, {transform_indices = @transform_24, window_bounds = array<i64: 1, 1, 32>}, {transform_indices = @transform_25, window_bounds = array<i64: 1, 1, 32>}, {transform_indices = @transform_26, window_bounds = array<i64: 1, 1, 32>}, {transform_indices = @transform_27, window_bounds = array<i64: 1, 1, 32>}, {transform_indices = @transform_28, window_bounds = array<i64: 1, 1, 32>}, {transform_indices = @transform_29, window_bounds = array<i64: 1, 8, 32>}]} {
    %c0_i32 = arith.constant 0 : i32
    %0 = arith.cmpi eq, %arg1, %c0_i32 : i32
    %1 = arith.extui %0 : i1 to i32
    %c0_i32_0 = arith.constant 0 : i32
    %2 = arith.cmpi ne, %1, %c0_i32_0 : i32
    scf.if %2 {
      %c0_121 = arith.constant 0 : index
      %c0_122 = arith.constant 0 : index
      %c0_123 = arith.constant 0 : index
      %279 = vector.load %arg2[%c0_121, %c0_122, %c0_123] : memref<1x8x32xf32, #tpu.memory_space<vmem>>, vector<1x8x32xf32>
      %280 = vector.shape_cast %279 : vector<1x8x32xf32> to vector<8x32xf32>
      %c0_124 = arith.constant 0 : index
      %c0_125 = arith.constant 0 : index
      %281 = vector.load %arg32[%c0_124, %c0_125] : memref<8x32xf32, #tpu.memory_space<vmem>>, vector<8x32xf32>
      tpu.vector_store %arg32[%c0_124, %c0_125], %280 {strides = array<i32>} : memref<8x32xf32, #tpu.memory_space<vmem>>, vector<8x32xf32>,
    } else {
    }
    %c0 = arith.constant 0 : index
    %c0_1 = arith.constant 0 : index
    %c0_2 = arith.constant 0 : index
    %3 = vector.load %arg7[%c0, %c0_1, %c0_2] : memref<1x32x64xbf16, #tpu.memory_space<vmem>>, vector<1x32x64xbf16>
    %4 = vector.shape_cast %3 : vector<1x32x64xbf16> to vector<32x64xbf16>
    %c0_3 = arith.constant 0 : index
    %c0_4 = arith.constant 0 : index
    %c0_5 = arith.constant 0 : index
    %5 = vector.load %arg8[%c0_3, %c0_4, %c0_5] : memref<1x1x64xf32, #tpu.memory_space<vmem>>, vector<1x1x64xf32>
    %6 = vector.shape_cast %5 : vector<1x1x64xf32> to vector<1x64xf32>
    %c0_6 = arith.constant 0 : index
    %c0_7 = arith.constant 0 : index
    %c0_8 = arith.constant 0 : index
    %7 = vector.load %arg9[%c0_6, %c0_7, %c0_8] : memref<1x32x32xbf16, #tpu.memory_space<vmem>>, vector<1x32x32xbf16>
    %8 = vector.shape_cast %7 : vector<1x32x32xbf16> to vector<32x32xbf16>
    %c0_9 = arith.constant 0 : index
    %c0_10 = arith.constant 0 : index
    %c0_11 = arith.constant 0 : index
    %9 = vector.load %arg10[%c0_9, %c0_10, %c0_11] : memref<1x1x32xf32, #tpu.memory_space<vmem>>, vector<1x1x32xf32>
    %10 = vector.shape_cast %9 : vector<1x1x32xf32> to vector<1x32xf32>
    %c0_12 = arith.constant 0 : index
    %c0_13 = arith.constant 0 : index
    %c0_14 = arith.constant 0 : index
    %11 = vector.load %arg11[%c0_12, %c0_13, %c0_14] : memref<1x32x32xbf16, #tpu.memory_space<vmem>>, vector<1x32x32xbf16>
    %12 = vector.shape_cast %11 : vector<1x32x32xbf16> to vector<32x32xbf16>
    %c0_15 = arith.constant 0 : index
    %c0_16 = arith.constant 0 : index
    %c0_17 = arith.constant 0 : index
    %13 = vector.load %arg12[%c0_15, %c0_16, %c0_17] : memref<1x1x32xf32, #tpu.memory_space<vmem>>, vector<1x1x32xf32>
    %14 = vector.shape_cast %13 : vector<1x1x32xf32> to vector<1x32xf32>
    %c0_18 = arith.constant 0 : index
    %c0_19 = arith.constant 0 : index
    %c0_20 = arith.constant 0 : index
    %15 = vector.load %arg13[%c0_18, %c0_19, %c0_20] : memref<1x32x32xbf16, #tpu.memory_space<vmem>>, vector<1x32x32xbf16>
    %16 = vector.shape_cast %15 : vector<1x32x32xbf16> to vector<32x32xbf16>
    %c0_21 = arith.constant 0 : index
    %c0_22 = arith.constant 0 : index
    %c0_23 = arith.constant 0 : index
    %17 = vector.load %arg14[%c0_21, %c0_22, %c0_23] : memref<1x1x32xf32, #tpu.memory_space<vmem>>, vector<1x1x32xf32>
    %18 = vector.shape_cast %17 : vector<1x1x32xf32> to vector<1x32xf32>
    %c0_24 = arith.constant 0 : index
    %c0_25 = arith.constant 0 : index
    %c0_26 = arith.constant 0 : index
    %19 = vector.load %arg15[%c0_24, %c0_25, %c0_26] : memref<1x32x32xbf16, #tpu.memory_space<vmem>>, vector<1x32x32xbf16>
    %20 = vector.shape_cast %19 : vector<1x32x32xbf16> to vector<32x32xbf16>
    %c0_27 = arith.constant 0 : index
    %c0_28 = arith.constant 0 : index
    %c0_29 = arith.constant 0 : index
    %21 = vector.load %arg16[%c0_27, %c0_28, %c0_29] : memref<1x1x32xf32, #tpu.memory_space<vmem>>, vector<1x1x32xf32>
    %22 = vector.shape_cast %21 : vector<1x1x32xf32> to vector<1x32xf32>
    %c0_30 = arith.constant 0 : index
    %c0_31 = arith.constant 0 : index
    %c0_32 = arith.constant 0 : index
    %23 = vector.load %arg17[%c0_30, %c0_31, %c0_32] : memref<1x32x32xbf16, #tpu.memory_space<vmem>>, vector<1x32x32xbf16>
    %24 = vector.shape_cast %23 : vector<1x32x32xbf16> to vector<32x32xbf16>
    %c0_33 = arith.constant 0 : index
    %c0_34 = arith.constant 0 : index
    %c0_35 = arith.constant 0 : index
    %25 = vector.load %arg18[%c0_33, %c0_34, %c0_35] : memref<1x1x32xf32, #tpu.memory_space<vmem>>, vector<1x1x32xf32>
    %26 = vector.shape_cast %25 : vector<1x1x32xf32> to vector<1x32xf32>
    %c0_36 = arith.constant 0 : index
    %c0_37 = arith.constant 0 : index
    %c0_38 = arith.constant 0 : index
    %27 = vector.load %arg19[%c0_36, %c0_37, %c0_38] : memref<1x32x32xbf16, #tpu.memory_space<vmem>>, vector<1x32x32xbf16>
    %28 = vector.shape_cast %27 : vector<1x32x32xbf16> to vector<32x32xbf16>
    %c0_39 = arith.constant 0 : index
    %c0_40 = arith.constant 0 : index
    %c0_41 = arith.constant 0 : index
    %29 = vector.load %arg20[%c0_39, %c0_40, %c0_41] : memref<1x1x32xf32, #tpu.memory_space<vmem>>, vector<1x1x32xf32>
    %30 = vector.shape_cast %29 : vector<1x1x32xf32> to vector<1x32xf32>
    %c0_42 = arith.constant 0 : index
    %c0_43 = arith.constant 0 : index
    %c0_44 = arith.constant 0 : index
    %31 = vector.load %arg21[%c0_42, %c0_43, %c0_44] : memref<1x32x64xbf16, #tpu.memory_space<vmem>>, vector<1x32x64xbf16>
    %32 = vector.shape_cast %31 : vector<1x32x64xbf16> to vector<32x64xbf16>
    %c0_45 = arith.constant 0 : index
    %c0_46 = arith.constant 0 : index
    %c0_47 = arith.constant 0 : index
    %33 = vector.load %arg22[%c0_45, %c0_46, %c0_47] : memref<1x1x64xf32, #tpu.memory_space<vmem>>, vector<1x1x64xf32>
    %34 = vector.shape_cast %33 : vector<1x1x64xf32> to vector<1x64xf32>
    %c0_48 = arith.constant 0 : index
    %c0_49 = arith.constant 0 : index
    %c0_50 = arith.constant 0 : index
    %35 = vector.load %arg23[%c0_48, %c0_49, %c0_50] : memref<1x64x32xbf16, #tpu.memory_space<vmem>>, vector<1x64x32xbf16>
    %36 = vector.shape_cast %35 : vector<1x64x32xbf16> to vector<64x32xbf16>
    %c0_51 = arith.constant 0 : index
    %c0_52 = arith.constant 0 : index
    %c0_53 = arith.constant 0 : index
    %37 = vector.load %arg24[%c0_51, %c0_52, %c0_53] : memref<1x1x32xf32, #tpu.memory_space<vmem>>, vector<1x1x32xf32>
    %38 = vector.shape_cast %37 : vector<1x1x32xf32> to vector<1x32xf32>
    %c0_54 = arith.constant 0 : index
    %c0_55 = arith.constant 0 : index
    %c0_56 = arith.constant 0 : index
    %39 = vector.load %arg25[%c0_54, %c0_55, %c0_56] : memref<1x1x32xf32, #tpu.memory_space<vmem>>, vector<1x1x32xf32>
    %40 = vector.shape_cast %39 : vector<1x1x32xf32> to vector<1x32xf32>
    %c0_57 = arith.constant 0 : index
    %c0_58 = arith.constant 0 : index
    %c0_59 = arith.constant 0 : index
    %41 = vector.load %arg26[%c0_57, %c0_58, %c0_59] : memref<1x1x32xf32, #tpu.memory_space<vmem>>, vector<1x1x32xf32>
    %42 = vector.shape_cast %41 : vector<1x1x32xf32> to vector<1x32xf32>
    %c0_60 = arith.constant 0 : index
    %c0_61 = arith.constant 0 : index
    %c0_62 = arith.constant 0 : index
    %43 = vector.load %arg27[%c0_60, %c0_61, %c0_62] : memref<1x1x32xf32, #tpu.memory_space<vmem>>, vector<1x1x32xf32>
    %44 = vector.shape_cast %43 : vector<1x1x32xf32> to vector<1x32xf32>
    %c0_63 = arith.constant 0 : index
    %c0_64 = arith.constant 0 : index
    %c0_65 = arith.constant 0 : index
    %45 = vector.load %arg28[%c0_63, %c0_64, %c0_65] : memref<1x1x32xf32, #tpu.memory_space<vmem>>, vector<1x1x32xf32>
    %46 = vector.shape_cast %45 : vector<1x1x32xf32> to vector<1x32xf32>
    %c0_66 = arith.constant 0 : index
    %c0_67 = arith.constant 0 : index
    %c0_68 = arith.constant 0 : index
    %47 = vector.load %arg29[%c0_66, %c0_67, %c0_68] : memref<1x1x32xf32, #tpu.memory_space<vmem>>, vector<1x1x32xf32>
    %48 = vector.shape_cast %47 : vector<1x1x32xf32> to vector<1x32xf32>
    %c0_69 = arith.constant 0 : index
    %c0_70 = arith.constant 0 : index
    %c0_71 = arith.constant 0 : index
    %49 = vector.load %arg30[%c0_69, %c0_70, %c0_71] : memref<1x1x32xf32, #tpu.memory_space<vmem>>, vector<1x1x32xf32>
    %50 = vector.shape_cast %49 : vector<1x1x32xf32> to vector<1x32xf32>
    %c0_72 = arith.constant 0 : index
    %c0_73 = arith.constant 0 : index
    %51 = vector.load %arg32[%c0_72, %c0_73] : memref<8x32xf32, #tpu.memory_space<vmem>>, vector<8x32xf32>
    %c0_74 = arith.constant 0 : index
    %c0_75 = arith.constant 0 : index
    %c0_76 = arith.constant 0 : index
    %52 = vector.load %arg3[%c0_74, %c0_75, %c0_76] : memref<1x16x32xf32, #tpu.memory_space<vmem>>, vector<1x16x32xf32>
    %53 = vector.shape_cast %52 : vector<1x16x32xf32> to vector<16x32xf32>
    %c0_77 = arith.constant 0 : index
    %c0_78 = arith.constant 0 : index
    %c0_79 = arith.constant 0 : index
    %54 = vector.load %arg4[%c0_77, %c0_78, %c0_79] : memref<1x16x32xf32, #tpu.memory_space<vmem>>, vector<1x16x32xf32>
    %55 = vector.shape_cast %54 : vector<1x16x32xf32> to vector<16x32xf32>
    %c0_80 = arith.constant 0 : index
    %c0_81 = arith.constant 0 : index
    %c0_82 = arith.constant 0 : index
    %56 = vector.load %arg5[%c0_80, %c0_81, %c0_82] : memref<1x8x32xf32, #tpu.memory_space<vmem>>, vector<1x8x32xf32>
    %57 = vector.shape_cast %56 : vector<1x8x32xf32> to vector<8x32xf32>
    %c0_83 = arith.constant 0 : index
    %c0_84 = arith.constant 0 : index
    %c0_85 = arith.constant 0 : index
    %58 = vector.load %arg6[%c0_83, %c0_84, %c0_85] : memref<1x16x32xf32, #tpu.memory_space<vmem>>, vector<1x16x32xf32>
    %59 = vector.shape_cast %58 : vector<1x16x32xf32> to vector<16x32xf32>
    %60 = arith.addf %51, %57 : vector<8x32xf32>
    %61 = arith.truncf %60 : vector<8x32xf32> to vector<8x32xbf16>
    %cst = arith.constant dense<0.000000e+00> : vector<8x64xf32>
    %62 = tpu.matmul %61, %4, %cst {dimension_numbers = #tpu.dot_dimension_numbers<[1], [0], [0], [1], [0, 0, 1, 1], [], []>} : vector<8x32xbf16>, vector<32x64xbf16>, vector<8x64xf32> -> vector<8x64xf32>
    %63 = vector.broadcast %6 : vector<1x64xf32> to vector<8x64xf32>
    %64 = arith.addf %62, %63 : vector<8x64xf32>
    %65 = arith.truncf %51 : vector<8x32xf32> to vector<8x32xbf16>
    %cst_86 = arith.constant dense<0.000000e+00> : vector<8x32xf32>
    %66 = tpu.matmul %65, %8, %cst_86 {dimension_numbers = #tpu.dot_dimension_numbers<[1], [0], [0], [1], [0, 0, 1, 1], [], []>} : vector<8x32xbf16>, vector<32x32xbf16>, vector<8x32xf32> -> vector<8x32xf32>
    %67 = vector.broadcast %10 : vector<1x32xf32> to vector<8x32xf32>
    %68 = arith.addf %66, %67 : vector<8x32xf32>
    %69 = vector.extract_strided_slice %64 {offsets = [0, 0], sizes = [8, 8], strides = [1, 1]} : vector<8x64xf32> to vector<8x8xf32>
    %70 = vector.shape_cast %69 : vector<8x8xf32> to vector<1x8x8xf32>
    %71 = vector.extract_strided_slice %64 {offsets = [0, 8], sizes = [8, 8], strides = [1, 1]} : vector<8x64xf32> to vector<8x8xf32>
    %72 = vector.shape_cast %71 : vector<8x8xf32> to vector<1x8x8xf32>
    %73 = vector.extract_strided_slice %64 {offsets = [0, 16], sizes = [8, 8], strides = [1, 1]} : vector<8x64xf32> to vector<8x8xf32>
    %74 = vector.shape_cast %73 : vector<8x8xf32> to vector<1x8x8xf32>
    %75 = vector.extract_strided_slice %64 {offsets = [0, 24], sizes = [8, 8], strides = [1, 1]} : vector<8x64xf32> to vector<8x8xf32>
    %76 = vector.shape_cast %75 : vector<8x8xf32> to vector<1x8x8xf32>
    %77 = vector.extract_strided_slice %64 {offsets = [0, 32], sizes = [8, 8], strides = [1, 1]} : vector<8x64xf32> to vector<8x8xf32>
    %78 = vector.shape_cast %77 : vector<8x8xf32> to vector<1x8x8xf32>
    %79 = vector.extract_strided_slice %64 {offsets = [0, 40], sizes = [8, 8], strides = [1, 1]} : vector<8x64xf32> to vector<8x8xf32>
    %80 = vector.shape_cast %79 : vector<8x8xf32> to vector<1x8x8xf32>
    %81 = vector.extract_strided_slice %64 {offsets = [0, 48], sizes = [8, 8], strides = [1, 1]} : vector<8x64xf32> to vector<8x8xf32>
    %82 = vector.shape_cast %81 : vector<8x8xf32> to vector<1x8x8xf32>
    %83 = vector.extract_strided_slice %64 {offsets = [0, 56], sizes = [8, 8], strides = [1, 1]} : vector<8x64xf32> to vector<8x8xf32>
    %84 = vector.shape_cast %83 : vector<8x8xf32> to vector<1x8x8xf32>
    %85 = tpu.concatenate %70, %72, %74, %76, %78, %80, %82, %84 in 0 : vector<1x8x8xf32>, vector<1x8x8xf32>, vector<1x8x8xf32>, vector<1x8x8xf32>, vector<1x8x8xf32>, vector<1x8x8xf32>, vector<1x8x8xf32>, vector<1x8x8xf32> -> vector<8x8x8xf32>
    %86 = vector.extract_strided_slice %85 {offsets = [0, 0, 0], sizes = [4, 8, 8], strides = [1, 1, 1]} : vector<8x8x8xf32> to vector<4x8x8xf32>
    %87 = vector.extract_strided_slice %85 {offsets = [4, 0, 0], sizes = [4, 8, 8], strides = [1, 1, 1]} : vector<8x8x8xf32> to vector<4x8x8xf32>
    %88 = vector.extract_strided_slice %68 {offsets = [0, 0], sizes = [8, 8], strides = [1, 1]} : vector<8x32xf32> to vector<8x8xf32>
    %89 = vector.shape_cast %88 : vector<8x8xf32> to vector<1x8x8xf32>
    %90 = vector.extract_strided_slice %68 {offsets = [0, 8], sizes = [8, 8], strides = [1, 1]} : vector<8x32xf32> to vector<8x8xf32>
    %91 = vector.shape_cast %90 : vector<8x8xf32> to vector<1x8x8xf32>
    %92 = vector.extract_strided_slice %68 {offsets = [0, 16], sizes = [8, 8], strides = [1, 1]} : vector<8x32xf32> to vector<8x8xf32>
    %93 = vector.shape_cast %92 : vector<8x8xf32> to vector<1x8x8xf32>
    %94 = vector.extract_strided_slice %68 {offsets = [0, 24], sizes = [8, 8], strides = [1, 1]} : vector<8x32xf32> to vector<8x8xf32>
    %95 = vector.shape_cast %94 : vector<8x8xf32> to vector<1x8x8xf32>
    %96 = tpu.concatenate %89, %91, %93, %95 in 0 : vector<1x8x8xf32>, vector<1x8x8xf32>, vector<1x8x8xf32>, vector<1x8x8xf32> -> vector<4x8x8xf32>
    %97 = arith.truncf %86 : vector<4x8x8xf32> to vector<4x8x8xbf16>
    %98 = arith.truncf %87 : vector<4x8x8xf32> to vector<4x8x8xbf16>
    "tpu.trace_start"() <{level = 10 : i32, message = "hqd,hkd->hqk"}> : () -> ()
    %cst_87 = arith.constant dense<0.000000e+00> : vector<4x8x8xf32>
    %99 = tpu.matmul %97, %98, %cst_87 {dimension_numbers = #tpu.dot_dimension_numbers<[2], [2], [1], [1], [0, 0, 0, 1, 1, 1], [0], [0]>} : vector<4x8x8xbf16>, vector<4x8x8xbf16>, vector<4x8x8xf32> -> vector<4x8x8xf32>
    "tpu.trace_stop"() : () -> ()
    %cst_88 = arith.constant dense<0xFF800000> : vector<4x8xf32>
    %100 = vector.multi_reduction <maximumf>, %99, %cst_88 [2] : vector<4x8x8xf32> to vector<4x8xf32>
    %101 = vector.shape_cast %100 : vector<4x8xf32> to vector<4x8x1xf32>
    %102 = vector.broadcast %101 : vector<4x8x1xf32> to vector<4x8x8xf32>
    %103 = arith.subf %99, %102 : vector<4x8x8xf32>
    %104 = math.exp %103 : vector<4x8x8xf32>
    %cst_89 = arith.constant dense<0.000000e+00> : vector<4x8xf32>
    %105 = vector.multi_reduction <add>, %104, %cst_89 [2] : vector<4x8x8xf32> to vector<4x8xf32>
    %106 = vector.shape_cast %105 : vector<4x8xf32> to vector<4x8x1xf32>
    %107 = tpu.reciprocal %106 {approx = true} : vector<4x8x1xf32> -> vector<4x8x1xf32>
    %108 = vector.broadcast %107 : vector<4x8x1xf32> to vector<4x8x8xf32>
    %109 = arith.mulf %104, %108 : vector<4x8x8xf32>
    %110 = arith.truncf %109 : vector<4x8x8xf32> to vector<4x8x8xbf16>
    %111 = arith.truncf %96 : vector<4x8x8xf32> to vector<4x8x8xbf16>
    "tpu.trace_start"() <{level = 10 : i32, message = "hqk,hkd->hqd"}> : () -> ()
    %cst_90 = arith.constant dense<0.000000e+00> : vector<4x8x8xf32>
    %112 = tpu.matmul %110, %111, %cst_90 {dimension_numbers = #tpu.dot_dimension_numbers<[2], [1], [1], [2], [0, 0, 0, 1, 1, 2], [0], [0]>} : vector<4x8x8xbf16>, vector<4x8x8xbf16>, vector<4x8x8xf32> -> vector<4x8x8xf32>
    "tpu.trace_stop"() : () -> ()
    %113 = vector.extract_strided_slice %112 {offsets = [0, 0, 0], sizes = [1, 8, 8], strides = [1, 1, 1]} : vector<4x8x8xf32> to vector<1x8x8xf32>
    %114 = vector.shape_cast %113 : vector<1x8x8xf32> to vector<8x8xf32>
    %115 = vector.extract_strided_slice %112 {offsets = [1, 0, 0], sizes = [1, 8, 8], strides = [1, 1, 1]} : vector<4x8x8xf32> to vector<1x8x8xf32>
    %116 = vector.shape_cast %115 : vector<1x8x8xf32> to vector<8x8xf32>
    %117 = vector.extract_strided_slice %112 {offsets = [2, 0, 0], sizes = [1, 8, 8], strides = [1, 1, 1]} : vector<4x8x8xf32> to vector<1x8x8xf32>
    %118 = vector.shape_cast %117 : vector<1x8x8xf32> to vector<8x8xf32>
    %119 = vector.extract_strided_slice %112 {offsets = [3, 0, 0], sizes = [1, 8, 8], strides = [1, 1, 1]} : vector<4x8x8xf32> to vector<1x8x8xf32>
    %120 = vector.shape_cast %119 : vector<1x8x8xf32> to vector<8x8xf32>
    %121 = tpu.concatenate %114, %116, %118, %120 in 1 : vector<8x8xf32>, vector<8x8xf32>, vector<8x8xf32>, vector<8x8xf32> -> vector<8x32xf32>
    %122 = arith.truncf %121 : vector<8x32xf32> to vector<8x32xbf16>
    %cst_91 = arith.constant dense<0.000000e+00> : vector<8x32xf32>
    %123 = tpu.matmul %122, %12, %cst_91 {dimension_numbers = #tpu.dot_dimension_numbers<[1], [0], [0], [1], [0, 0, 1, 1], [], []>} : vector<8x32xbf16>, vector<32x32xbf16>, vector<8x32xf32> -> vector<8x32xf32>
    %124 = vector.broadcast %14 : vector<1x32xf32> to vector<8x32xf32>
    %125 = arith.addf %123, %124 : vector<8x32xf32>
    %126 = arith.addf %51, %125 : vector<8x32xf32>
    %cst_92 = arith.constant dense<0.000000e+00> : vector<8xf32>
    %127 = vector.multi_reduction <add>, %126, %cst_92 [1] : vector<8x32xf32> to vector<8xf32>
    %128 = vector.shape_cast %127 : vector<8xf32> to vector<8x1xf32>
    %cst_93 = arith.constant 3.200000e+01 : f32
    %129 = vector.broadcast %cst_93 : f32 to vector<8x1xf32>
    %130 = arith.divf %128, %129 : vector<8x1xf32>
    %131 = vector.broadcast %130 : vector<8x1xf32> to vector<8x32xf32>
    %132 = arith.subf %126, %131 : vector<8x32xf32>
    %133 = arith.mulf %132, %132 : vector<8x32xf32>
    %cst_94 = arith.constant dense<0.000000e+00> : vector<8xf32>
    %134 = vector.multi_reduction <add>, %133, %cst_94 [1] : vector<8x32xf32> to vector<8xf32>
    %135 = vector.shape_cast %134 : vector<8xf32> to vector<8x1xf32>
    %cst_95 = arith.constant 3.200000e+01 : f32
    %136 = vector.broadcast %cst_95 : f32 to vector<8x1xf32>
    %137 = arith.divf %135, %136 : vector<8x1xf32>
    %138 = vector.broadcast %130 : vector<8x1xf32> to vector<8x32xf32>
    %139 = arith.subf %126, %138 : vector<8x32xf32>
    %cst_96 = arith.constant 9.99999974E-6 : f32
    %140 = vector.broadcast %cst_96 : f32 to vector<8x1xf32>
    %141 = arith.addf %137, %140 : vector<8x1xf32>
    %142 = math.rsqrt %141 : vector<8x1xf32>
    %143 = vector.broadcast %142 : vector<8x1xf32> to vector<8x32xf32>
    %144 = arith.mulf %139, %143 : vector<8x32xf32>
    %145 = vector.broadcast %40 : vector<1x32xf32> to vector<8x32xf32>
    %146 = arith.mulf %144, %145 : vector<8x32xf32>
    %147 = vector.broadcast %42 : vector<1x32xf32> to vector<8x32xf32>
    %148 = arith.addf %146, %147 : vector<8x32xf32>
    %149 = arith.addf %148, %57 : vector<8x32xf32>
    %150 = arith.truncf %149 : vector<8x32xf32> to vector<8x32xbf16>
    %cst_97 = arith.constant dense<0.000000e+00> : vector<8x32xf32>
    %151 = tpu.matmul %150, %16, %cst_97 {dimension_numbers = #tpu.dot_dimension_numbers<[1], [0], [0], [1], [0, 0, 1, 1], [], []>} : vector<8x32xbf16>, vector<32x32xbf16>, vector<8x32xf32> -> vector<8x32xf32>
    %152 = vector.broadcast %18 : vector<1x32xf32> to vector<8x32xf32>
    %153 = arith.addf %151, %152 : vector<8x32xf32>
    %154 = vector.extract_strided_slice %153 {offsets = [0, 0], sizes = [8, 8], strides = [1, 1]} : vector<8x32xf32> to vector<8x8xf32>
    %155 = vector.shape_cast %154 : vector<8x8xf32> to vector<1x8x8xf32>
    %156 = vector.extract_strided_slice %153 {offsets = [0, 8], sizes = [8, 8], strides = [1, 1]} : vector<8x32xf32> to vector<8x8xf32>
    %157 = vector.shape_cast %156 : vector<8x8xf32> to vector<1x8x8xf32>
    %158 = vector.extract_strided_slice %153 {offsets = [0, 16], sizes = [8, 8], strides = [1, 1]} : vector<8x32xf32> to vector<8x8xf32>
    %159 = vector.shape_cast %158 : vector<8x8xf32> to vector<1x8x8xf32>
    %160 = vector.extract_strided_slice %153 {offsets = [0, 24], sizes = [8, 8], strides = [1, 1]} : vector<8x32xf32> to vector<8x8xf32>
    %161 = vector.shape_cast %160 : vector<8x8xf32> to vector<1x8x8xf32>
    %162 = tpu.concatenate %155, %157, %159, %161 in 0 : vector<1x8x8xf32>, vector<1x8x8xf32>, vector<1x8x8xf32>, vector<1x8x8xf32> -> vector<4x8x8xf32>
    %163 = arith.addf %53, %59 : vector<16x32xf32>
    %164 = arith.truncf %163 : vector<16x32xf32> to vector<16x32xbf16>
    %cst_98 = arith.constant dense<0.000000e+00> : vector<16x32xf32>
    %165 = tpu.matmul %164, %20, %cst_98 {dimension_numbers = #tpu.dot_dimension_numbers<[1], [0], [0], [1], [0, 0, 1, 1], [], []>} : vector<16x32xbf16>, vector<32x32xbf16>, vector<16x32xf32> -> vector<16x32xf32>
    %166 = vector.broadcast %22 : vector<1x32xf32> to vector<16x32xf32>
    %167 = arith.addf %165, %166 : vector<16x32xf32>
    %168 = vector.extract_strided_slice %167 {offsets = [0, 0], sizes = [16, 8], strides = [1, 1]} : vector<16x32xf32> to vector<16x8xf32>
    %169 = vector.shape_cast %168 : vector<16x8xf32> to vector<1x16x8xf32>
    %170 = vector.extract_strided_slice %167 {offsets = [0, 8], sizes = [16, 8], strides = [1, 1]} : vector<16x32xf32> to vector<16x8xf32>
    %171 = vector.shape_cast %170 : vector<16x8xf32> to vector<1x16x8xf32>
    %172 = vector.extract_strided_slice %167 {offsets = [0, 16], sizes = [16, 8], strides = [1, 1]} : vector<16x32xf32> to vector<16x8xf32>
    %173 = vector.shape_cast %172 : vector<16x8xf32> to vector<1x16x8xf32>
    %174 = vector.extract_strided_slice %167 {offsets = [0, 24], sizes = [16, 8], strides = [1, 1]} : vector<16x32xf32> to vector<16x8xf32>
    %175 = vector.shape_cast %174 : vector<16x8xf32> to vector<1x16x8xf32>
    %176 = tpu.concatenate %169, %171, %173, %175 in 0 : vector<1x16x8xf32>, vector<1x16x8xf32>, vector<1x16x8xf32>, vector<1x16x8xf32> -> vector<4x16x8xf32>
    %177 = arith.truncf %55 : vector<16x32xf32> to vector<16x32xbf16>
    %cst_99 = arith.constant dense<0.000000e+00> : vector<16x32xf32>
    %178 = tpu.matmul %177, %24, %cst_99 {dimension_numbers = #tpu.dot_dimension_numbers<[1], [0], [0], [1], [0, 0, 1, 1], [], []>} : vector<16x32xbf16>, vector<32x32xbf16>, vector<16x32xf32> -> vector<16x32xf32>
    %179 = vector.broadcast %26 : vector<1x32xf32> to vector<16x32xf32>
    %180 = arith.addf %178, %179 : vector<16x32xf32>
    %181 = vector.extract_strided_slice %180 {offsets = [0, 0], sizes = [16, 8], strides = [1, 1]} : vector<16x32xf32> to vector<16x8xf32>
    %182 = vector.shape_cast %181 : vector<16x8xf32> to vector<1x16x8xf32>
    %183 = vector.extract_strided_slice %180 {offsets = [0, 8], sizes = [16, 8], strides = [1, 1]} : vector<16x32xf32> to vector<16x8xf32>
    %184 = vector.shape_cast %183 : vector<16x8xf32> to vector<1x16x8xf32>
    %185 = vector.extract_strided_slice %180 {offsets = [0, 16], sizes = [16, 8], strides = [1, 1]} : vector<16x32xf32> to vector<16x8xf32>
    %186 = vector.shape_cast %185 : vector<16x8xf32> to vector<1x16x8xf32>
    %187 = vector.extract_strided_slice %180 {offsets = [0, 24], sizes = [16, 8], strides = [1, 1]} : vector<16x32xf32> to vector<16x8xf32>
    %188 = vector.shape_cast %187 : vector<16x8xf32> to vector<1x16x8xf32>
    %189 = tpu.concatenate %182, %184, %186, %188 in 0 : vector<1x16x8xf32>, vector<1x16x8xf32>, vector<1x16x8xf32>, vector<1x16x8xf32> -> vector<4x16x8xf32>
    %190 = arith.truncf %162 : vector<4x8x8xf32> to vector<4x8x8xbf16>
    %191 = arith.truncf %176 : vector<4x16x8xf32> to vector<4x16x8xbf16>
    "tpu.trace_start"() <{level = 10 : i32, message = "hqd,hkd->hqk"}> : () -> ()
    %cst_100 = arith.constant dense<0.000000e+00> : vector<4x8x16xf32>
    %192 = tpu.matmul %190, %191, %cst_100 {dimension_numbers = #tpu.dot_dimension_numbers<[2], [2], [1], [1], [0, 0, 0, 1, 1, 1], [0], [0]>} : vector<4x8x8xbf16>, vector<4x16x8xbf16>, vector<4x8x16xf32> -> vector<4x8x16xf32>
    "tpu.trace_stop"() : () -> ()
    %cst_101 = arith.constant dense<0xFF800000> : vector<4x8xf32>
    %193 = vector.multi_reduction <maximumf>, %192, %cst_101 [2] : vector<4x8x16xf32> to vector<4x8xf32>
    %194 = vector.shape_cast %193 : vector<4x8xf32> to vector<4x8x1xf32>
    %195 = vector.broadcast %194 : vector<4x8x1xf32> to vector<4x8x16xf32>
    %196 = arith.subf %192, %195 : vector<4x8x16xf32>
    %197 = math.exp %196 : vector<4x8x16xf32>
    %cst_102 = arith.constant dense<0.000000e+00> : vector<4x8xf32>
    %198 = vector.multi_reduction <add>, %197, %cst_102 [2] : vector<4x8x16xf32> to vector<4x8xf32>
    %199 = vector.shape_cast %198 : vector<4x8xf32> to vector<4x8x1xf32>
    %200 = tpu.reciprocal %199 {approx = true} : vector<4x8x1xf32> -> vector<4x8x1xf32>
    %201 = vector.broadcast %200 : vector<4x8x1xf32> to vector<4x8x16xf32>
    %202 = arith.mulf %197, %201 : vector<4x8x16xf32>
    %203 = arith.truncf %202 : vector<4x8x16xf32> to vector<4x8x16xbf16>
    %204 = arith.truncf %189 : vector<4x16x8xf32> to vector<4x16x8xbf16>
    "tpu.trace_start"() <{level = 10 : i32, message = "hqk,hkd->hqd"}> : () -> ()
    %cst_103 = arith.constant dense<0.000000e+00> : vector<4x8x8xf32>
    %205 = tpu.matmul %203, %204, %cst_103 {dimension_numbers = #tpu.dot_dimension_numbers<[2], [1], [1], [2], [0, 0, 0, 1, 1, 2], [0], [0]>} : vector<4x8x16xbf16>, vector<4x16x8xbf16>, vector<4x8x8xf32> -> vector<4x8x8xf32>
    "tpu.trace_stop"() : () -> ()
    %206 = vector.extract_strided_slice %205 {offsets = [0, 0, 0], sizes = [1, 8, 8], strides = [1, 1, 1]} : vector<4x8x8xf32> to vector<1x8x8xf32>
    %207 = vector.shape_cast %206 : vector<1x8x8xf32> to vector<8x8xf32>
    %208 = vector.extract_strided_slice %205 {offsets = [1, 0, 0], sizes = [1, 8, 8], strides = [1, 1, 1]} : vector<4x8x8xf32> to vector<1x8x8xf32>
    %209 = vector.shape_cast %208 : vector<1x8x8xf32> to vector<8x8xf32>
    %210 = vector.extract_strided_slice %205 {offsets = [2, 0, 0], sizes = [1, 8, 8], strides = [1, 1, 1]} : vector<4x8x8xf32> to vector<1x8x8xf32>
    %211 = vector.shape_cast %210 : vector<1x8x8xf32> to vector<8x8xf32>
    %212 = vector.extract_strided_slice %205 {offsets = [3, 0, 0], sizes = [1, 8, 8], strides = [1, 1, 1]} : vector<4x8x8xf32> to vector<1x8x8xf32>
    %213 = vector.shape_cast %212 : vector<1x8x8xf32> to vector<8x8xf32>
    %214 = tpu.concatenate %207, %209, %211, %213 in 1 : vector<8x8xf32>, vector<8x8xf32>, vector<8x8xf32>, vector<8x8xf32> -> vector<8x32xf32>
    %215 = arith.truncf %214 : vector<8x32xf32> to vector<8x32xbf16>
    %cst_104 = arith.constant dense<0.000000e+00> : vector<8x32xf32>
    %216 = tpu.matmul %215, %28, %cst_104 {dimension_numbers = #tpu.dot_dimension_numbers<[1], [0], [0], [1], [0, 0, 1, 1], [], []>} : vector<8x32xbf16>, vector<32x32xbf16>, vector<8x32xf32> -> vector<8x32xf32>
    %217 = vector.broadcast %30 : vector<1x32xf32> to vector<8x32xf32>
    %218 = arith.addf %216, %217 : vector<8x32xf32>
    %219 = arith.addf %148, %218 : vector<8x32xf32>
    %cst_105 = arith.constant dense<0.000000e+00> : vector<8xf32>
    %220 = vector.multi_reduction <add>, %219, %cst_105 [1] : vector<8x32xf32> to vector<8xf32>
    %221 = vector.shape_cast %220 : vector<8xf32> to vector<8x1xf32>
    %cst_106 = arith.constant 3.200000e+01 : f32
    %222 = vector.broadcast %cst_106 : f32 to vector<8x1xf32>
    %223 = arith.divf %221, %222 : vector<8x1xf32>
    %224 = vector.broadcast %223 : vector<8x1xf32> to vector<8x32xf32>
    %225 = arith.subf %219, %224 : vector<8x32xf32>
    %226 = arith.mulf %225, %225 : vector<8x32xf32>
    %cst_107 = arith.constant dense<0.000000e+00> : vector<8xf32>
    %227 = vector.multi_reduction <add>, %226, %cst_107 [1] : vector<8x32xf32> to vector<8xf32>
    %228 = vector.shape_cast %227 : vector<8xf32> to vector<8x1xf32>
    %cst_108 = arith.constant 3.200000e+01 : f32
    %229 = vector.broadcast %cst_108 : f32 to vector<8x1xf32>
    %230 = arith.divf %228, %229 : vector<8x1xf32>
    %231 = vector.broadcast %223 : vector<8x1xf32> to vector<8x32xf32>
    %232 = arith.subf %219, %231 : vector<8x32xf32>
    %cst_109 = arith.constant 9.99999974E-6 : f32
    %233 = vector.broadcast %cst_109 : f32 to vector<8x1xf32>
    %234 = arith.addf %230, %233 : vector<8x1xf32>
    %235 = math.rsqrt %234 : vector<8x1xf32>
    %236 = vector.broadcast %235 : vector<8x1xf32> to vector<8x32xf32>
    %237 = arith.mulf %232, %236 : vector<8x32xf32>
    %238 = vector.broadcast %44 : vector<1x32xf32> to vector<8x32xf32>
    %239 = arith.mulf %237, %238 : vector<8x32xf32>
    %240 = vector.broadcast %46 : vector<1x32xf32> to vector<8x32xf32>
    %241 = arith.addf %239, %240 : vector<8x32xf32>
    %242 = arith.truncf %241 : vector<8x32xf32> to vector<8x32xbf16>
    %cst_110 = arith.constant dense<0.000000e+00> : vector<8x64xf32>
    %243 = tpu.matmul %242, %32, %cst_110 {dimension_numbers = #tpu.dot_dimension_numbers<[1], [0], [0], [1], [0, 0, 1, 1], [], []>} : vector<8x32xbf16>, vector<32x64xbf16>, vector<8x64xf32> -> vector<8x64xf32>
    %244 = vector.broadcast %34 : vector<1x64xf32> to vector<8x64xf32>
    %245 = arith.addf %243, %244 : vector<8x64xf32>
    %cst_111 = arith.constant 0.000000e+00 : f32
    %246 = vector.broadcast %cst_111 : f32 to vector<8x64xf32>
    %247 = arith.maximumf %245, %246 : vector<8x64xf32>
    %248 = arith.truncf %247 : vector<8x64xf32> to vector<8x64xbf16>
    %cst_112 = arith.constant dense<0.000000e+00> : vector<8x32xf32>
    %249 = tpu.matmul %248, %36, %cst_112 {dimension_numbers = #tpu.dot_dimension_numbers<[1], [0], [0], [1], [0, 0, 1, 1], [], []>} : vector<8x64xbf16>, vector<64x32xbf16>, vector<8x32xf32> -> vector<8x32xf32>
    %250 = vector.broadcast %38 : vector<1x32xf32> to vector<8x32xf32>
    %251 = arith.addf %249, %250 : vector<8x32xf32>
    %252 = arith.addf %241, %251 : vector<8x32xf32>
    %cst_113 = arith.constant dense<0.000000e+00> : vector<8xf32>
    %253 = vector.multi_reduction <add>, %252, %cst_113 [1] : vector<8x32xf32> to vector<8xf32>
    %254 = vector.shape_cast %253 : vector<8xf32> to vector<8x1xf32>
    %cst_114 = arith.constant 3.200000e+01 : f32
    %255 = vector.broadcast %cst_114 : f32 to vector<8x1xf32>
    %256 = arith.divf %254, %255 : vector<8x1xf32>
    %257 = vector.broadcast %256 : vector<8x1xf32> to vector<8x32xf32>
    %258 = arith.subf %252, %257 : vector<8x32xf32>
    %259 = arith.mulf %258, %258 : vector<8x32xf32>
    %cst_115 = arith.constant dense<0.000000e+00> : vector<8xf32>
    %260 = vector.multi_reduction <add>, %259, %cst_115 [1] : vector<8x32xf32> to vector<8xf32>
    %261 = vector.shape_cast %260 : vector<8xf32> to vector<8x1xf32>
    %cst_116 = arith.constant 3.200000e+01 : f32
    %262 = vector.broadcast %cst_116 : f32 to vector<8x1xf32>
    %263 = arith.divf %261, %262 : vector<8x1xf32>
    %264 = vector.broadcast %256 : vector<8x1xf32> to vector<8x32xf32>
    %265 = arith.subf %252, %264 : vector<8x32xf32>
    %cst_117 = arith.constant 9.99999974E-6 : f32
    %266 = vector.broadcast %cst_117 : f32 to vector<8x1xf32>
    %267 = arith.addf %263, %266 : vector<8x1xf32>
    %268 = math.rsqrt %267 : vector<8x1xf32>
    %269 = vector.broadcast %268 : vector<8x1xf32> to vector<8x32xf32>
    %270 = arith.mulf %265, %269 : vector<8x32xf32>
    %271 = vector.broadcast %48 : vector<1x32xf32> to vector<8x32xf32>
    %272 = arith.mulf %270, %271 : vector<8x32xf32>
    %273 = vector.broadcast %50 : vector<1x32xf32> to vector<8x32xf32>
    %274 = arith.addf %272, %273 : vector<8x32xf32>
    %c0_118 = arith.constant 0 : index
    %c0_119 = arith.constant 0 : index
    %275 = vector.load %arg32[%c0_118, %c0_119] : memref<8x32xf32, #tpu.memory_space<vmem>>, vector<8x32xf32>
    tpu.vector_store %arg32[%c0_118, %c0_119], %274 {strides = array<i32>} : memref<8x32xf32, #tpu.memory_space<vmem>>, vector<8x32xf32>,
    %c1_i32 = arith.constant 1 : i32
    %276 = arith.cmpi eq, %arg1, %c1_i32 : i32
    %277 = arith.extui %276 : i1 to i32
    %c0_i32_120 = arith.constant 0 : i32
    %278 = arith.cmpi ne, %277, %c0_i32_120 : i32
    scf.if %278 {
      %c0_121 = arith.constant 0 : index
      %c0_122 = arith.constant 0 : index
      %c0_123 = arith.constant 0 : index
      %279 = vector.load %arg31[%c0_121, %c0_122, %c0_123] : memref<1x8x32xf32, #tpu.memory_space<vmem>>, vector<1x8x32xf32>
      %280 = vector.shape_cast %279 : vector<1x8x32xf32> to vector<8x32xf32>
      %281 = vector.shape_cast %274 : vector<8x32xf32> to vector<1x8x32xf32>
      tpu.vector_store %arg31[%c0_121, %c0_122, %c0_123], %281 {strides = array<i32>} : memref<1x8x32xf32, #tpu.memory_space<vmem>>, vector<1x8x32xf32>,
    } else {
    }
    return
  }
  func.func @transform_0(%arg0: i32, %arg1: i32) -> (i32, i32, i32) {
    %c0_i32 = arith.constant 0 : i32
    %c0_i32_0 = arith.constant 0 : i32
    %c0_i32_1 = arith.constant 0 : i32
    return %arg0, %c0_i32, %c0_i32_0 : i32, i32, i32
  }
  func.func @transform_1(%arg0: i32, %arg1: i32) -> (i32, i32, i32) {
    %c0_i32 = arith.constant 0 : i32
    %c0_i32_0 = arith.constant 0 : i32
    %c0_i32_1 = arith.constant 0 : i32
    return %arg0, %c0_i32, %c0_i32_0 : i32, i32, i32
  }
  func.func @transform_2(%arg0: i32, %arg1: i32) -> (i32, i32, i32) {
    %c0_i32 = arith.constant 0 : i32
    %c0_i32_0 = arith.constant 0 : i32
    %c0_i32_1 = arith.constant 0 : i32
    return %arg0, %c0_i32, %c0_i32_0 : i32, i32, i32
  }
  func.func @transform_3(%arg0: i32, %arg1: i32) -> (i32, i32, i32) {
    %c0_i32 = arith.constant 0 : i32
    %c0_i32_0 = arith.constant 0 : i32
    %c0_i32_1 = arith.constant 0 : i32
    return %arg0, %c0_i32, %c0_i32_0 : i32, i32, i32
  }
  func.func @transform_4(%arg0: i32, %arg1: i32) -> (i32, i32, i32) {
    %c0_i32 = arith.constant 0 : i32
    %c0_i32_0 = arith.constant 0 : i32
    %c0_i32_1 = arith.constant 0 : i32
    return %arg0, %c0_i32, %c0_i32_0 : i32, i32, i32
  }
  func.func @transform_5(%arg0: i32, %arg1: i32) -> (i32, i32, i32) {
    %c0_i32 = arith.constant 0 : i32
    %c0_i32_0 = arith.constant 0 : i32
    %c0_i32_1 = arith.constant 0 : i32
    return %arg1, %c0_i32, %c0_i32_0 : i32, i32, i32
  }
  func.func @transform_6(%arg0: i32, %arg1: i32) -> (i32, i32, i32) {
    %c0_i32 = arith.constant 0 : i32
    %c0_i32_0 = arith.constant 0 : i32
    %c0_i32_1 = arith.constant 0 : i32
    return %arg1, %c0_i32, %c0_i32_0 : i32, i32, i32
  }
  func.func @transform_7(%arg0: i32, %arg1: i32) -> (i32, i32, i32) {
    %c0_i32 = arith.constant 0 : i32
    %c0_i32_0 = arith.constant 0 : i32
    %c0_i32_1 = arith.constant 0 : i32
    return %arg1, %c0_i32, %c0_i32_0 : i32, i32, i32
  }
  func.func @transform_8(%arg0: i32, %arg1: i32) -> (i32, i32, i32) {
    %c0_i32 = arith.constant 0 : i32
    %c0_i32_0 = arith.constant 0 : i32
    %c0_i32_1 = arith.constant 0 : i32
    return %arg1, %c0_i32, %c0_i32_0 : i32, i32, i32
  }
  func.func @transform_9(%arg0: i32, %arg1: i32) -> (i32, i32, i32) {
    %c0_i32 = arith.constant 0 : i32
    %c0_i32_0 = arith.constant 0 : i32
    %c0_i32_1 = arith.constant 0 : i32
    return %arg1, %c0_i32, %c0_i32_0 : i32, i32, i32
  }
  func.func @transform_10(%arg0: i32, %arg1: i32) -> (i32, i32, i32) {
    %c0_i32 = arith.constant 0 : i32
    %c0_i32_0 = arith.constant 0 : i32
    %c0_i32_1 = arith.constant 0 : i32
    return %arg1, %c0_i32, %c0_i32_0 : i32, i32, i32
  }
  func.func @transform_11(%arg0: i32, %arg1: i32) -> (i32, i32, i32) {
    %c0_i32 = arith.constant 0 : i32
    %c0_i32_0 = arith.constant 0 : i32
    %c0_i32_1 = arith.constant 0 : i32
    return %arg1, %c0_i32, %c0_i32_0 : i32, i32, i32
  }
  func.func @transform_12(%arg0: i32, %arg1: i32) -> (i32, i32, i32) {
    %c0_i32 = arith.constant 0 : i32
    %c0_i32_0 = arith.constant 0 : i32
    %c0_i32_1 = arith.constant 0 : i32
    return %arg1, %c0_i32, %c0_i32_0 : i32, i32, i32
  }
  func.func @transform_13(%arg0: i32, %arg1: i32) -> (i32, i32, i32) {
    %c0_i32 = arith.constant 0 : i32
    %c0_i32_0 = arith.constant 0 : i32
    %c0_i32_1 = arith.constant 0 : i32
    return %arg1, %c0_i32, %c0_i32_0 : i32, i32, i32
  }
  func.func @transform_14(%arg0: i32, %arg1: i32) -> (i32, i32, i32) {
    %c0_i32 = arith.constant 0 : i32
    %c0_i32_0 = arith.constant 0 : i32
    %c0_i32_1 = arith.constant 0 : i32
    return %arg1, %c0_i32, %c0_i32_0 : i32, i32, i32
  }
  func.func @transform_15(%arg0: i32, %arg1: i32) -> (i32, i32, i32) {
    %c0_i32 = arith.constant 0 : i32
    %c0_i32_0 = arith.constant 0 : i32
    %c0_i32_1 = arith.constant 0 : i32
    return %arg1, %c0_i32, %c0_i32_0 : i32, i32, i32
  }
  func.func @transform_16(%arg0: i32, %arg1: i32) -> (i32, i32, i32) {
    %c0_i32 = arith.constant 0 : i32
    %c0_i32_0 = arith.constant 0 : i32
    %c0_i32_1 = arith.constant 0 : i32
    return %arg1, %c0_i32, %c0_i32_0 : i32, i32, i32
  }
  func.func @transform_17(%arg0: i32, %arg1: i32) -> (i32, i32, i32) {
    %c0_i32 = arith.constant 0 : i32
    %c0_i32_0 = arith.constant 0 : i32
    %c0_i32_1 = arith.constant 0 : i32
    return %arg1, %c0_i32, %c0_i32_0 : i32, i32, i32
  }
  func.func @transform_18(%arg0: i32, %arg1: i32) -> (i32, i32, i32) {
    %c0_i32 = arith.constant 0 : i32
    %c0_i32_0 = arith.constant 0 : i32
    %c0_i32_1 = arith.constant 0 : i32
    return %arg1, %c0_i32, %c0_i32_0 : i32, i32, i32
  }
  func.func @transform_19(%arg0: i32, %arg1: i32) -> (i32, i32, i32) {
    %c0_i32 = arith.constant 0 : i32
    %c0_i32_0 = arith.constant 0 : i32
    %c0_i32_1 = arith.constant 0 : i32
    return %arg1, %c0_i32, %c0_i32_0 : i32, i32, i32
  }
  func.func @transform_20(%arg0: i32, %arg1: i32) -> (i32, i32, i32) {
    %c0_i32 = arith.constant 0 : i32
    %c0_i32_0 = arith.constant 0 : i32
    %c0_i32_1 = arith.constant 0 : i32
    return %arg1, %c0_i32, %c0_i32_0 : i32, i32, i32
  }
  func.func @transform_21(%arg0: i32, %arg1: i32) -> (i32, i32, i32) {
    %c0_i32 = arith.constant 0 : i32
    %c0_i32_0 = arith.constant 0 : i32
    %c0_i32_1 = arith.constant 0 : i32
    return %arg1, %c0_i32, %c0_i32_0 : i32, i32, i32
  }
  func.func @transform_22(%arg0: i32, %arg1: i32) -> (i32, i32, i32) {
    %c0_i32 = arith.constant 0 : i32
    %c0_i32_0 = arith.constant 0 : i32
    %c0_i32_1 = arith.constant 0 : i32
    return %arg1, %c0_i32, %c0_i32_0 : i32, i32, i32
  }
  func.func @transform_23(%arg0: i32, %arg1: i32) -> (i32, i32, i32) {
    %c0_i32 = arith.constant 0 : i32
    %c0_i32_0 = arith.constant 0 : i32
    %c0_i32_1 = arith.constant 0 : i32
    return %arg1, %c0_i32, %c0_i32_0 : i32, i32, i32
  }
  func.func @transform_24(%arg0: i32, %arg1: i32) -> (i32, i32, i32) {
    %c0_i32 = arith.constant 0 : i32
    %c0_i32_0 = arith.constant 0 : i32
    %c0_i32_1 = arith.constant 0 : i32
    return %arg1, %c0_i32, %c0_i32_0 : i32, i32, i32
  }
  func.func @transform_25(%arg0: i32, %arg1: i32) -> (i32, i32, i32) {
    %c0_i32 = arith.constant 0 : i32
    %c0_i32_0 = arith.constant 0 : i32
    %c0_i32_1 = arith.constant 0 : i32
    return %arg1, %c0_i32, %c0_i32_0 : i32, i32, i32
  }
  func.func @transform_26(%arg0: i32, %arg1: i32) -> (i32, i32, i32) {
    %c0_i32 = arith.constant 0 : i32
    %c0_i32_0 = arith.constant 0 : i32
    %c0_i32_1 = arith.constant 0 : i32
    return %arg1, %c0_i32, %c0_i32_0 : i32, i32, i32
  }
  func.func @transform_27(%arg0: i32, %arg1: i32) -> (i32, i32, i32) {
    %c0_i32 = arith.constant 0 : i32
    %c0_i32_0 = arith.constant 0 : i32
    %c0_i32_1 = arith.constant 0 : i32
    return %arg1, %c0_i32, %c0_i32_0 : i32, i32, i32
  }
  func.func @transform_28(%arg0: i32, %arg1: i32) -> (i32, i32, i32) {
    %c0_i32 = arith.constant 0 : i32
    %c0_i32_0 = arith.constant 0 : i32
    %c0_i32_1 = arith.constant 0 : i32
    return %arg1, %c0_i32, %c0_i32_0 : i32, i32, i32
  }
  func.func @transform_29(%arg0: i32, %arg1: i32) -> (i32, i32, i32) {
    %c0_i32 = arith.constant 0 : i32
    %c0_i32_0 = arith.constant 0 : i32
    %c0_i32_1 = arith.constant 0 : i32
    return %arg0, %c0_i32, %c0_i32_0 : i32, i32, i32
  }
}

</mosaic_0001>

<llo_original>
// kernel: transformer_layer_sequence.1
$region0: #{transformer_layer_sequence.1}
  #allocation0 [shape = 'u32[]', space=smem, size = 0x4, offset = 0x4, fixed_abs, tag = 'smem constant byte address 0x4 - core index']
  #allocation1 [shape = 'u32[144,128]{1,0:T(1,128)}', space=vmem, size = 0x12000, scoped, tag = 'internal scratch']
  #allocation2 [shape = 'f32[8,32]{1,0:T(8,128)}', space=vmem, size = 0x1000, scoped, tag = 'scratch operand']
  %s0 = inlined_call_operand.smem [shape: u32[30], index: -1, kind: input, shape index: {}]
  %s1 = sld [smem:[%s0]]
  %s2 = scalar_lea.smem %s0, 1
  %s3 = sld [smem:[%s2]]
  %s4 = scalar_lea.smem %s0, 2
  %s5 = sld [smem:[%s4]]
  %s6 = scalar_lea.smem %s0, 3
  %s7 = sld [smem:[%s6]]
  %s8 = scalar_lea.smem %s0, 4
  %s9 = sld [smem:[%s8]]
  %s10 = scalar_lea.smem %s0, 5
  %s11 = sld [smem:[%s10]]
  %s12 = scalar_lea.smem %s0, 6
  %s13 = sld [smem:[%s12]]
  %s14 = scalar_lea.smem %s0, 7
  %s15 = sld [smem:[%s14]]
  %s16 = scalar_lea.smem %s0, 8
  %s17 = sld [smem:[%s16]]
  %s18 = scalar_lea.smem %s0, 9
  %s19 = sld [smem:[%s18]]
  %s20 = scalar_lea.smem %s0, 10
  %s21 = sld [smem:[%s20]]
  %s22 = scalar_lea.smem %s0, 11
  %s23 = sld [smem:[%s22]]
  %s24 = scalar_lea.smem %s0, 12
  %s25 = sld [smem:[%s24]]
  %s26 = scalar_lea.smem %s0, 13
  %s27 = sld [smem:[%s26]]
  %s28 = scalar_lea.smem %s0, 14
  %s29 = sld [smem:[%s28]]
  %s30 = scalar_lea.smem %s0, 15
  %s31 = sld [smem:[%s30]]
  %s32 = scalar_lea.smem %s0, 16
  %s33 = sld [smem:[%s32]]
  %s34 = scalar_lea.smem %s0, 17
  %s35 = sld [smem:[%s34]]
  %s36 = scalar_lea.smem %s0, 18
  %s37 = sld [smem:[%s36]]
  %s38 = scalar_lea.smem %s0, 19
  %s39 = sld [smem:[%s38]]
  %s40 = scalar_lea.smem %s0, 20
  %s41 = sld [smem:[%s40]]
  %s42 = scalar_lea.smem %s0, 21
  %s43 = sld [smem:[%s42]]
  %s44 = scalar_lea.smem %s0, 22
  %s45 = sld [smem:[%s44]]
  %s46 = scalar_lea.smem %s0, 23
  %s47 = sld [smem:[%s46]]
  %s48 = scalar_lea.smem %s0, 24
  %s49 = sld [smem:[%s48]]
  %s50 = scalar_lea.smem %s0, 25
  %s51 = sld [smem:[%s50]]
  %s52 = scalar_lea.smem %s0, 26
  %s53 = sld [smem:[%s52]]
  %s54 = scalar_lea.smem %s0, 27
  %s55 = sld [smem:[%s54]]
  %s56 = scalar_lea.smem %s0, 28
  %s57 = sld [smem:[%s56]]
  %s58 = scalar_lea.smem %s0, 29
  %s59 = sld [smem:[%s58]]
  %s60 = sld [smem:[#allocation0]]
  $region157: #{transformer_layer_sequence.1} parent=0
    _
  %s62 = ssub.s32 1, %s60
  %s63 = scalar_select 0, %s62, %s60
  loop: start=0, step=1, limit=6
  $region2: #{transformer_layer_sequence.1} parent=0 // loop_pre_header
    _
  $region3: #{transformer_layer_sequence.1} parent=0 // loop_header
    %s65 = sphi 0, %s69
    %p66 = scmp.ge.s32.totalorder %s65, 6
    %s72 = sphi 0, %s84
    %s73 = sphi 0, %s80
    %s74 = sphi 0, %s72
    %s75 = sphi 0, %s73
    %s76 = sphi 0, %s74
    %s77 = sphi 0, %s75
    %s87 = sphi 0, %s89
    %s90 = sphi 0, %s87
    %s91 = sphi 0, %s90
    %s107 = sphi 0, %s91
    %s113 = sphi 0, %s115
    %s116 = sphi 0, %s113
    %s117 = sphi 0, %s116
    %s133 = sphi 0, %s117
    %s139 = sphi 0, %s141
    %s142 = sphi 0, %s139
    %s143 = sphi 0, %s142
    %s159 = sphi 0, %s143
    %s165 = sphi 0, %s167
    %s168 = sphi 0, %s165
    %s169 = sphi 0, %s168
    %s185 = sphi 0, %s169
    %s191 = sphi 0, %s193
    %s194 = sphi 0, %s191
    %s195 = sphi 0, %s194
    %s211 = sphi 0, %s195
    %s217 = sphi 0, %s219
    %s220 = sphi 0, %s217
    %s221 = sphi 0, %s220
    %s237 = sphi 0, %s221
    %s243 = sphi 0, %s245
    %s246 = sphi 0, %s243
    %s247 = sphi 0, %s246
    %s263 = sphi 0, %s247
    %s269 = sphi 0, %s271
    %s272 = sphi 0, %s269
    %s273 = sphi 0, %s272
    %s289 = sphi 0, %s273
    %s295 = sphi 0, %s297
    %s298 = sphi 0, %s295
    %s299 = sphi 0, %s298
    %s315 = sphi 0, %s299
    %s321 = sphi 0, %s323
    %s324 = sphi 0, %s321
    %s325 = sphi 0, %s324
    %s341 = sphi 0, %s325
    %s347 = sphi 0, %s349
    %s350 = sphi 0, %s347
    %s351 = sphi 0, %s350
    %s367 = sphi 0, %s351
    %s373 = sphi 0, %s375
    %s376 = sphi 0, %s373
    %s377 = sphi 0, %s376
    %s393 = sphi 0, %s377
    %s399 = sphi 0, %s401
    %s402 = sphi 0, %s399
    %s403 = sphi 0, %s402
    %s419 = sphi 0, %s403
    %s425 = sphi 0, %s427
    %s428 = sphi 0, %s425
    %s429 = sphi 0, %s428
    %s445 = sphi 0, %s429
    %s451 = sphi 0, %s453
    %s454 = sphi 0, %s451
    %s455 = sphi 0, %s454
    %s471 = sphi 0, %s455
    %s477 = sphi 0, %s479
    %s480 = sphi 0, %s477
    %s481 = sphi 0, %s480
    %s497 = sphi 0, %s481
    %s503 = sphi 0, %s505
    %s506 = sphi 0, %s503
    %s507 = sphi 0, %s506
    %s523 = sphi 0, %s507
    %s529 = sphi 0, %s531
    %s532 = sphi 0, %s529
    %s533 = sphi 0, %s532
    %s549 = sphi 0, %s533
    %s555 = sphi 0, %s557
    %s558 = sphi 0, %s555
    %s559 = sphi 0, %s558
    %s575 = sphi 0, %s559
    %s581 = sphi 0, %s583
    %s584 = sphi 0, %s581
    %s585 = sphi 0, %s584
    %s601 = sphi 0, %s585
    %s607 = sphi 0, %s609
    %s610 = sphi 0, %s607
    %s611 = sphi 0, %s610
    %s627 = sphi 0, %s611
    %s633 = sphi 0, %s635
    %s636 = sphi 0, %s633
    %s637 = sphi 0, %s636
    %s653 = sphi 0, %s637
    %s659 = sphi 0, %s661
    %s662 = sphi 0, %s659
    %s663 = sphi 0, %s662
    %s679 = sphi 0, %s663
    %s685 = sphi 0, %s687
    %s688 = sphi 0, %s685
    %s689 = sphi 0, %s688
    %s705 = sphi 0, %s689
    %s711 = sphi 0, %s713
    %s714 = sphi 0, %s711
    %s715 = sphi 0, %s714
    %s731 = sphi 0, %s715
    %s737 = sphi 0, %s739
    %s740 = sphi 0, %s737
    %s741 = sphi 0, %s740
    %s757 = sphi 0, %s741
    %s763 = sphi 0, %s765
    %s766 = sphi 0, %s763
    %s767 = sphi 0, %s766
    %s783 = sphi 0, %s767
    %s789 = sphi 0, %s791
    %s792 = sphi 0, %s789
    %s793 = sphi 0, %s792
    %s809 = sphi 0, %s793
    %s815 = sphi 0, %s817
    %s818 = sphi 0, %s815
    %s819 = sphi 0, %s818
    %s835 = sphi 0, %s819
    %s841 = sphi 0, %s843
    %s844 = sphi 0, %s841
    %s845 = sphi 0, %s844
    %s861 = sphi 0, %s845
  $region4: #{transformer_layer_sequence.1} parent=0 // loop_header_branch
    %68 = sbr.rel (%p66) target = $region8
  $region5: #{transformer_layer_sequence.1} parent=0 // loop_body
    %s70 = ssub.s32 %s65, 1
    %s71 = ssub.s32 %s65, 2
    %s78 = sadd.s32 1, %s73
    %p79 = scmp.ge.s32.totalorder %s78, 2
    %s80 = scalar_select %p79, 0, %s78
    %s81 = sadd.s32 1, %s72
    %s82 = scalar_select %p79, %s81, %s72
    %p83 = scmp.ge.s32.totalorder %s82, 2
    %s84 = scalar_select %p83, 0, %s82
    %s85 = ssub.s32 %s72, %s84
    %p86 = scmp.eq.s32.totalorder %s85, 0
    %s88 = sadd.s32 %s87, 1
    %s89 = scalar_select %p86, %s87, %s88
    %p92 = pneg %p86
    %p93 = scmp.eq.s32.totalorder %s65, 3
    %p94 = por %p92, %p93
    %p95 = scmp.ne.s32.totalorder %s87, %s90
    %p96 = scmp.eq.s32.totalorder %s65, 0
    %p97 = por %p95, %p96
    %p98 = scmp.ne.s32.totalorder %s87, %s90
    %p99 = scmp.eq.s32.totalorder %s70, 3
    %p100 = por %p98, %p99
    %p101 = scmp.ne.s32.totalorder %s90, %s91
    %p102 = scmp.eq.s32.totalorder %s70, 0
    %p103 = por %p101, %p102
    %p104 = scmp.ne.s32.totalorder %s90, %s91
    %p105 = scmp.eq.s32.totalorder %s71, 3
    %p106 = por %p104, %p105
    %p108 = scmp.ne.s32.totalorder %s91, %s107
    %p109 = scmp.eq.s32.totalorder %s71, 0
    %p110 = por %p108, %p109
    %s111 = ssub.s32 %s72, %s84
    %p112 = scmp.eq.s32.totalorder %s111, 0
    %s114 = sadd.s32 %s113, 1
    %s115 = scalar_select %p112, %s113, %s114
    %p118 = pneg %p112
    %p119 = scmp.eq.s32.totalorder %s65, 3
    %p120 = por %p118, %p119
    %p121 = scmp.ne.s32.totalorder %s113, %s116
    %p122 = scmp.eq.s32.totalorder %s65, 0
    %p123 = por %p121, %p122
    %p124 = scmp.ne.s32.totalorder %s113, %s116
    %p125 = scmp.eq.s32.totalorder %s70, 3
    %p126 = por %p124, %p125
    %p127 = scmp.ne.s32.totalorder %s116, %s117
    %p128 = scmp.eq.s32.totalorder %s70, 0
    %p129 = por %p127, %p128
    %p130 = scmp.ne.s32.totalorder %s116, %s117
    %p131 = scmp.eq.s32.totalorder %s71, 3
    %p132 = por %p130, %p131
    %p134 = scmp.ne.s32.totalorder %s117, %s133
    %p135 = scmp.eq.s32.totalorder %s71, 0
    %p136 = por %p134, %p135
    %s137 = ssub.s32 %s72, %s84
    %p138 = scmp.eq.s32.totalorder %s137, 0
    %s140 = sadd.s32 %s139, 1
    %s141 = scalar_select %p138, %s139, %s140
    %p144 = pneg %p138
    %p145 = scmp.eq.s32.totalorder %s65, 3
    %p146 = por %p144, %p145
    %p147 = scmp.ne.s32.totalorder %s139, %s142
    %p148 = scmp.eq.s32.totalorder %s65, 0
    %p149 = por %p147, %p148
    %p150 = scmp.ne.s32.totalorder %s139, %s142
    %p151 = scmp.eq.s32.totalorder %s70, 3
    %p152 = por %p150, %p151
    %p153 = scmp.ne.s32.totalorder %s142, %s143
    %p154 = scmp.eq.s32.totalorder %s70, 0
    %p155 = por %p153, %p154
    %p156 = scmp.ne.s32.totalorder %s142, %s143
    %p157 = scmp.eq.s32.totalorder %s71, 3
    %p158 = por %p156, %p157
    %p160 = scmp.ne.s32.totalorder %s143, %s159
    %p161 = scmp.eq.s32.totalorder %s71, 0
    %p162 = por %p160, %p161
    %s163 = ssub.s32 %s72, %s84
    %p164 = scmp.eq.s32.totalorder %s163, 0
    %s166 = sadd.s32 %s165, 1
    %s167 = scalar_select %p164, %s165, %s166
    %p170 = pneg %p164
    %p171 = scmp.eq.s32.totalorder %s65, 3
    %p172 = por %p170, %p171
    %p173 = scmp.ne.s32.totalorder %s165, %s168
    %p174 = scmp.eq.s32.totalorder %s65, 0
    %p175 = por %p173, %p174
    %p176 = scmp.ne.s32.totalorder %s165, %s168
    %p177 = scmp.eq.s32.totalorder %s70, 3
    %p178 = por %p176, %p177
    %p179 = scmp.ne.s32.totalorder %s168, %s169
    %p180 = scmp.eq.s32.totalorder %s70, 0
    %p181 = por %p179, %p180
    %p182 = scmp.ne.s32.totalorder %s168, %s169
    %p183 = scmp.eq.s32.totalorder %s71, 3
    %p184 = por %p182, %p183
    %p186 = scmp.ne.s32.totalorder %s169, %s185
    %p187 = scmp.eq.s32.totalorder %s71, 0
    %p188 = por %p186, %p187
    %s189 = ssub.s32 %s72, %s84
    %p190 = scmp.eq.s32.totalorder %s189, 0
    %s192 = sadd.s32 %s191, 1
    %s193 = scalar_select %p190, %s191, %s192
    %p196 = pneg %p190
    %p197 = scmp.eq.s32.totalorder %s65, 3
    %p198 = por %p196, %p197
    %p199 = scmp.ne.s32.totalorder %s191, %s194
    %p200 = scmp.eq.s32.totalorder %s65, 0
    %p201 = por %p199, %p200
    %p202 = scmp.ne.s32.totalorder %s191, %s194
    %p203 = scmp.eq.s32.totalorder %s70, 3
    %p204 = por %p202, %p203
    %p205 = scmp.ne.s32.totalorder %s194, %s195
    %p206 = scmp.eq.s32.totalorder %s70, 0
    %p207 = por %p205, %p206
    %p208 = scmp.ne.s32.totalorder %s194, %s195
    %p209 = scmp.eq.s32.totalorder %s71, 3
    %p210 = por %p208, %p209
    %p212 = scmp.ne.s32.totalorder %s195, %s211
    %p213 = scmp.eq.s32.totalorder %s71, 0
    %p214 = por %p212, %p213
    %s215 = ssub.s32 %s73, %s80
    %p216 = scmp.eq.s32.totalorder %s215, 0
    %s218 = sadd.s32 %s217, 1
    %s219 = scalar_select %p216, %s217, %s218
    %p222 = pneg %p216
    %p223 = scmp.eq.s32.totalorder %s65, 3
    %p224 = por %p222, %p223
    %p225 = scmp.ne.s32.totalorder %s217, %s220
    %p226 = scmp.eq.s32.totalorder %s65, 0
    %p227 = por %p225, %p226
    %p228 = scmp.ne.s32.totalorder %s217, %s220
    %p229 = scmp.eq.s32.totalorder %s70, 3
    %p230 = por %p228, %p229
    %p231 = scmp.ne.s32.totalorder %s220, %s221
    %p232 = scmp.eq.s32.totalorder %s70, 0
    %p233 = por %p231, %p232
    %p234 = scmp.ne.s32.totalorder %s220, %s221
    %p235 = scmp.eq.s32.totalorder %s71, 3
    %p236 = por %p234, %p235
    %p238 = scmp.ne.s32.totalorder %s221, %s237
    %p239 = scmp.eq.s32.totalorder %s71, 0
    %p240 = por %p238, %p239
    %s241 = ssub.s32 %s73, %s80
    %p242 = scmp.eq.s32.totalorder %s241, 0
    %s244 = sadd.s32 %s243, 1
    %s245 = scalar_select %p242, %s243, %s244
    %p248 = pneg %p242
    %p249 = scmp.eq.s32.totalorder %s65, 3
    %p250 = por %p248, %p249
    %p251 = scmp.ne.s32.totalorder %s243, %s246
    %p252 = scmp.eq.s32.totalorder %s65, 0
    %p253 = por %p251, %p252
    %p254 = scmp.ne.s32.totalorder %s243, %s246
    %p255 = scmp.eq.s32.totalorder %s70, 3
    %p256 = por %p254, %p255
    %p257 = scmp.ne.s32.totalorder %s246, %s247
    %p258 = scmp.eq.s32.totalorder %s70, 0
    %p259 = por %p257, %p258
    %p260 = scmp.ne.s32.totalorder %s246, %s247
    %p261 = scmp.eq.s32.totalorder %s71, 3
    %p262 = por %p260, %p261
    %p264 = scmp.ne.s32.totalorder %s247, %s263
    %p265 = scmp.eq.s32.totalorder %s71, 0
    %p266 = por %p264, %p265
    %s267 = ssub.s32 %s73, %s80
    %p268 = scmp.eq.s32.totalorder %s267, 0
    %s270 = sadd.s32 %s269, 1
    %s271 = scalar_select %p268, %s269, %s270
    %p274 = pneg %p268
    %p275 = scmp.eq.s32.totalorder %s65, 3
    %p276 = por %p274, %p275
    %p277 = scmp.ne.s32.totalorder %s269, %s272
    %p278 = scmp.eq.s32.totalorder %s65, 0
    %p279 = por %p277, %p278
    %p280 = scmp.ne.s32.totalorder %s269, %s272
    %p281 = scmp.eq.s32.totalorder %s70, 3
    %p282 = por %p280, %p281
    %p283 = scmp.ne.s32.totalorder %s272, %s273
    %p284 = scmp.eq.s32.totalorder %s70, 0
    %p285 = por %p283, %p284
    %p286 = scmp.ne.s32.totalorder %s272, %s273
    %p287 = scmp.eq.s32.totalorder %s71, 3
    %p288 = por %p286, %p287
    %p290 = scmp.ne.s32.totalorder %s273, %s289
    %p291 = scmp.eq.s32.totalorder %s71, 0
    %p292 = por %p290, %p291
    %s293 = ssub.s32 %s73, %s80
    %p294 = scmp.eq.s32.totalorder %s293, 0
    %s296 = sadd.s32 %s295, 1
    %s297 = scalar_select %p294, %s295, %s296
    %p300 = pneg %p294
    %p301 = scmp.eq.s32.totalorder %s65, 3
    %p302 = por %p300, %p301
    %p303 = scmp.ne.s32.totalorder %s295, %s298
    %p304 = scmp.eq.s32.totalorder %s65, 0
    %p305 = por %p303, %p304
    %p306 = scmp.ne.s32.totalorder %s295, %s298
    %p307 = scmp.eq.s32.totalorder %s70, 3
    %p308 = por %p306, %p307
    %p309 = scmp.ne.s32.totalorder %s298, %s299
    %p310 = scmp.eq.s32.totalorder %s70, 0
    %p311 = por %p309, %p310
    %p312 = scmp.ne.s32.totalorder %s298, %s299
    %p313 = scmp.eq.s32.totalorder %s71, 3
    %p314 = por %p312, %p313
    %p316 = scmp.ne.s32.totalorder %s299, %s315
    %p317 = scmp.eq.s32.totalorder %s71, 0
    %p318 = por %p316, %p317
    %s319 = ssub.s32 %s73, %s80
    %p320 = scmp.eq.s32.totalorder %s319, 0
    %s322 = sadd.s32 %s321, 1
    %s323 = scalar_select %p320, %s321, %s322
    %p326 = pneg %p320
    %p327 = scmp.eq.s32.totalorder %s65, 3
    %p328 = por %p326, %p327
    %p329 = scmp.ne.s32.totalorder %s321, %s324
    %p330 = scmp.eq.s32.totalorder %s65, 0
    %p331 = por %p329, %p330
    %p332 = scmp.ne.s32.totalorder %s321, %s324
    %p333 = scmp.eq.s32.totalorder %s70, 3
    %p334 = por %p332, %p333
    %p335 = scmp.ne.s32.totalorder %s324, %s325
    %p336 = scmp.eq.s32.totalorder %s70, 0
    %p337 = por %p335, %p336
    %p338 = scmp.ne.s32.totalorder %s324, %s325
    %p339 = scmp.eq.s32.totalorder %s71, 3
    %p340 = por %p338, %p339
    %p342 = scmp.ne.s32.totalorder %s325, %s341
    %p343 = scmp.eq.s32.totalorder %s71, 0
    %p344 = por %p342, %p343
    %s345 = ssub.s32 %s73, %s80
    %p346 = scmp.eq.s32.totalorder %s345, 0
    %s348 = sadd.s32 %s347, 1
    %s349 = scalar_select %p346, %s347, %s348
    %p352 = pneg %p346
    %p353 = scmp.eq.s32.totalorder %s65, 3
    %p354 = por %p352, %p353
    %p355 = scmp.ne.s32.totalorder %s347, %s350
    %p356 = scmp.eq.s32.totalorder %s65, 0
    %p357 = por %p355, %p356
    %p358 = scmp.ne.s32.totalorder %s347, %s350
    %p359 = scmp.eq.s32.totalorder %s70, 3
    %p360 = por %p358, %p359
    %p361 = scmp.ne.s32.totalorder %s350, %s351
    %p362 = scmp.eq.s32.totalorder %s70, 0
    %p363 = por %p361, %p362
    %p364 = scmp.ne.s32.totalorder %s350, %s351
    %p365 = scmp.eq.s32.totalorder %s71, 3
    %p366 = por %p364, %p365
    %p368 = scmp.ne.s32.totalorder %s351, %s367
    %p369 = scmp.eq.s32.totalorder %s71, 0
    %p370 = por %p368, %p369
    %s371 = ssub.s32 %s73, %s80
    %p372 = scmp.eq.s32.totalorder %s371, 0
    %s374 = sadd.s32 %s373, 1
    %s375 = scalar_select %p372, %s373, %s374
    %p378 = pneg %p372
    %p379 = scmp.eq.s32.totalorder %s65, 3
    %p380 = por %p378, %p379
    %p381 = scmp.ne.s32.totalorder %s373, %s376
    %p382 = scmp.eq.s32.totalorder %s65, 0
    %p383 = por %p381, %p382
    %p384 = scmp.ne.s32.totalorder %s373, %s376
    %p385 = scmp.eq.s32.totalorder %s70, 3
    %p386 = por %p384, %p385
    %p387 = scmp.ne.s32.totalorder %s376, %s377
    %p388 = scmp.eq.s32.totalorder %s70, 0
    %p389 = por %p387, %p388
    %p390 = scmp.ne.s32.totalorder %s376, %s377
    %p391 = scmp.eq.s32.totalorder %s71, 3
    %p392 = por %p390, %p391
    %p394 = scmp.ne.s32.totalorder %s377, %s393
    %p395 = scmp.eq.s32.totalorder %s71, 0
    %p396 = por %p394, %p395
    %s397 = ssub.s32 %s73, %s80
    %p398 = scmp.eq.s32.totalorder %s397, 0
    %s400 = sadd.s32 %s399, 1
    %s401 = scalar_select %p398, %s399, %s400
    %p404 = pneg %p398
    %p405 = scmp.eq.s32.totalorder %s65, 3
    %p406 = por %p404, %p405
    %p407 = scmp.ne.s32.totalorder %s399, %s402
    %p408 = scmp.eq.s32.totalorder %s65, 0
    %p409 = por %p407, %p408
    %p410 = scmp.ne.s32.totalorder %s399, %s402
    %p411 = scmp.eq.s32.totalorder %s70, 3
    %p412 = por %p410, %p411
    %p413 = scmp.ne.s32.totalorder %s402, %s403
    %p414 = scmp.eq.s32.totalorder %s70, 0
    %p415 = por %p413, %p414
    %p416 = scmp.ne.s32.totalorder %s402, %s403
    %p417 = scmp.eq.s32.totalorder %s71, 3
    %p418 = por %p416, %p417
    %p420 = scmp.ne.s32.totalorder %s403, %s419
    %p421 = scmp.eq.s32.totalorder %s71, 0
    %p422 = por %p420, %p421
    %s423 = ssub.s32 %s73, %s80
    %p424 = scmp.eq.s32.totalorder %s423, 0
    %s426 = sadd.s32 %s425, 1
    %s427 = scalar_select %p424, %s425, %s426
    %p430 = pneg %p424
    %p431 = scmp.eq.s32.totalorder %s65, 3
    %p432 = por %p430, %p431
    %p433 = scmp.ne.s32.totalorder %s425, %s428
    %p434 = scmp.eq.s32.totalorder %s65, 0
    %p435 = por %p433, %p434
    %p436 = scmp.ne.s32.totalorder %s425, %s428
    %p437 = scmp.eq.s32.totalorder %s70, 3
    %p438 = por %p436, %p437
    %p439 = scmp.ne.s32.totalorder %s428, %s429
    %p440 = scmp.eq.s32.totalorder %s70, 0
    %p441 = por %p439, %p440
    %p442 = scmp.ne.s32.totalorder %s428, %s429
    %p443 = scmp.eq.s32.totalorder %s71, 3
    %p444 = por %p442, %p443
    %p446 = scmp.ne.s32.totalorder %s429, %s445
    %p447 = scmp.eq.s32.totalorder %s71, 0
    %p448 = por %p446, %p447
    %s449 = ssub.s32 %s73, %s80
    %p450 = scmp.eq.s32.totalorder %s449, 0
    %s452 = sadd.s32 %s451, 1
    %s453 = scalar_select %p450, %s451, %s452
    %p456 = pneg %p450
    %p457 = scmp.eq.s32.totalorder %s65, 3
    %p458 = por %p456, %p457
    %p459 = scmp.ne.s32.totalorder %s451, %s454
    %p460 = scmp.eq.s32.totalorder %s65, 0
    %p461 = por %p459, %p460
    %p462 = scmp.ne.s32.totalorder %s451, %s454
    %p463 = scmp.eq.s32.totalorder %s70, 3
    %p464 = por %p462, %p463
    %p465 = scmp.ne.s32.totalorder %s454, %s455
    %p466 = scmp.eq.s32.totalorder %s70, 0
    %p467 = por %p465, %p466
    %p468 = scmp.ne.s32.totalorder %s454, %s455
    %p469 = scmp.eq.s32.totalorder %s71, 3
    %p470 = por %p468, %p469
    %p472 = scmp.ne.s32.totalorder %s455, %s471
    %p473 = scmp.eq.s32.totalorder %s71, 0
    %p474 = por %p472, %p473
    %s475 = ssub.s32 %s73, %s80
    %p476 = scmp.eq.s32.totalorder %s475, 0
    %s478 = sadd.s32 %s477, 1
    %s479 = scalar_select %p476, %s477, %s478
    %p482 = pneg %p476
    %p483 = scmp.eq.s32.totalorder %s65, 3
    %p484 = por %p482, %p483
    %p485 = scmp.ne.s32.totalorder %s477, %s480
    %p486 = scmp.eq.s32.totalorder %s65, 0
    %p487 = por %p485, %p486
    %p488 = scmp.ne.s32.totalorder %s477, %s480
    %p489 = scmp.eq.s32.totalorder %s70, 3
    %p490 = por %p488, %p489
    %p491 = scmp.ne.s32.totalorder %s480, %s481
    %p492 = scmp.eq.s32.totalorder %s70, 0
    %p493 = por %p491, %p492
    %p494 = scmp.ne.s32.totalorder %s480, %s481
    %p495 = scmp.eq.s32.totalorder %s71, 3
    %p496 = por %p494, %p495
    %p498 = scmp.ne.s32.totalorder %s481, %s497
    %p499 = scmp.eq.s32.totalorder %s71, 0
    %p500 = por %p498, %p499
    %s501 = ssub.s32 %s73, %s80
    %p502 = scmp.eq.s32.totalorder %s501, 0
    %s504 = sadd.s32 %s503, 1
    %s505 = scalar_select %p502, %s503, %s504
    %p508 = pneg %p502
    %p509 = scmp.eq.s32.totalorder %s65, 3
    %p510 = por %p508, %p509
    %p511 = scmp.ne.s32.totalorder %s503, %s506
    %p512 = scmp.eq.s32.totalorder %s65, 0
    %p513 = por %p511, %p512
    %p514 = scmp.ne.s32.totalorder %s503, %s506
    %p515 = scmp.eq.s32.totalorder %s70, 3
    %p516 = por %p514, %p515
    %p517 = scmp.ne.s32.totalorder %s506, %s507
    %p518 = scmp.eq.s32.totalorder %s70, 0
    %p519 = por %p517, %p518
    %p520 = scmp.ne.s32.totalorder %s506, %s507
    %p521 = scmp.eq.s32.totalorder %s71, 3
    %p522 = por %p520, %p521
    %p524 = scmp.ne.s32.totalorder %s507, %s523
    %p525 = scmp.eq.s32.totalorder %s71, 0
    %p526 = por %p524, %p525
    %s527 = ssub.s32 %s73, %s80
    %p528 = scmp.eq.s32.totalorder %s527, 0
    %s530 = sadd.s32 %s529, 1
    %s531 = scalar_select %p528, %s529, %s530
    %p534 = pneg %p528
    %p535 = scmp.eq.s32.totalorder %s65, 3
    %p536 = por %p534, %p535
    %p537 = scmp.ne.s32.totalorder %s529, %s532
    %p538 = scmp.eq.s32.totalorder %s65, 0
    %p539 = por %p537, %p538
    %p540 = scmp.ne.s32.totalorder %s529, %s532
    %p541 = scmp.eq.s32.totalorder %s70, 3
    %p542 = por %p540, %p541
    %p543 = scmp.ne.s32.totalorder %s532, %s533
    %p544 = scmp.eq.s32.totalorder %s70, 0
    %p545 = por %p543, %p544
    %p546 = scmp.ne.s32.totalorder %s532, %s533
    %p547 = scmp.eq.s32.totalorder %s71, 3
    %p548 = por %p546, %p547
    %p550 = scmp.ne.s32.totalorder %s533, %s549
    %p551 = scmp.eq.s32.totalorder %s71, 0
    %p552 = por %p550, %p551
    %s553 = ssub.s32 %s73, %s80
    %p554 = scmp.eq.s32.totalorder %s553, 0
    %s556 = sadd.s32 %s555, 1
    %s557 = scalar_select %p554, %s555, %s556
    %p560 = pneg %p554
    %p561 = scmp.eq.s32.totalorder %s65, 3
    %p562 = por %p560, %p561
    %p563 = scmp.ne.s32.totalorder %s555, %s558
    %p564 = scmp.eq.s32.totalorder %s65, 0
    %p565 = por %p563, %p564
    %p566 = scmp.ne.s32.totalorder %s555, %s558
    %p567 = scmp.eq.s32.totalorder %s70, 3
    %p568 = por %p566, %p567
    %p569 = scmp.ne.s32.totalorder %s558, %s559
    %p570 = scmp.eq.s32.totalorder %s70, 0
    %p571 = por %p569, %p570
    %p572 = scmp.ne.s32.totalorder %s558, %s559
    %p573 = scmp.eq.s32.totalorder %s71, 3
    %p574 = por %p572, %p573
    %p576 = scmp.ne.s32.totalorder %s559, %s575
    %p577 = scmp.eq.s32.totalorder %s71, 0
    %p578 = por %p576, %p577
    %s579 = ssub.s32 %s73, %s80
    %p580 = scmp.eq.s32.totalorder %s579, 0
    %s582 = sadd.s32 %s581, 1
    %s583 = scalar_select %p580, %s581, %s582
    %p586 = pneg %p580
    %p587 = scmp.eq.s32.totalorder %s65, 3
    %p588 = por %p586, %p587
    %p589 = scmp.ne.s32.totalorder %s581, %s584
    %p590 = scmp.eq.s32.totalorder %s65, 0
    %p591 = por %p589, %p590
    %p592 = scmp.ne.s32.totalorder %s581, %s584
    %p593 = scmp.eq.s32.totalorder %s70, 3
    %p594 = por %p592, %p593
    %p595 = scmp.ne.s32.totalorder %s584, %s585
    %p596 = scmp.eq.s32.totalorder %s70, 0
    %p597 = por %p595, %p596
    %p598 = scmp.ne.s32.totalorder %s584, %s585
    %p599 = scmp.eq.s32.totalorder %s71, 3
    %p600 = por %p598, %p599
    %p602 = scmp.ne.s32.totalorder %s585, %s601
    %p603 = scmp.eq.s32.totalorder %s71, 0
    %p604 = por %p602, %p603
    %s605 = ssub.s32 %s73, %s80
    %p606 = scmp.eq.s32.totalorder %s605, 0
    %s608 = sadd.s32 %s607, 1
    %s609 = scalar_select %p606, %s607, %s608
    %p612 = pneg %p606
    %p613 = scmp.eq.s32.totalorder %s65, 3
    %p614 = por %p612, %p613
    %p615 = scmp.ne.s32.totalorder %s607, %s610
    %p616 = scmp.eq.s32.totalorder %s65, 0
    %p617 = por %p615, %p616
    %p618 = scmp.ne.s32.totalorder %s607, %s610
    %p619 = scmp.eq.s32.totalorder %s70, 3
    %p620 = por %p618, %p619
    %p621 = scmp.ne.s32.totalorder %s610, %s611
    %p622 = scmp.eq.s32.totalorder %s70, 0
    %p623 = por %p621, %p622
    %p624 = scmp.ne.s32.totalorder %s610, %s611
    %p625 = scmp.eq.s32.totalorder %s71, 3
    %p626 = por %p624, %p625
    %p628 = scmp.ne.s32.totalorder %s611, %s627
    %p629 = scmp.eq.s32.totalorder %s71, 0
    %p630 = por %p628, %p629
    %s631 = ssub.s32 %s73, %s80
    %p632 = scmp.eq.s32.totalorder %s631, 0
    %s634 = sadd.s32 %s633, 1
    %s635 = scalar_select %p632, %s633, %s634
    %p638 = pneg %p632
    %p639 = scmp.eq.s32.totalorder %s65, 3
    %p640 = por %p638, %p639
    %p641 = scmp.ne.s32.totalorder %s633, %s636
    %p642 = scmp.eq.s32.totalorder %s65, 0
    %p643 = por %p641, %p642
    %p644 = scmp.ne.s32.totalorder %s633, %s636
    %p645 = scmp.eq.s32.totalorder %s70, 3
    %p646 = por %p644, %p645
    %p647 = scmp.ne.s32.totalorder %s636, %s637
    %p648 = scmp.eq.s32.totalorder %s70, 0
    %p649 = por %p647, %p648
    %p650 = scmp.ne.s32.totalorder %s636, %s637
    %p651 = scmp.eq.s32.totalorder %s71, 3
    %p652 = por %p650, %p651
    %p654 = scmp.ne.s32.totalorder %s637, %s653
    %p655 = scmp.eq.s32.totalorder %s71, 0
    %p656 = por %p654, %p655
    %s657 = ssub.s32 %s73, %s80
    %p658 = scmp.eq.s32.totalorder %s657, 0
    %s660 = sadd.s32 %s659, 1
    %s661 = scalar_select %p658, %s659, %s660
    %p664 = pneg %p658
    %p665 = scmp.eq.s32.totalorder %s65, 3
    %p666 = por %p664, %p665
    %p667 = scmp.ne.s32.totalorder %s659, %s662
    %p668 = scmp.eq.s32.totalorder %s65, 0
    %p669 = por %p667, %p668
    %p670 = scmp.ne.s32.totalorder %s659, %s662
    %p671 = scmp.eq.s32.totalorder %s70, 3
    %p672 = por %p670, %p671
    %p673 = scmp.ne.s32.totalorder %s662, %s663
    %p674 = scmp.eq.s32.totalorder %s70, 0
    %p675 = por %p673, %p674
    %p676 = scmp.ne.s32.totalorder %s662, %s663
    %p677 = scmp.eq.s32.totalorder %s71, 3
    %p678 = por %p676, %p677
    %p680 = scmp.ne.s32.totalorder %s663, %s679
    %p681 = scmp.eq.s32.totalorder %s71, 0
    %p682 = por %p680, %p681
    %s683 = ssub.s32 %s73, %s80
    %p684 = scmp.eq.s32.totalorder %s683, 0
    %s686 = sadd.s32 %s685, 1
    %s687 = scalar_select %p684, %s685, %s686
    %p690 = pneg %p684
    %p691 = scmp.eq.s32.totalorder %s65, 3
    %p692 = por %p690, %p691
    %p693 = scmp.ne.s32.totalorder %s685, %s688
    %p694 = scmp.eq.s32.totalorder %s65, 0
    %p695 = por %p693, %p694
    %p696 = scmp.ne.s32.totalorder %s685, %s688
    %p697 = scmp.eq.s32.totalorder %s70, 3
    %p698 = por %p696, %p697
    %p699 = scmp.ne.s32.totalorder %s688, %s689
    %p700 = scmp.eq.s32.totalorder %s70, 0
    %p701 = por %p699, %p700
    %p702 = scmp.ne.s32.totalorder %s688, %s689
    %p703 = scmp.eq.s32.totalorder %s71, 3
    %p704 = por %p702, %p703
    %p706 = scmp.ne.s32.totalorder %s689, %s705
    %p707 = scmp.eq.s32.totalorder %s71, 0
    %p708 = por %p706, %p707
    %s709 = ssub.s32 %s73, %s80
    %p710 = scmp.eq.s32.totalorder %s709, 0
    %s712 = sadd.s32 %s711, 1
    %s713 = scalar_select %p710, %s711, %s712
    %p716 = pneg %p710
    %p717 = scmp.eq.s32.totalorder %s65, 3
    %p718 = por %p716, %p717
    %p719 = scmp.ne.s32.totalorder %s711, %s714
    %p720 = scmp.eq.s32.totalorder %s65, 0
    %p721 = por %p719, %p720
    %p722 = scmp.ne.s32.totalorder %s711, %s714
    %p723 = scmp.eq.s32.totalorder %s70, 3
    %p724 = por %p722, %p723
    %p725 = scmp.ne.s32.totalorder %s714, %s715
    %p726 = scmp.eq.s32.totalorder %s70, 0
    %p727 = por %p725, %p726
    %p728 = scmp.ne.s32.totalorder %s714, %s715
    %p729 = scmp.eq.s32.totalorder %s71, 3
    %p730 = por %p728, %p729
    %p732 = scmp.ne.s32.totalorder %s715, %s731
    %p733 = scmp.eq.s32.totalorder %s71, 0
    %p734 = por %p732, %p733
    %s735 = ssub.s32 %s73, %s80
    %p736 = scmp.eq.s32.totalorder %s735, 0
    %s738 = sadd.s32 %s737, 1
    %s739 = scalar_select %p736, %s737, %s738
    %p742 = pneg %p736
    %p743 = scmp.eq.s32.totalorder %s65, 3
    %p744 = por %p742, %p743
    %p745 = scmp.ne.s32.totalorder %s737, %s740
    %p746 = scmp.eq.s32.totalorder %s65, 0
    %p747 = por %p745, %p746
    %p748 = scmp.ne.s32.totalorder %s737, %s740
    %p749 = scmp.eq.s32.totalorder %s70, 3
    %p750 = por %p748, %p749
    %p751 = scmp.ne.s32.totalorder %s740, %s741
    %p752 = scmp.eq.s32.totalorder %s70, 0
    %p753 = por %p751, %p752
    %p754 = scmp.ne.s32.totalorder %s740, %s741
    %p755 = scmp.eq.s32.totalorder %s71, 3
    %p756 = por %p754, %p755
    %p758 = scmp.ne.s32.totalorder %s741, %s757
    %p759 = scmp.eq.s32.totalorder %s71, 0
    %p760 = por %p758, %p759
    %s761 = ssub.s32 %s73, %s80
    %p762 = scmp.eq.s32.totalorder %s761, 0
    %s764 = sadd.s32 %s763, 1
    %s765 = scalar_select %p762, %s763, %s764
    %p768 = pneg %p762
    %p769 = scmp.eq.s32.totalorder %s65, 3
    %p770 = por %p768, %p769
    %p771 = scmp.ne.s32.totalorder %s763, %s766
    %p772 = scmp.eq.s32.totalorder %s65, 0
    %p773 = por %p771, %p772
    %p774 = scmp.ne.s32.totalorder %s763, %s766
    %p775 = scmp.eq.s32.totalorder %s70, 3
    %p776 = por %p774, %p775
    %p777 = scmp.ne.s32.totalorder %s766, %s767
    %p778 = scmp.eq.s32.totalorder %s70, 0
    %p779 = por %p777, %p778
    %p780 = scmp.ne.s32.totalorder %s766, %s767
    %p781 = scmp.eq.s32.totalorder %s71, 3
    %p782 = por %p780, %p781
    %p784 = scmp.ne.s32.totalorder %s767, %s783
    %p785 = scmp.eq.s32.totalorder %s71, 0
    %p786 = por %p784, %p785
    %s787 = ssub.s32 %s73, %s80
    %p788 = scmp.eq.s32.totalorder %s787, 0
    %s790 = sadd.s32 %s789, 1
    %s791 = scalar_select %p788, %s789, %s790
    %p794 = pneg %p788
    %p795 = scmp.eq.s32.totalorder %s65, 3
    %p796 = por %p794, %p795
    %p797 = scmp.ne.s32.totalorder %s789, %s792
    %p798 = scmp.eq.s32.totalorder %s65, 0
    %p799 = por %p797, %p798
    %p800 = scmp.ne.s32.totalorder %s789, %s792
    %p801 = scmp.eq.s32.totalorder %s70, 3
    %p802 = por %p800, %p801
    %p803 = scmp.ne.s32.totalorder %s792, %s793
    %p804 = scmp.eq.s32.totalorder %s70, 0
    %p805 = por %p803, %p804
    %p806 = scmp.ne.s32.totalorder %s792, %s793
    %p807 = scmp.eq.s32.totalorder %s71, 3
    %p808 = por %p806, %p807
    %p810 = scmp.ne.s32.totalorder %s793, %s809
    %p811 = scmp.eq.s32.totalorder %s71, 0
    %p812 = por %p810, %p811
    %s813 = ssub.s32 %s73, %s80
    %p814 = scmp.eq.s32.totalorder %s813, 0
    %s816 = sadd.s32 %s815, 1
    %s817 = scalar_select %p814, %s815, %s816
    %p820 = pneg %p814
    %p821 = scmp.eq.s32.totalorder %s65, 3
    %p822 = por %p820, %p821
    %p823 = scmp.ne.s32.totalorder %s815, %s818
    %p824 = scmp.eq.s32.totalorder %s65, 0
    %p825 = por %p823, %p824
    %p826 = scmp.ne.s32.totalorder %s815, %s818
    %p827 = scmp.eq.s32.totalorder %s70, 3
    %p828 = por %p826, %p827
    %p829 = scmp.ne.s32.totalorder %s818, %s819
    %p830 = scmp.eq.s32.totalorder %s70, 0
    %p831 = por %p829, %p830
    %p832 = scmp.ne.s32.totalorder %s818, %s819
    %p833 = scmp.eq.s32.totalorder %s71, 3
    %p834 = por %p832, %p833
    %p836 = scmp.ne.s32.totalorder %s819, %s835
    %p837 = scmp.eq.s32.totalorder %s71, 0
    %p838 = por %p836, %p837
    %s839 = ssub.s32 %s72, %s84
    %p840 = scmp.eq.s32.totalorder %s839, 0
    %s842 = sadd.s32 %s841, 1
    %s843 = scalar_select %p840, %s841, %s842
    %p846 = pneg %p840
    %p847 = scmp.eq.s32.totalorder %s65, 3
    %p848 = por %p846, %p847
    %p849 = scmp.ne.s32.totalorder %s841, %s844
    %p850 = scmp.eq.s32.totalorder %s65, 0
    %p851 = por %p849, %p850
    %p852 = scmp.ne.s32.totalorder %s841, %s844
    %p853 = scmp.eq.s32.totalorder %s70, 3
    %p854 = por %p852, %p853
    %p855 = scmp.ne.s32.totalorder %s844, %s845
    %p856 = scmp.eq.s32.totalorder %s70, 0
    %p857 = por %p855, %p856
    %p858 = scmp.ne.s32.totalorder %s844, %s845
    %p859 = scmp.eq.s32.totalorder %s71, 3
    %p860 = por %p858, %p859
    %p862 = scmp.ne.s32.totalorder %s845, %s861
    %p863 = scmp.eq.s32.totalorder %s71, 0
    %p864 = por %p862, %p863
    %p865 = scmp.le.s32.totalorder 1, %s65
    %p866 = scmp.lt.s32.totalorder %s65, 5
    %p867 = pnand %p865, %p866
    %p868 = pneg %p867
    // Predicated region
    $region9: #{transformer_layer_sequence.1} parent=5 // pred_check
      _
    $region10: #{transformer_layer_sequence.1} parent=5 // pred_check_branch
      %870 = sbr.rel (%p867) target = $region12
    $region11: #{transformer_layer_sequence.1} parent=5 // pred_region
      %s871 = ssub.s32 %s65, 1
    $region12: #{transformer_layer_sequence.1} parent=5 // pred_fallthru
      _
    %p872 = scmp.lt.s32.totalorder %s65, 4
    // Predicated region
    $region13: #{transformer_layer_sequence.1} parent=5 // pred_check
      %p873 = pneg %p872
    $region14: #{transformer_layer_sequence.1} parent=5 // pred_check_branch
      %875 = sbr.rel (%p873) target = $region16
    $region15: #{transformer_layer_sequence.1} parent=5 // pred_region
      // Predicated region
      $region17: #{transformer_layer_sequence.1} parent=15 // pred_check
        %p876 = pneg %p97
      $region18: #{transformer_layer_sequence.1} parent=15 // pred_check_branch
        %878 = sbr.rel (%p876) target = $region20
      $region19: #{transformer_layer_sequence.1} parent=15 // pred_region
        %p879 = scmp.lt.s32.totalorder %s72, 1
        %s880 = scalar_select %p879, %s72, 1
        %s881 = smul.addr %s880, 8
        %s882 = scalar_lea.vmem %s1, %s881
      $region20: #{transformer_layer_sequence.1} parent=15 // pred_fallthru
        _
      // Predicated region
      $region21: #{transformer_layer_sequence.1} parent=15 // pred_check
        %p883 = pneg %p123
      $region22: #{transformer_layer_sequence.1} parent=15 // pred_check_branch
        %885 = sbr.rel (%p883) target = $region24
      $region23: #{transformer_layer_sequence.1} parent=15 // pred_region
        %p886 = scmp.lt.s32.totalorder %s72, 1
        %s887 = scalar_select %p886, %s72, 1
        %s888 = smul.addr %s887, 2
        %s889 = smul.addr %s888, 8
        %s890 = scalar_lea.vmem %s3, %s889
      $region24: #{transformer_layer_sequence.1} parent=15 // pred_fallthru
        _
      // Predicated region
      $region25: #{transformer_layer_sequence.1} parent=15 // pred_check
        %p891 = pneg %p149
      $region26: #{transformer_layer_sequence.1} parent=15 // pred_check_branch
        %893 = sbr.rel (%p891) target = $region28
      $region27: #{transformer_layer_sequence.1} parent=15 // pred_region
        %p894 = scmp.lt.s32.totalorder %s72, 1
        %s895 = scalar_select %p894, %s72, 1
        %s896 = smul.addr %s895, 2
        %s897 = smul.addr %s896, 8
        %s898 = scalar_lea.vmem %s5, %s897
      $region28: #{transformer_layer_sequence.1} parent=15 // pred_fallthru
        _
      // Predicated region
      $region29: #{transformer_layer_sequence.1} parent=15 // pred_check
        %p899 = pneg %p175
      $region30: #{transformer_layer_sequence.1} parent=15 // pred_check_branch
        %901 = sbr.rel (%p899) target = $region32
      $region31: #{transformer_layer_sequence.1} parent=15 // pred_region
        %p902 = scmp.lt.s32.totalorder %s72, 1
        %s903 = scalar_select %p902, %s72, 1
        %s904 = smul.addr %s903, 8
        %s905 = scalar_lea.vmem %s7, %s904
      $region32: #{transformer_layer_sequence.1} parent=15 // pred_fallthru
        _
      // Predicated region
      $region33: #{transformer_layer_sequence.1} parent=15 // pred_check
        %p906 = pneg %p201
      $region34: #{transformer_layer_sequence.1} parent=15 // pred_check_branch
        %908 = sbr.rel (%p906) target = $region36
      $region35: #{transformer_layer_sequence.1} parent=15 // pred_region
        %p909 = scmp.lt.s32.totalorder %s72, 1
        %s910 = scalar_select %p909, %s72, 1
        %s911 = smul.addr %s910, 2
        %s912 = smul.addr %s911, 8
        %s913 = scalar_lea.vmem %s9, %s912
      $region36: #{transformer_layer_sequence.1} parent=15 // pred_fallthru
        _
      // Predicated region
      $region37: #{transformer_layer_sequence.1} parent=15 // pred_check
        %p914 = pneg %p227
      $region38: #{transformer_layer_sequence.1} parent=15 // pred_check_branch
        %916 = sbr.rel (%p914) target = $region40
      $region39: #{transformer_layer_sequence.1} parent=15 // pred_region
        %p917 = scmp.lt.s32.totalorder %s73, 1
        %s918 = scalar_select %p917, %s73, 1
        %s919 = smul.addr %s918, 4
        %s920 = smul.addr %s919, 4
        %s921 = scalar_lea.vmem %s11, %s920
      $region40: #{transformer_layer_sequence.1} parent=15 // pred_fallthru
        _
      // Predicated region
      $region41: #{transformer_layer_sequence.1} parent=15 // pred_check
        %p922 = pneg %p253
      $region42: #{transformer_layer_sequence.1} parent=15 // pred_check_branch
        %924 = sbr.rel (%p922) target = $region44
      $region43: #{transformer_layer_sequence.1} parent=15 // pred_region
        %p925 = scmp.lt.s32.totalorder %s73, 1
        %s926 = scalar_select %p925, %s73, 1
        %s927 = scalar_lea.vmem %s13, %s926
      $region44: #{transformer_layer_sequence.1} parent=15 // pred_fallthru
        _
      // Predicated region
      $region45: #{transformer_layer_sequence.1} parent=15 // pred_check
        %p928 = pneg %p279
      $region46: #{transformer_layer_sequence.1} parent=15 // pred_check_branch
        %930 = sbr.rel (%p928) target = $region48
      $region47: #{transformer_layer_sequence.1} parent=15 // pred_region
        %p931 = scmp.lt.s32.totalorder %s73, 1
        %s932 = scalar_select %p931, %s73, 1
        %s933 = smul.addr %s932, 4
        %s934 = smul.addr %s933, 4
        %s935 = scalar_lea.vmem %s15, %s934
      $region48: #{transformer_layer_sequence.1} parent=15 // pred_fallthru
        _
      // Predicated region
      $region49: #{transformer_layer_sequence.1} parent=15 // pred_check
        %p936 = pneg %p305
      $region50: #{transformer_layer_sequence.1} parent=15 // pred_check_branch
        %938 = sbr.rel (%p936) target = $region52
      $region51: #{transformer_layer_sequence.1} parent=15 // pred_region
        %p939 = scmp.lt.s32.totalorder %s73, 1
        %s940 = scalar_select %p939, %s73, 1
        %s941 = scalar_lea.vmem %s17, %s940
      $region52: #{transformer_layer_sequence.1} parent=15 // pred_fallthru
        _
      // Predicated region
      $region53: #{transformer_layer_sequence.1} parent=15 // pred_check
        %p942 = pneg %p331
      $region54: #{transformer_layer_sequence.1} parent=15 // pred_check_branch
        %944 = sbr.rel (%p942) target = $region56
      $region55: #{transformer_layer_sequence.1} parent=15 // pred_region
        %p945 = scmp.lt.s32.totalorder %s73, 1
        %s946 = scalar_select %p945, %s73, 1
        %s947 = smul.addr %s946, 4
        %s948 = smul.addr %s947, 4
        %s949 = scalar_lea.vmem %s19, %s948
      $region56: #{transformer_layer_sequence.1} parent=15 // pred_fallthru
        _
      // Predicated region
      $region57: #{transformer_layer_sequence.1} parent=15 // pred_check
        %p950 = pneg %p357
      $region58: #{transformer_layer_sequence.1} parent=15 // pred_check_branch
        %952 = sbr.rel (%p950) target = $region60
      $region59: #{transformer_layer_sequence.1} parent=15 // pred_region
        %p953 = scmp.lt.s32.totalorder %s73, 1
        %s954 = scalar_select %p953, %s73, 1
        %s955 = scalar_lea.vmem %s21, %s954
      $region60: #{transformer_layer_sequence.1} parent=15 // pred_fallthru
        _
      // Predicated region
      $region61: #{transformer_layer_sequence.1} parent=15 // pred_check
        %p956 = pneg %p383
      $region62: #{transformer_layer_sequence.1} parent=15 // pred_check_branch
        %958 = sbr.rel (%p956) target = $region64
      $region63: #{transformer_layer_sequence.1} parent=15 // pred_region
        %p959 = scmp.lt.s32.totalorder %s73, 1
        %s960 = scalar_select %p959, %s73, 1
        %s961 = smul.addr %s960, 4
        %s962 = smul.addr %s961, 4
        %s963 = scalar_lea.vmem %s23, %s962
      $region64: #{transformer_layer_sequence.1} parent=15 // pred_fallthru
        _
      // Predicated region
      $region65: #{transformer_layer_sequence.1} parent=15 // pred_check
        %p964 = pneg %p409
      $region66: #{transformer_layer_sequence.1} parent=15 // pred_check_branch
        %966 = sbr.rel (%p964) target = $region68
      $region67: #{transformer_layer_sequence.1} parent=15 // pred_region
        %p967 = scmp.lt.s32.totalorder %s73, 1
        %s968 = scalar_select %p967, %s73, 1
        %s969 = scalar_lea.vmem %s25, %s968
      $region68: #{transformer_layer_sequence.1} parent=15 // pred_fallthru
        _
      // Predicated region
      $region69: #{transformer_layer_sequence.1} parent=15 // pred_check
        %p970 = pneg %p435
      $region70: #{transformer_layer_sequence.1} parent=15 // pred_check_branch
        %972 = sbr.rel (%p970) target = $region72
      $region71: #{transformer_layer_sequence.1} parent=15 // pred_region
        %p973 = scmp.lt.s32.totalorder %s73, 1
        %s974 = scalar_select %p973, %s73, 1
        %s975 = smul.addr %s974, 4
        %s976 = smul.addr %s975, 4
        %s977 = scalar_lea.vmem %s27, %s976
      $region72: #{transformer_layer_sequence.1} parent=15 // pred_fallthru
        _
      // Predicated region
      $region73: #{transformer_layer_sequence.1} parent=15 // pred_check
        %p978 = pneg %p461
      $region74: #{transformer_layer_sequence.1} parent=15 // pred_check_branch
        %980 = sbr.rel (%p978) target = $region76
      $region75: #{transformer_layer_sequence.1} parent=15 // pred_region
        %p981 = scmp.lt.s32.totalorder %s73, 1
        %s982 = scalar_select %p981, %s73, 1
        %s983 = scalar_lea.vmem %s29, %s982
      $region76: #{transformer_layer_sequence.1} parent=15 // pred_fallthru
        _
      // Predicated region
      $region77: #{transformer_layer_sequence.1} parent=15 // pred_check
        %p984 = pneg %p487
      $region78: #{transformer_layer_sequence.1} parent=15 // pred_check_branch
        %986 = sbr.rel (%p984) target = $region80
      $region79: #{transformer_layer_sequence.1} parent=15 // pred_region
        %p987 = scmp.lt.s32.totalorder %s73, 1
        %s988 = scalar_select %p987, %s73, 1
        %s989 = smul.addr %s988, 4
        %s990 = smul.addr %s989, 4
        %s991 = scalar_lea.vmem %s31, %s990
      $region80: #{transformer_layer_sequence.1} parent=15 // pred_fallthru
        _
      // Predicated region
      $region81: #{transformer_layer_sequence.1} parent=15 // pred_check
        %p992 = pneg %p513
      $region82: #{transformer_layer_sequence.1} parent=15 // pred_check_branch
        %994 = sbr.rel (%p992) target = $region84
      $region83: #{transformer_layer_sequence.1} parent=15 // pred_region
        %p995 = scmp.lt.s32.totalorder %s73, 1
        %s996 = scalar_select %p995, %s73, 1
        %s997 = scalar_lea.vmem %s33, %s996
      $region84: #{transformer_layer_sequence.1} parent=15 // pred_fallthru
        _
      // Predicated region
      $region85: #{transformer_layer_sequence.1} parent=15 // pred_check
        %p998 = pneg %p539
      $region86: #{transformer_layer_sequence.1} parent=15 // pred_check_branch
        %1000 = sbr.rel (%p998) target = $region88
      $region87: #{transformer_layer_sequence.1} parent=15 // pred_region
        %p1001 = scmp.lt.s32.totalorder %s73, 1
        %s1002 = scalar_select %p1001, %s73, 1
        %s1003 = smul.addr %s1002, 4
        %s1004 = smul.addr %s1003, 4
        %s1005 = scalar_lea.vmem %s35, %s1004
      $region88: #{transformer_layer_sequence.1} parent=15 // pred_fallthru
        _
      // Predicated region
      $region89: #{transformer_layer_sequence.1} parent=15 // pred_check
        %p1006 = pneg %p565
      $region90: #{transformer_layer_sequence.1} parent=15 // pred_check_branch
        %1008 = sbr.rel (%p1006) target = $region92
      $region91: #{transformer_layer_sequence.1} parent=15 // pred_region
        %p1009 = scmp.lt.s32.totalorder %s73, 1
        %s1010 = scalar_select %p1009, %s73, 1
        %s1011 = scalar_lea.vmem %s37, %s1010
      $region92: #{transformer_layer_sequence.1} parent=15 // pred_fallthru
        _
      // Predicated region
      $region93: #{transformer_layer_sequence.1} parent=15 // pred_check
        %p1012 = pneg %p591
      $region94: #{transformer_layer_sequence.1} parent=15 // pred_check_branch
        %1014 = sbr.rel (%p1012) target = $region96
      $region95: #{transformer_layer_sequence.1} parent=15 // pred_region
        %p1015 = scmp.lt.s32.totalorder %s73, 1
        %s1016 = scalar_select %p1015, %s73, 1
        %s1017 = smul.addr %s1016, 4
        %s1018 = smul.addr %s1017, 4
        %s1019 = scalar_lea.vmem %s39, %s1018
      $region96: #{transformer_layer_sequence.1} parent=15 // pred_fallthru
        _
      // Predicated region
      $region97: #{transformer_layer_sequence.1} parent=15 // pred_check
        %p1020 = pneg %p617
      $region98: #{transformer_layer_sequence.1} parent=15 // pred_check_branch
        %1022 = sbr.rel (%p1020) target = $region100
      $region99: #{transformer_layer_sequence.1} parent=15 // pred_region
        %p1023 = scmp.lt.s32.totalorder %s73, 1
        %s1024 = scalar_select %p1023, %s73, 1
        %s1025 = scalar_lea.vmem %s41, %s1024
      $region100: #{transformer_layer_sequence.1} parent=15 // pred_fallthru
        _
      // Predicated region
      $region101: #{transformer_layer_sequence.1} parent=15 // pred_check
        %p1026 = pneg %p643
      $region102: #{transformer_layer_sequence.1} parent=15 // pred_check_branch
        %1028 = sbr.rel (%p1026) target = $region104
      $region103: #{transformer_layer_sequence.1} parent=15 // pred_region
        %p1029 = scmp.lt.s32.totalorder %s73, 1
        %s1030 = scalar_select %p1029, %s73, 1
        %s1031 = smul.addr %s1030, 8
        %s1032 = smul.addr %s1031, 4
        %s1033 = scalar_lea.vmem %s43, %s1032
      $region104: #{transformer_layer_sequence.1} parent=15 // pred_fallthru
        _
      // Predicated region
      $region105: #{transformer_layer_sequence.1} parent=15 // pred_check
        %p1034 = pneg %p669
      $region106: #{transformer_layer_sequence.1} parent=15 // pred_check_branch
        %1036 = sbr.rel (%p1034) target = $region108
      $region107: #{transformer_layer_sequence.1} parent=15 // pred_region
        %p1037 = scmp.lt.s32.totalorder %s73, 1
        %s1038 = scalar_select %p1037, %s73, 1
        %s1039 = scalar_lea.vmem %s45, %s1038
      $region108: #{transformer_layer_sequence.1} parent=15 // pred_fallthru
        _
      // Predicated region
      $region109: #{transformer_layer_sequence.1} parent=15 // pred_check
        %p1040 = pneg %p695
      $region110: #{transformer_layer_sequence.1} parent=15 // pred_check_branch
        %1042 = sbr.rel (%p1040) target = $region112
      $region111: #{transformer_layer_sequence.1} parent=15 // pred_region
        %p1043 = scmp.lt.s32.totalorder %s73, 1
        %s1044 = scalar_select %p1043, %s73, 1
        %s1045 = scalar_lea.vmem %s47, %s1044
      $region112: #{transformer_layer_sequence.1} parent=15 // pred_fallthru
        _
      // Predicated region
      $region113: #{transformer_layer_sequence.1} parent=15 // pred_check
        %p1046 = pneg %p721
      $region114: #{transformer_layer_sequence.1} parent=15 // pred_check_branch
        %1048 = sbr.rel (%p1046) target = $region116
      $region115: #{transformer_layer_sequence.1} parent=15 // pred_region
        %p1049 = scmp.lt.s32.totalorder %s73, 1
        %s1050 = scalar_select %p1049, %s73, 1
        %s1051 = scalar_lea.vmem %s49, %s1050
      $region116: #{transformer_layer_sequence.1} parent=15 // pred_fallthru
        _
      // Predicated region
      $region117: #{transformer_layer_sequence.1} parent=15 // pred_check
        %p1052 = pneg %p747
      $region118: #{transformer_layer_sequence.1} parent=15 // pred_check_branch
        %1054 = sbr.rel (%p1052) target = $region120
      $region119: #{transformer_layer_sequence.1} parent=15 // pred_region
        %p1055 = scmp.lt.s32.totalorder %s73, 1
        %s1056 = scalar_select %p1055, %s73, 1
        %s1057 = scalar_lea.vmem %s51, %s1056
      $region120: #{transformer_layer_sequence.1} parent=15 // pred_fallthru
        _
      // Predicated region
      $region121: #{transformer_layer_sequence.1} parent=15 // pred_check
        %p1058 = pneg %p773
      $region122: #{transformer_layer_sequence.1} parent=15 // pred_check_branch
        %1060 = sbr.rel (%p1058) target = $region124
      $region123: #{transformer_layer_sequence.1} parent=15 // pred_region
        %p1061 = scmp.lt.s32.totalorder %s73, 1
        %s1062 = scalar_select %p1061, %s73, 1
        %s1063 = scalar_lea.vmem %s53, %s1062
      $region124: #{transformer_layer_sequence.1} parent=15 // pred_fallthru
        _
      // Predicated region
      $region125: #{transformer_layer_sequence.1} parent=15 // pred_check
        %p1064 = pneg %p799
      $region126: #{transformer_layer_sequence.1} parent=15 // pred_check_branch
        %1066 = sbr.rel (%p1064) target = $region128
      $region127: #{transformer_layer_sequence.1} parent=15 // pred_region
        %p1067 = scmp.lt.s32.totalorder %s73, 1
        %s1068 = scalar_select %p1067, %s73, 1
        %s1069 = scalar_lea.vmem %s55, %s1068
      $region128: #{transformer_layer_sequence.1} parent=15 // pred_fallthru
        _
      // Predicated region
      $region129: #{transformer_layer_sequence.1} parent=15 // pred_check
        %p1070 = pneg %p825
      $region130: #{transformer_layer_sequence.1} parent=15 // pred_check_branch
        %1072 = sbr.rel (%p1070) target = $region132
      $region131: #{transformer_layer_sequence.1} parent=15 // pred_region
        %p1073 = scmp.lt.s32.totalorder %s73, 1
        %s1074 = scalar_select %p1073, %s73, 1
        %s1075 = scalar_lea.vmem %s57, %s1074
      $region132: #{transformer_layer_sequence.1} parent=15 // pred_fallthru
        _
    $region16: #{transformer_layer_sequence.1} parent=5 // pred_fallthru
      _
    %p1076 = scmp.le.s32.totalorder 1, %s65
    %p1077 = scmp.lt.s32.totalorder %s65, 5
    %p1078 = pnand %p1076, %p1077
    %p1079 = pneg %p1078
    // Predicated region
    $region133: #{transformer_layer_sequence.1} parent=5 // pred_check
      _
    $region134: #{transformer_layer_sequence.1} parent=5 // pred_check_branch
      %1081 = sbr.rel (%p1078) target = $region136
    $region135: #{transformer_layer_sequence.1} parent=5 // pred_region
      %s1082 = ssub.s32 %s65, 1
      %p1083 = scmp.lt.s32.totalorder %s74, 1
      %s1084 = scalar_select %p1083, %s74, 1
      %s1085 = smul.addr %s1084, 8
      %s1086 = scalar_lea.vmem %s1, %s1085
      %p1087 = pneg %p103
      %p1088 = pneg %p100
      %p1089 = scmp.lt.s32.totalorder %s74, 1
      %s1090 = scalar_select %p1089, %s74, 1
      %s1091 = smul.addr %s1090, 2
      %s1092 = smul.addr %s1091, 8
      %s1093 = scalar_lea.vmem %s3, %s1092
      %p1094 = pneg %p129
      %p1095 = pneg %p126
      %p1096 = scmp.lt.s32.totalorder %s74, 1
      %s1097 = scalar_select %p1096, %s74, 1
      %s1098 = smul.addr %s1097, 2
      %s1099 = smul.addr %s1098, 8
      %s1100 = scalar_lea.vmem %s5, %s1099
      %p1101 = pneg %p155
      %p1102 = pneg %p152
      %p1103 = scmp.lt.s32.totalorder %s74, 1
      %s1104 = scalar_select %p1103, %s74, 1
      %s1105 = smul.addr %s1104, 8
      %s1106 = scalar_lea.vmem %s7, %s1105
      %p1107 = pneg %p181
      %p1108 = pneg %p178
      %p1109 = scmp.lt.s32.totalorder %s74, 1
      %s1110 = scalar_select %p1109, %s74, 1
      %s1111 = smul.addr %s1110, 2
      %s1112 = smul.addr %s1111, 8
      %s1113 = scalar_lea.vmem %s9, %s1112
      %p1114 = pneg %p207
      %p1115 = pneg %p204
      %p1116 = scmp.lt.s32.totalorder %s75, 1
      %s1117 = scalar_select %p1116, %s75, 1
      %s1118 = smul.addr %s1117, 4
      %s1119 = smul.addr %s1118, 4
      %s1120 = scalar_lea.vmem %s11, %s1119
      %p1121 = pneg %p233
      %p1122 = pneg %p230
      %p1123 = scmp.lt.s32.totalorder %s75, 1
      %s1124 = scalar_select %p1123, %s75, 1
      %s1125 = scalar_lea.vmem %s13, %s1124
      %p1126 = pneg %p259
      %p1127 = pneg %p256
      %p1128 = scmp.lt.s32.totalorder %s75, 1
      %s1129 = scalar_select %p1128, %s75, 1
      %s1130 = smul.addr %s1129, 4
      %s1131 = smul.addr %s1130, 4
      %s1132 = scalar_lea.vmem %s15, %s1131
      %p1133 = pneg %p285
      %p1134 = pneg %p282
      %p1135 = scmp.lt.s32.totalorder %s75, 1
      %s1136 = scalar_select %p1135, %s75, 1
      %s1137 = scalar_lea.vmem %s17, %s1136
      %p1138 = pneg %p311
      %p1139 = pneg %p308
      %p1140 = scmp.lt.s32.totalorder %s75, 1
      %s1141 = scalar_select %p1140, %s75, 1
      %s1142 = smul.addr %s1141, 4
      %s1143 = smul.addr %s1142, 4
      %s1144 = scalar_lea.vmem %s19, %s1143
      %p1145 = pneg %p337
      %p1146 = pneg %p334
      %p1147 = scmp.lt.s32.totalorder %s75, 1
      %s1148 = scalar_select %p1147, %s75, 1
      %s1149 = scalar_lea.vmem %s21, %s1148
      %p1150 = pneg %p363
      %p1151 = pneg %p360
      %p1152 = scmp.lt.s32.totalorder %s75, 1
      %s1153 = scalar_select %p1152, %s75, 1
      %s1154 = smul.addr %s1153, 4
      %s1155 = smul.addr %s1154, 4
      %s1156 = scalar_lea.vmem %s23, %s1155
      %p1157 = pneg %p389
      %p1158 = pneg %p386
      %p1159 = scmp.lt.s32.totalorder %s75, 1
      %s1160 = scalar_select %p1159, %s75, 1
      %s1161 = scalar_lea.vmem %s25, %s1160
      %p1162 = pneg %p415
      %p1163 = pneg %p412
      %p1164 = scmp.lt.s32.totalorder %s75, 1
      %s1165 = scalar_select %p1164, %s75, 1
      %s1166 = smul.addr %s1165, 4
      %s1167 = smul.addr %s1166, 4
      %s1168 = scalar_lea.vmem %s27, %s1167
      %p1169 = pneg %p441
      %p1170 = pneg %p438
      %p1171 = scmp.lt.s32.totalorder %s75, 1
      %s1172 = scalar_select %p1171, %s75, 1
      %s1173 = scalar_lea.vmem %s29, %s1172
      %p1174 = pneg %p467
      %p1175 = pneg %p464
      %p1176 = scmp.lt.s32.totalorder %s75, 1
      %s1177 = scalar_select %p1176, %s75, 1
      %s1178 = smul.addr %s1177, 4
      %s1179 = smul.addr %s1178, 4
      %s1180 = scalar_lea.vmem %s31, %s1179
      %p1181 = pneg %p493
      %p1182 = pneg %p490
      %p1183 = scmp.lt.s32.totalorder %s75, 1
      %s1184 = scalar_select %p1183, %s75, 1
      %s1185 = scalar_lea.vmem %s33, %s1184
      %p1186 = pneg %p519
      %p1187 = pneg %p516
      %p1188 = scmp.lt.s32.totalorder %s75, 1
      %s1189 = scalar_select %p1188, %s75, 1
      %s1190 = smul.addr %s1189, 4
      %s1191 = smul.addr %s1190, 4
      %s1192 = scalar_lea.vmem %s35, %s1191
      %p1193 = pneg %p545
      %p1194 = pneg %p542
      %p1195 = scmp.lt.s32.totalorder %s75, 1
      %s1196 = scalar_select %p1195, %s75, 1
      %s1197 = scalar_lea.vmem %s37, %s1196
      %p1198 = pneg %p571
      %p1199 = pneg %p568
      %p1200 = scmp.lt.s32.totalorder %s75, 1
      %s1201 = scalar_select %p1200, %s75, 1
      %s1202 = smul.addr %s1201, 4
      %s1203 = smul.addr %s1202, 4
      %s1204 = scalar_lea.vmem %s39, %s1203
      %p1205 = pneg %p597
      %p1206 = pneg %p594
      %p1207 = scmp.lt.s32.totalorder %s75, 1
      %s1208 = scalar_select %p1207, %s75, 1
      %s1209 = scalar_lea.vmem %s41, %s1208
      %p1210 = pneg %p623
      %p1211 = pneg %p620
      %p1212 = scmp.lt.s32.totalorder %s75, 1
      %s1213 = scalar_select %p1212, %s75, 1
      %s1214 = smul.addr %s1213, 8
      %s1215 = smul.addr %s1214, 4
      %s1216 = scalar_lea.vmem %s43, %s1215
      %p1217 = pneg %p649
      %p1218 = pneg %p646
      %p1219 = scmp.lt.s32.totalorder %s75, 1
      %s1220 = scalar_select %p1219, %s75, 1
      %s1221 = scalar_lea.vmem %s45, %s1220
      %p1222 = pneg %p675
      %p1223 = pneg %p672
      %p1224 = scmp.lt.s32.totalorder %s75, 1
      %s1225 = scalar_select %p1224, %s75, 1
      %s1226 = scalar_lea.vmem %s47, %s1225
      %p1227 = pneg %p701
      %p1228 = pneg %p698
      %p1229 = scmp.lt.s32.totalorder %s75, 1
      %s1230 = scalar_select %p1229, %s75, 1
      %s1231 = scalar_lea.vmem %s49, %s1230
      %p1232 = pneg %p727
      %p1233 = pneg %p724
      %p1234 = scmp.lt.s32.totalorder %s75, 1
      %s1235 = scalar_select %p1234, %s75, 1
      %s1236 = scalar_lea.vmem %s51, %s1235
      %p1237 = pneg %p753
      %p1238 = pneg %p750
      %p1239 = scmp.lt.s32.totalorder %s75, 1
      %s1240 = scalar_select %p1239, %s75, 1
      %s1241 = scalar_lea.vmem %s53, %s1240
      %p1242 = pneg %p779
      %p1243 = pneg %p776
      %p1244 = scmp.lt.s32.totalorder %s75, 1
      %s1245 = scalar_select %p1244, %s75, 1
      %s1246 = scalar_lea.vmem %s55, %s1245
      %p1247 = pneg %p805
      %p1248 = pneg %p802
      %p1249 = scmp.lt.s32.totalorder %s75, 1
      %s1250 = scalar_select %p1249, %s75, 1
      %s1251 = scalar_lea.vmem %s57, %s1250
      %p1252 = pneg %p831
      %p1253 = pneg %p828
      %p1254 = pneg %p857
      %p1255 = pneg %p854
      %p1256 = scmp.lt.s32.totalorder %s74, 1
      %s1257 = scalar_select %p1256, %s74, 1
      %s1258 = smul.addr %s1257, 8
      %s1259 = scalar_lea.vmem %s59, %s1258
      %p1260 = scmp.lt.s32.totalorder %s74, 1
      %s1261 = scalar_select %p1260, %s74, 1
      %s1262 = smul.addr %s1261, 8
      %s1263 = scalar_lea.vmem %s1, %s1262
      %p1264 = scmp.lt.s32.totalorder %s74, 1
      %s1265 = scalar_select %p1264, %s74, 1
      %s1266 = smul.addr %s1265, 2
      %s1267 = smul.addr %s1266, 8
      %s1268 = scalar_lea.vmem %s3, %s1267
      %p1269 = scmp.lt.s32.totalorder %s74, 1
      %s1270 = scalar_select %p1269, %s74, 1
      %s1271 = smul.addr %s1270, 2
      %s1272 = smul.addr %s1271, 8
      %s1273 = scalar_lea.vmem %s5, %s1272
      %p1274 = scmp.lt.s32.totalorder %s74, 1
      %s1275 = scalar_select %p1274, %s74, 1
      %s1276 = smul.addr %s1275, 8
      %s1277 = scalar_lea.vmem %s7, %s1276
      %p1278 = scmp.lt.s32.totalorder %s74, 1
      %s1279 = scalar_select %p1278, %s74, 1
      %s1280 = smul.addr %s1279, 2
      %s1281 = smul.addr %s1280, 8
      %s1282 = scalar_lea.vmem %s9, %s1281
      %p1283 = scmp.lt.s32.totalorder %s75, 1
      %s1284 = scalar_select %p1283, %s75, 1
      %s1285 = smul.addr %s1284, 4
      %s1286 = smul.addr %s1285, 4
      %s1287 = scalar_lea.vmem %s11, %s1286
      %p1288 = scmp.lt.s32.totalorder %s75, 1
      %s1289 = scalar_select %p1288, %s75, 1
      %s1290 = scalar_lea.vmem %s13, %s1289
      %p1291 = scmp.lt.s32.totalorder %s75, 1
      %s1292 = scalar_select %p1291, %s75, 1
      %s1293 = smul.addr %s1292, 4
      %s1294 = smul.addr %s1293, 4
      %s1295 = scalar_lea.vmem %s15, %s1294
      %p1296 = scmp.lt.s32.totalorder %s75, 1
      %s1297 = scalar_select %p1296, %s75, 1
      %s1298 = scalar_lea.vmem %s17, %s1297
      %p1299 = scmp.lt.s32.totalorder %s75, 1
      %s1300 = scalar_select %p1299, %s75, 1
      %s1301 = smul.addr %s1300, 4
      %s1302 = smul.addr %s1301, 4
      %s1303 = scalar_lea.vmem %s19, %s1302
      %p1304 = scmp.lt.s32.totalorder %s75, 1
      %s1305 = scalar_select %p1304, %s75, 1
      %s1306 = scalar_lea.vmem %s21, %s1305
      %p1307 = scmp.lt.s32.totalorder %s75, 1
      %s1308 = scalar_select %p1307, %s75, 1
      %s1309 = smul.addr %s1308, 4
      %s1310 = smul.addr %s1309, 4
      %s1311 = scalar_lea.vmem %s23, %s1310
      %p1312 = scmp.lt.s32.totalorder %s75, 1
      %s1313 = scalar_select %p1312, %s75, 1
      %s1314 = scalar_lea.vmem %s25, %s1313
      %p1315 = scmp.lt.s32.totalorder %s75, 1
      %s1316 = scalar_select %p1315, %s75, 1
      %s1317 = smul.addr %s1316, 4
      %s1318 = smul.addr %s1317, 4
      %s1319 = scalar_lea.vmem %s27, %s1318
      %p1320 = scmp.lt.s32.totalorder %s75, 1
      %s1321 = scalar_select %p1320, %s75, 1
      %s1322 = scalar_lea.vmem %s29, %s1321
      %p1323 = scmp.lt.s32.totalorder %s75, 1
      %s1324 = scalar_select %p1323, %s75, 1
      %s1325 = smul.addr %s1324, 4
      %s1326 = smul.addr %s1325, 4
      %s1327 = scalar_lea.vmem %s31, %s1326
      %p1328 = scmp.lt.s32.totalorder %s75, 1
      %s1329 = scalar_select %p1328, %s75, 1
      %s1330 = scalar_lea.vmem %s33, %s1329
      %p1331 = scmp.lt.s32.totalorder %s75, 1
      %s1332 = scalar_select %p1331, %s75, 1
      %s1333 = smul.addr %s1332, 4
      %s1334 = smul.addr %s1333, 4
      %s1335 = scalar_lea.vmem %s35, %s1334
      %p1336 = scmp.lt.s32.totalorder %s75, 1
      %s1337 = scalar_select %p1336, %s75, 1
      %s1338 = scalar_lea.vmem %s37, %s1337
      %p1339 = scmp.lt.s32.totalorder %s75, 1
      %s1340 = scalar_select %p1339, %s75, 1
      %s1341 = smul.addr %s1340, 4
      %s1342 = smul.addr %s1341, 4
      %s1343 = scalar_lea.vmem %s39, %s1342
      %p1344 = scmp.lt.s32.totalorder %s75, 1
      %s1345 = scalar_select %p1344, %s75, 1
      %s1346 = scalar_lea.vmem %s41, %s1345
      %p1347 = scmp.lt.s32.totalorder %s75, 1
      %s1348 = scalar_select %p1347, %s75, 1
      %s1349 = smul.addr %s1348, 8
      %s1350 = smul.addr %s1349, 4
      %s1351 = scalar_lea.vmem %s43, %s1350
      %p1352 = scmp.lt.s32.totalorder %s75, 1
      %s1353 = scalar_select %p1352, %s75, 1
      %s1354 = scalar_lea.vmem %s45, %s1353
      %p1355 = scmp.lt.s32.totalorder %s75, 1
      %s1356 = scalar_select %p1355, %s75, 1
      %s1357 = scalar_lea.vmem %s47, %s1356
      %p1358 = scmp.lt.s32.totalorder %s75, 1
      %s1359 = scalar_select %p1358, %s75, 1
      %s1360 = scalar_lea.vmem %s49, %s1359
      %p1361 = scmp.lt.s32.totalorder %s75, 1
      %s1362 = scalar_select %p1361, %s75, 1
      %s1363 = scalar_lea.vmem %s51, %s1362
      %p1364 = scmp.lt.s32.totalorder %s75, 1
      %s1365 = scalar_select %p1364, %s75, 1
      %s1366 = scalar_lea.vmem %s53, %s1365
      %p1367 = scmp.lt.s32.totalorder %s75, 1
      %s1368 = scalar_select %p1367, %s75, 1
      %s1369 = scalar_lea.vmem %s55, %s1368
      %p1370 = scmp.lt.s32.totalorder %s75, 1
      %s1371 = scalar_select %p1370, %s75, 1
      %s1372 = scalar_lea.vmem %s57, %s1371
      %p1373 = scmp.lt.s32.totalorder %s74, 1
      %s1374 = scalar_select %p1373, %s74, 1
      %s1375 = smul.addr %s1374, 8
      %s1376 = scalar_lea.vmem %s59, %s1375
      %p1378 = scmp.eq.s32.totalorder %s75, 0
      // Predicated region
      $region137: #{transformer_layer_sequence.1} parent=135 // pred_check
        %p1379 = pneg %p1378
      $region138: #{transformer_layer_sequence.1} parent=135 // pred_check_branch
        %1381 = sbr.rel (%p1379) target = $region140
      $region139: #{transformer_layer_sequence.1} parent=135 // pred_region
        %v1382 = vld [vmem:[%s1263] sm:$0xff]
        %vm1383 = vcmask 261120
        %1384 = vst.msk [vmem:[#allocation2] sm:$0xff] %vm1383, %v1382
      $region140: #{transformer_layer_sequence.1} parent=135 // pred_fallthru
        _
      %v1385 = vld [vmem:[%s1287] sm:$0xf]
      %v1386 = vld [vmem:[%s1287 + $0x4] sm:$0xf]
      %v1387 = vld [vmem:[%s1287 + $0x8] sm:$0xf]
      %v1388 = vld [vmem:[%s1287 + $0xc] sm:$0xf]
      %v1389 = vld [vmem:[%s1290] sm:$0x1]
      %v1390 = vld [vmem:[%s1295] sm:$0xf]
      %v1391 = vld [vmem:[%s1295 + $0x4] sm:$0xf]
      %v1392 = vld [vmem:[%s1295 + $0x8] sm:$0xf]
      %v1393 = vld [vmem:[%s1295 + $0xc] sm:$0xf]
      %v1394 = vld [vmem:[%s1298] sm:$0x1]
      %v1395 = vld [vmem:[%s1303] sm:$0xf]
      %v1396 = vld [vmem:[%s1303 + $0x4] sm:$0xf]
      %v1397 = vld [vmem:[%s1303 + $0x8] sm:$0xf]
      %v1398 = vld [vmem:[%s1303 + $0xc] sm:$0xf]
      %v1399 = vld [vmem:[%s1306] sm:$0x1]
      %v1400 = vld [vmem:[%s1311] sm:$0xf]
      %v1401 = vld [vmem:[%s1311 + $0x4] sm:$0xf]
      %v1402 = vld [vmem:[%s1311 + $0x8] sm:$0xf]
      %v1403 = vld [vmem:[%s1311 + $0xc] sm:$0xf]
      %v1404 = vld [vmem:[%s1314] sm:$0x1]
      %v1405 = vld [vmem:[%s1319] sm:$0xf]
      %v1406 = vld [vmem:[%s1319 + $0x4] sm:$0xf]
      %v1407 = vld [vmem:[%s1319 + $0x8] sm:$0xf]
      %v1408 = vld [vmem:[%s1319 + $0xc] sm:$0xf]
      %v1409 = vld [vmem:[%s1322] sm:$0x1]
      %v1410 = vld [vmem:[%s1327] sm:$0xf]
      %v1411 = vld [vmem:[%s1327 + $0x4] sm:$0xf]
      %v1412 = vld [vmem:[%s1327 + $0x8] sm:$0xf]
      %v1413 = vld [vmem:[%s1327 + $0xc] sm:$0xf]
      %v1414 = vld [vmem:[%s1330] sm:$0x1]
      %v1415 = vld [vmem:[%s1335] sm:$0xf]
      %v1416 = vld [vmem:[%s1335 + $0x4] sm:$0xf]
      %v1417 = vld [vmem:[%s1335 + $0x8] sm:$0xf]
      %v1418 = vld [vmem:[%s1335 + $0xc] sm:$0xf]
      %v1419 = vld [vmem:[%s1338] sm:$0x1]
      %v1420 = vld [vmem:[%s1343] sm:$0xf]
      %v1421 = vld [vmem:[%s1343 + $0x4] sm:$0xf]
      %v1422 = vld [vmem:[%s1343 + $0x8] sm:$0xf]
      %v1423 = vld [vmem:[%s1343 + $0xc] sm:$0xf]
      %v1424 = vld [vmem:[%s1346] sm:$0x1]
      %v1425 = vld [vmem:[%s1351] sm:$0xf]
      %v1426 = vld [vmem:[%s1351 + $0x4] sm:$0xf]
      %v1427 = vld [vmem:[%s1351 + $0x8] sm:$0xf]
      %v1428 = vld [vmem:[%s1351 + $0xc] sm:$0xf]
      %v1429 = vld [vmem:[%s1351 + $0x10] sm:$0xf]
      %v1430 = vld [vmem:[%s1351 + $0x14] sm:$0xf]
      %v1431 = vld [vmem:[%s1351 + $0x18] sm:$0xf]
      %v1432 = vld [vmem:[%s1351 + $0x1c] sm:$0xf]
      %v1433 = vld [vmem:[%s1354] sm:$0x1]
      %v1434 = vld [vmem:[%s1357] sm:$0x1]
      %v1435 = vld [vmem:[%s1360] sm:$0x1]
      %v1436 = vld [vmem:[%s1363] sm:$0x1]
      %v1437 = vld [vmem:[%s1366] sm:$0x1]
      %v1438 = vld [vmem:[%s1369] sm:$0x1]
      %v1439 = vld [vmem:[%s1372] sm:$0x1]
      %v1440 = vld [vmem:[#allocation2] sm:$0xff]
      %v1441 = vld [vmem:[%s1268] sm:$0xff]
      %v1442 = vld [vmem:[%s1268 + $0x8] sm:$0xff]
      %v1443 = vld [vmem:[%s1273] sm:$0xff]
      %v1444 = vld [vmem:[%s1273 + $0x8] sm:$0xff]
      %v1445 = vld [vmem:[%s1277] sm:$0xff]
      %v1446 = vld [vmem:[%s1282] sm:$0xff]
      %v1447 = vld [vmem:[%s1282 + $0x8] sm:$0xff]
      %v1448 = vadd.f32 %v1440, %v1445
      %v1449 = vpack.c.bf16 %v1448, %v1448
      %v1451 = vlaneseq
      %v1452 = vshrl.u32 %v1451, 7
      %v1453 = vsub.s32 0, %v1452
      %v1454 = vrot.slane %v1389, %v1453
      %v1460 = vunpack.c.l.b16 %v1385
      %v1461 = vunpack.c.l.b16 %v1386
      %v1462 = vunpack.c.l.b16 %v1387
      %v1463 = vunpack.c.l.b16 %v1388
      %v1464 = vpack.c.b16 %v1461, %v1460
      %v1465 = vpack.c.b16 %v1463, %v1462
      %vm1468 = vcmask 261120
      %v1470 = vsel %vm1468, %v1449, 0
      %1472 = vmatprep.subr.bf16.mxu0 0
      %1473 = vmatpush1.bf16.msra.mxu0 %v1464
      %1474 = vmatprep.subr.bf16.mxu0 0
      %1475 = vmatpush1.bf16.msra.mxu0 %v1465
      %1476 = vmatprep.subr.bf16.mxu0 0
      %1477 = vmatpush1.bf16.msra.mxu0 0
      %1478 = vmatprep.subr.bf16.mxu0 0
      %1479 = vmatpush1.bf16.msra.mxu0 0
      %1480 = vmatprep.subr.bf16.mxu0 0
      %1481 = vmatpush1.bf16.msra.mxu0 0
      %1482 = vmatprep.subr.bf16.mxu0 0
      %1483 = vmatpush1.bf16.msra.mxu0 0
      %1484 = vmatprep.subr.bf16.mxu0 0
      %1485 = vmatpush1.bf16.msra.mxu0 0
      %1486 = vmatprep.subr.bf16.mxu0 0
      %1487 = vmatpush1.bf16.msra.mxu0 0
      %1488 = vmatprep.subr.bf16.mxu0 0
      %1489 = vmatpush1.bf16.msra.mxu0 0
      %1490 = vmatprep.subr.bf16.mxu0 0
      %1491 = vmatpush1.bf16.msra.mxu0 0
      %1492 = vmatprep.subr.bf16.mxu0 0
      %1493 = vmatpush1.bf16.msra.mxu0 0
      %1494 = vmatprep.subr.bf16.mxu0 0
      %1495 = vmatpush1.bf16.msra.mxu0 0
      %1496 = vmatprep.subr.bf16.mxu0 0
      %1497 = vmatpush1.bf16.msra.mxu0 0
      %1498 = vmatprep.subr.bf16.mxu0 0
      %1499 = vmatpush1.bf16.msra.mxu0 0
      %1500 = vmatprep.subr.bf16.mxu0 0
      %1501 = vmatpush1.bf16.msra.mxu0 0
      %1502 = vmatprep.subr.bf16.mxu0 0
      %1503 = vmatpush1.bf16.msra.mxu0 0
      %1504 = vmatprep.mubr.bf16.mxu0 0
      %1505 = vmatmul.mubr.bf16.gmra.mrb[0].mxu0 %v1470
      %v1506 = vpop.f32.mrb[0].mxu0
      %v1507 = vadd.f32 %v1454, %v1506
      %v1508 = vpop.f32.mrb[0].mxu0
      %v1509 = vpop.f32.mrb[0].mxu0
      %v1510 = vpop.f32.mrb[0].mxu0
      %1511 = vdwg.mxu0
      %v1512 = vpack.c.bf16 %v1440, %v1440
      %v1514 = vlaneseq
      %v1515 = vshrl.u32 %v1514, 7
      %v1516 = vsub.s32 0, %v1515
      %v1517 = vrot.slane %v1394, %v1516
      %v1523 = vunpack.c.l.b16 %v1390
      %v1524 = vunpack.c.l.b16 %v1391
      %v1525 = vunpack.c.l.b16 %v1392
      %v1526 = vunpack.c.l.b16 %v1393
      %v1527 = vpack.c.b16 %v1524, %v1523
      %v1528 = vpack.c.b16 %v1526, %v1525
      %v1532 = vsel %vm1468, %v1512, 0
      %1534 = vmatprep.subr.bf16.mxu0 0
      %1535 = vmatpush1.bf16.msra.mxu0 %v1527
      %1536 = vmatprep.subr.bf16.mxu0 0
      %1537 = vmatpush1.bf16.msra.mxu0 %v1528
      %1538 = vmatprep.subr.bf16.mxu0 0
      %1539 = vmatpush1.bf16.msra.mxu0 0
      %1540 = vmatprep.subr.bf16.mxu0 0
      %1541 = vmatpush1.bf16.msra.mxu0 0
      %1542 = vmatprep.subr.bf16.mxu0 0
      %1543 = vmatpush1.bf16.msra.mxu0 0
      %1544 = vmatprep.subr.bf16.mxu0 0
      %1545 = vmatpush1.bf16.msra.mxu0 0
      %1546 = vmatprep.subr.bf16.mxu0 0
      %1547 = vmatpush1.bf16.msra.mxu0 0
      %1548 = vmatprep.subr.bf16.mxu0 0
      %1549 = vmatpush1.bf16.msra.mxu0 0
      %1550 = vmatprep.subr.bf16.mxu0 0
      %1551 = vmatpush1.bf16.msra.mxu0 0
      %1552 = vmatprep.subr.bf16.mxu0 0
      %1553 = vmatpush1.bf16.msra.mxu0 0
      %1554 = vmatprep.subr.bf16.mxu0 0
      %1555 = vmatpush1.bf16.msra.mxu0 0
      %1556 = vmatprep.subr.bf16.mxu0 0
      %1557 = vmatpush1.bf16.msra.mxu0 0
      %1558 = vmatprep.subr.bf16.mxu0 0
      %1559 = vmatpush1.bf16.msra.mxu0 0
      %1560 = vmatprep.subr.bf16.mxu0 0
      %1561 = vmatpush1.bf16.msra.mxu0 0
      %1562 = vmatprep.subr.bf16.mxu0 0
      %1563 = vmatpush1.bf16.msra.mxu0 0
      %1564 = vmatprep.subr.bf16.mxu0 0
      %1565 = vmatpush1.bf16.msra.mxu0 0
      %1566 = vmatprep.mubr.bf16.mxu0 0
      %1567 = vmatmul.mubr.bf16.gmra.mrb[0].mxu0 %v1532
      %v1568 = vpop.f32.mrb[0].mxu0
      %v1569 = vadd.f32 %v1517, %v1568
      %v1570 = vpop.f32.mrb[0].mxu0
      %v1571 = vpop.f32.mrb[0].mxu0
      %v1572 = vpop.f32.mrb[0].mxu0
      %1573 = vdwg.mxu0
      %1575 = vrot.lane.b32.xlu0 %v1507, 120
      %v1576 = vpop.permute.xlu0 %1575
      %1578 = vrot.lane.b32.xlu0 %v1507, 112
      %v1579 = vpop.permute.xlu0 %1578
      %1581 = vrot.lane.b32.xlu0 %v1507, 104
      %v1582 = vpop.permute.xlu0 %1581
      %1584 = vrot.lane.b32.xlu0 %v1507, 96
      %v1585 = vpop.permute.xlu0 %1584
      %1587 = vrot.lane.b32.xlu0 %v1507, 88
      %v1588 = vpop.permute.xlu0 %1587
      %1590 = vrot.lane.b32.xlu0 %v1507, 80
      %v1591 = vpop.permute.xlu0 %1590
      %1593 = vrot.lane.b32.xlu0 %v1507, 72
      %v1594 = vpop.permute.xlu0 %1593
      %1597 = vrot.lane.b32.xlu0 %v1569, 120
      %v1598 = vpop.permute.xlu0 %1597
      %1600 = vrot.lane.b32.xlu0 %v1569, 112
      %v1601 = vpop.permute.xlu0 %1600
      %1603 = vrot.lane.b32.xlu0 %v1569, 104
      %v1604 = vpop.permute.xlu0 %1603
      %v1606 = vpack.c.bf16 %v1507, %v1507
      %v1607 = vpack.c.bf16 %v1576, %v1576
      %v1608 = vpack.c.bf16 %v1579, %v1579
      %v1609 = vpack.c.bf16 %v1582, %v1582
      %v1610 = vpack.c.bf16 %v1585, %v1585
      %v1611 = vpack.c.bf16 %v1588, %v1588
      %v1612 = vpack.c.bf16 %v1591, %v1591
      %v1613 = vpack.c.bf16 %v1594, %v1594
      %vm1614 = vcmask 64512
      %v1616 = vsel %vm1614, %v1606, 0
      %v1619 = vsel %vm1614, %v1610, 0
      %1621 = vmatprep.subr.bf16.mxu0 0
      %1622 = vmatpush1.bf16.xpose.msra.mxu0 %v1619
      %1623 = vmatprep.subr.bf16.mxu0 0
      %1624 = vmatpush1.bf16.xpose.msra.mxu0 0
      %1625 = vmatprep.subr.bf16.mxu0 0
      %1626 = vmatpush1.bf16.xpose.msra.mxu0 0
      %1627 = vmatprep.subr.bf16.mxu0 0
      %1628 = vmatpush1.bf16.xpose.msra.mxu0 0
      %1629 = vmatprep.subr.bf16.mxu0 0
      %1630 = vmatpush1.bf16.xpose.msra.mxu0 0
      %1631 = vmatprep.subr.bf16.mxu0 0
      %1632 = vmatpush1.bf16.xpose.msra.mxu0 0
      %1633 = vmatprep.subr.bf16.mxu0 0
      %1634 = vmatpush1.bf16.xpose.msra.mxu0 0
      %1635 = vmatprep.subr.bf16.mxu0 0
      %1636 = vmatpush1.bf16.xpose.msra.mxu0 0
      %1637 = vmatprep.subr.bf16.mxu0 0
      %1638 = vmatpush1.bf16.xpose.msra.mxu0 0
      %1639 = vmatprep.subr.bf16.mxu0 0
      %1640 = vmatpush1.bf16.xpose.msra.mxu0 0
      %1641 = vmatprep.subr.bf16.mxu0 0
      %1642 = vmatpush1.bf16.xpose.msra.mxu0 0
      %1643 = vmatprep.subr.bf16.mxu0 0
      %1644 = vmatpush1.bf16.xpose.msra.mxu0 0
      %1645 = vmatprep.subr.bf16.mxu0 0
      %1646 = vmatpush1.bf16.xpose.msra.mxu0 0
      %1647 = vmatprep.subr.bf16.mxu0 0
      %1648 = vmatpush1.bf16.xpose.msra.mxu0 0
      %1649 = vmatprep.subr.bf16.mxu0 0
      %1650 = vmatpush1.bf16.xpose.msra.mxu0 0
      %1651 = vmatprep.subr.bf16.mxu0 0
      %1652 = vmatpush1.bf16.xpose.msra.mxu0 0
      %1653 = vmatprep.mubr.bf16.mxu0 0
      %1654 = vmatmul.mubr.bf16.gmra.mrb[0].mxu0 %v1616
      %v1655 = vpop.f32.mrb[0].mxu0
      %v1656 = vadd.f32 0.0, %v1655
      %v1657 = vpop.f32.mrb[0].mxu0
      %v1658 = vpop.f32.mrb[0].mxu0
      %v1659 = vpop.f32.mrb[0].mxu0
      %1660 = vdwg.mxu0
      %v1662 = vsel %vm1614, %v1607, 0
      %v1665 = vsel %vm1614, %v1611, 0
      %1667 = vmatprep.subr.bf16.mxu0 0
      %1668 = vmatpush1.bf16.xpose.msra.mxu0 %v1665
      %1669 = vmatprep.subr.bf16.mxu0 0
      %1670 = vmatpush1.bf16.xpose.msra.mxu0 0
      %1671 = vmatprep.subr.bf16.mxu0 0
      %1672 = vmatpush1.bf16.xpose.msra.mxu0 0
      %1673 = vmatprep.subr.bf16.mxu0 0
      %1674 = vmatpush1.bf16.xpose.msra.mxu0 0
      %1675 = vmatprep.subr.bf16.mxu0 0
      %1676 = vmatpush1.bf16.xpose.msra.mxu0 0
      %1677 = vmatprep.subr.bf16.mxu0 0
      %1678 = vmatpush1.bf16.xpose.msra.mxu0 0
      %1679 = vmatprep.subr.bf16.mxu0 0
      %1680 = vmatpush1.bf16.xpose.msra.mxu0 0
      %1681 = vmatprep.subr.bf16.mxu0 0
      %1682 = vmatpush1.bf16.xpose.msra.mxu0 0
      %1683 = vmatprep.subr.bf16.mxu0 0
      %1684 = vmatpush1.bf16.xpose.msra.mxu0 0
      %1685 = vmatprep.subr.bf16.mxu0 0
      %1686 = vmatpush1.bf16.xpose.msra.mxu0 0
      %1687 = vmatprep.subr.bf16.mxu0 0
      %1688 = vmatpush1.bf16.xpose.msra.mxu0 0
      %1689 = vmatprep.subr.bf16.mxu0 0
      %1690 = vmatpush1.bf16.xpose.msra.mxu0 0
      %1691 = vmatprep.subr.bf16.mxu0 0
      %1692 = vmatpush1.bf16.xpose.msra.mxu0 0
      %1693 = vmatprep.subr.bf16.mxu0 0
      %1694 = vmatpush1.bf16.xpose.msra.mxu0 0
      %1695 = vmatprep.subr.bf16.mxu0 0
      %1696 = vmatpush1.bf16.xpose.msra.mxu0 0
      %1697 = vmatprep.subr.bf16.mxu0 0
      %1698 = vmatpush1.bf16.xpose.msra.mxu0 0
      %1699 = vmatprep.mubr.bf16.mxu0 0
      %1700 = vmatmul.mubr.bf16.gmra.mrb[0].mxu0 %v1662
      %v1701 = vpop.f32.mrb[0].mxu0
      %v1702 = vadd.f32 0.0, %v1701
      %v1703 = vpop.f32.mrb[0].mxu0
      %v1704 = vpop.f32.mrb[0].mxu0
      %v1705 = vpop.f32.mrb[0].mxu0
      %1706 = vdwg.mxu0
      %v1708 = vsel %vm1614, %v1608, 0
      %v1711 = vsel %vm1614, %v1612, 0
      %1713 = vmatprep.subr.bf16.mxu0 0
      %1714 = vmatpush1.bf16.xpose.msra.mxu0 %v1711
      %1715 = vmatprep.subr.bf16.mxu0 0
      %1716 = vmatpush1.bf16.xpose.msra.mxu0 0
      %1717 = vmatprep.subr.bf16.mxu0 0
      %1718 = vmatpush1.bf16.xpose.msra.mxu0 0
      %1719 = vmatprep.subr.bf16.mxu0 0
      %1720 = vmatpush1.bf16.xpose.msra.mxu0 0
      %1721 = vmatprep.subr.bf16.mxu0 0
      %1722 = vmatpush1.bf16.xpose.msra.mxu0 0
      %1723 = vmatprep.subr.bf16.mxu0 0
      %1724 = vmatpush1.bf16.xpose.msra.mxu0 0
      %1725 = vmatprep.subr.bf16.mxu0 0
      %1726 = vmatpush1.bf16.xpose.msra.mxu0 0
      %1727 = vmatprep.subr.bf16.mxu0 0
      %1728 = vmatpush1.bf16.xpose.msra.mxu0 0
      %1729 = vmatprep.subr.bf16.mxu0 0
      %1730 = vmatpush1.bf16.xpose.msra.mxu0 0
      %1731 = vmatprep.subr.bf16.mxu0 0
      %1732 = vmatpush1.bf16.xpose.msra.mxu0 0
      %1733 = vmatprep.subr.bf16.mxu0 0
      %1734 = vmatpush1.bf16.xpose.msra.mxu0 0
      %1735 = vmatprep.subr.bf16.mxu0 0
      %1736 = vmatpush1.bf16.xpose.msra.mxu0 0
      %1737 = vmatprep.subr.bf16.mxu0 0
      %1738 = vmatpush1.bf16.xpose.msra.mxu0 0
      %1739 = vmatprep.subr.bf16.mxu0 0
      %1740 = vmatpush1.bf16.xpose.msra.mxu0 0
      %1741 = vmatprep.subr.bf16.mxu0 0
      %1742 = vmatpush1.bf16.xpose.msra.mxu0 0
      %1743 = vmatprep.subr.bf16.mxu0 0
      %1744 = vmatpush1.bf16.xpose.msra.mxu0 0
      %1745 = vmatprep.mubr.bf16.mxu0 0
      %1746 = vmatmul.mubr.bf16.gmra.mrb[0].mxu0 %v1708
      %v1747 = vpop.f32.mrb[0].mxu0
      %v1748 = vadd.f32 0.0, %v1747
      %v1749 = vpop.f32.mrb[0].mxu0
      %v1750 = vpop.f32.mrb[0].mxu0
      %v1751 = vpop.f32.mrb[0].mxu0
      %1752 = vdwg.mxu0
      %v1754 = vsel %vm1614, %v1609, 0
      %v1757 = vsel %vm1614, %v1613, 0
      %1759 = vmatprep.subr.bf16.mxu0 0
      %1760 = vmatpush1.bf16.xpose.msra.mxu0 %v1757
      %1761 = vmatprep.subr.bf16.mxu0 0
      %1762 = vmatpush1.bf16.xpose.msra.mxu0 0
      %1763 = vmatprep.subr.bf16.mxu0 0
      %1764 = vmatpush1.bf16.xpose.msra.mxu0 0
      %1765 = vmatprep.subr.bf16.mxu0 0
      %1766 = vmatpush1.bf16.xpose.msra.mxu0 0
      %1767 = vmatprep.subr.bf16.mxu0 0
      %1768 = vmatpush1.bf16.xpose.msra.mxu0 0
      %1769 = vmatprep.subr.bf16.mxu0 0
      %1770 = vmatpush1.bf16.xpose.msra.mxu0 0
      %1771 = vmatprep.subr.bf16.mxu0 0
      %1772 = vmatpush1.bf16.xpose.msra.mxu0 0
      %1773 = vmatprep.subr.bf16.mxu0 0
      %1774 = vmatpush1.bf16.xpose.msra.mxu0 0
      %1775 = vmatprep.subr.bf16.mxu0 0
      %1776 = vmatpush1.bf16.xpose.msra.mxu0 0
      %1777 = vmatprep.subr.bf16.mxu0 0
      %1778 = vmatpush1.bf16.xpose.msra.mxu0 0
      %1779 = vmatprep.subr.bf16.mxu0 0
      %1780 = vmatpush1.bf16.xpose.msra.mxu0 0
      %1781 = vmatprep.subr.bf16.mxu0 0
      %1782 = vmatpush1.bf16.xpose.msra.mxu0 0
      %1783 = vmatprep.subr.bf16.mxu0 0
      %1784 = vmatpush1.bf16.xpose.msra.mxu0 0
      %1785 = vmatprep.subr.bf16.mxu0 0
      %1786 = vmatpush1.bf16.xpose.msra.mxu0 0
      %1787 = vmatprep.subr.bf16.mxu0 0
      %1788 = vmatpush1.bf16.xpose.msra.mxu0 0
      %1789 = vmatprep.subr.bf16.mxu0 0
      %1790 = vmatpush1.bf16.xpose.msra.mxu0 0
      %1791 = vmatprep.mubr.bf16.mxu0 0
      %1792 = vmatmul.mubr.bf16.gmra.mrb[0].mxu0 %v1754
      %v1793 = vpop.f32.mrb[0].mxu0
      %v1794 = vadd.f32 0.0, %v1793
      %v1795 = vpop.f32.mrb[0].mxu0
      %v1796 = vpop.f32.mrb[0].mxu0
      %v1797 = vpop.f32.mrb[0].mxu0
      %1798 = vdwg.mxu0
      %v1799 = vsel %vm1614, %v1656, -inf
      %1800 = vmax.xlane.f32.xlu0 %v1799
      %v1801 = vpop.xlane.xlu0 %1800
      %v1802 = vsel %vm1614, %v1702, -inf
      %1803 = vmax.xlane.f32.xlu0 %v1802
      %v1804 = vpop.xlane.xlu0 %1803
      %v1805 = vsel %vm1614, %v1748, -inf
      %1806 = vmax.xlane.f32.xlu0 %v1805
      %v1807 = vpop.xlane.xlu0 %1806
      %v1808 = vsel %vm1614, %v1794, -inf
      %1809 = vmax.xlane.f32.xlu0 %v1808
      %v1810 = vpop.xlane.xlu0 %1809
      %v1811 = vsub.f32 %v1656, %v1801
      %v1812 = vsub.f32 %v1702, %v1804
      %v1813 = vsub.f32 %v1748, %v1807
      %v1814 = vsub.f32 %v1794, %v1810
      %v1815 = vmul.f32 %v1811, 1.442695
      %v1816 = vpow.pop %v1815
      %v1817 = vmul.f32 %v1812, 1.442695
      %v1818 = vpow.pop %v1817
      %v1819 = vmul.f32 %v1813, 1.442695
      %v1820 = vpow.pop %v1819
      %v1821 = vmul.f32 %v1814, 1.442695
      %v1822 = vpow.pop %v1821
      %v1823 = vsel %vm1614, %v1816, 0.0
      %1824 = vadd.xlane.f32.xlu0 %v1823
      %v1825 = vpop.xlane.xlu0 %1824
      %v1826 = vsel %vm1614, %v1818, 0.0
      %1827 = vadd.xlane.f32.xlu0 %v1826
      %v1828 = vpop.xlane.xlu0 %1827
      %v1829 = vsel %vm1614, %v1820, 0.0
      %1830 = vadd.xlane.f32.xlu0 %v1829
      %v1831 = vpop.xlane.xlu0 %1830
      %v1832 = vsel %vm1614, %v1822, 0.0
      %1833 = vadd.xlane.f32.xlu0 %v1832
      %v1834 = vpop.xlane.xlu0 %1833
      %v1835 = vrcp.pop %v1825
      %v1836 = vrcp.pop %v1828
      %v1837 = vrcp.pop %v1831
      %v1838 = vrcp.pop %v1834
      %v1839 = vmul.f32 %v1816, %v1835
      %v1840 = vmul.f32 %v1818, %v1836
      %v1841 = vmul.f32 %v1820, %v1837
      %v1842 = vmul.f32 %v1822, %v1838
      %v1843 = vpack.c.bf16 %v1839, %v1839
      %v1844 = vpack.c.bf16 %v1840, %v1840
      %v1845 = vpack.c.bf16 %v1841, %v1841
      %v1846 = vpack.c.bf16 %v1842, %v1842
      %v1847 = vpack.c.bf16 %v1569, %v1569
      %v1848 = vpack.c.bf16 %v1598, %v1598
      %v1849 = vpack.c.bf16 %v1601, %v1601
      %v1850 = vpack.c.bf16 %v1604, %v1604
      %v1852 = vsel %vm1614, %v1843, 0
      %vm1854 = vcmask 1043456
      %v1856 = vsel %vm1854, %v1847, 0
      %1858 = vmatprep.subr.bf16.mxu0 0
      %1859 = vmatpush1.bf16.msra.mxu0 %v1856
      %1860 = vmatprep.subr.bf16.mxu0 0
      %1861 = vmatpush1.bf16.msra.mxu0 0
      %1862 = vmatprep.subr.bf16.mxu0 0
      %1863 = vmatpush1.bf16.msra.mxu0 0
      %1864 = vmatprep.subr.bf16.mxu0 0
      %1865 = vmatpush1.bf16.msra.mxu0 0
      %1866 = vmatprep.subr.bf16.mxu0 0
      %1867 = vmatpush1.bf16.msra.mxu0 0
      %1868 = vmatprep.subr.bf16.mxu0 0
      %1869 = vmatpush1.bf16.msra.mxu0 0
      %1870 = vmatprep.subr.bf16.mxu0 0
      %1871 = vmatpush1.bf16.msra.mxu0 0
      %1872 = vmatprep.subr.bf16.mxu0 0
      %1873 = vmatpush1.bf16.msra.mxu0 0
      %1874 = vmatprep.subr.bf16.mxu0 0
      %1875 = vmatpush1.bf16.msra.mxu0 0
      %1876 = vmatprep.subr.bf16.mxu0 0
      %1877 = vmatpush1.bf16.msra.mxu0 0
      %1878 = vmatprep.subr.bf16.mxu0 0
      %1879 = vmatpush1.bf16.msra.mxu0 0
      %1880 = vmatprep.subr.bf16.mxu0 0
      %1881 = vmatpush1.bf16.msra.mxu0 0
      %1882 = vmatprep.subr.bf16.mxu0 0
      %1883 = vmatpush1.bf16.msra.mxu0 0
      %1884 = vmatprep.subr.bf16.mxu0 0
      %1885 = vmatpush1.bf16.msra.mxu0 0
      %1886 = vmatprep.subr.bf16.mxu0 0
      %1887 = vmatpush1.bf16.msra.mxu0 0
      %1888 = vmatprep.subr.bf16.mxu0 0
      %1889 = vmatpush1.bf16.msra.mxu0 0
      %1890 = vmatprep.mubr.bf16.mxu0 0
      %1891 = vmatmul.mubr.bf16.gmra.mrb[0].mxu0 %v1852
      %v1892 = vpop.f32.mrb[0].mxu0
      %v1893 = vadd.f32 0.0, %v1892
      %v1894 = vpop.f32.mrb[0].mxu0
      %v1895 = vpop.f32.mrb[0].mxu0
      %v1896 = vpop.f32.mrb[0].mxu0
      %1897 = vdwg.mxu0
      %v1899 = vsel %vm1614, %v1844, 0
      %v1902 = vsel %vm1854, %v1848, 0
      %1904 = vmatprep.subr.bf16.mxu0 0
      %1905 = vmatpush1.bf16.msra.mxu0 %v1902
      %1906 = vmatprep.subr.bf16.mxu0 0
      %1907 = vmatpush1.bf16.msra.mxu0 0
      %1908 = vmatprep.subr.bf16.mxu0 0
      %1909 = vmatpush1.bf16.msra.mxu0 0
      %1910 = vmatprep.subr.bf16.mxu0 0
      %1911 = vmatpush1.bf16.msra.mxu0 0
      %1912 = vmatprep.subr.bf16.mxu0 0
      %1913 = vmatpush1.bf16.msra.mxu0 0
      %1914 = vmatprep.subr.bf16.mxu0 0
      %1915 = vmatpush1.bf16.msra.mxu0 0
      %1916 = vmatprep.subr.bf16.mxu0 0
      %1917 = vmatpush1.bf16.msra.mxu0 0
      %1918 = vmatprep.subr.bf16.mxu0 0
      %1919 = vmatpush1.bf16.msra.mxu0 0
      %1920 = vmatprep.subr.bf16.mxu0 0
      %1921 = vmatpush1.bf16.msra.mxu0 0
      %1922 = vmatprep.subr.bf16.mxu0 0
      %1923 = vmatpush1.bf16.msra.mxu0 0
      %1924 = vmatprep.subr.bf16.mxu0 0
      %1925 = vmatpush1.bf16.msra.mxu0 0
      %1926 = vmatprep.subr.bf16.mxu0 0
      %1927 = vmatpush1.bf16.msra.mxu0 0
      %1928 = vmatprep.subr.bf16.mxu0 0
      %1929 = vmatpush1.bf16.msra.mxu0 0
      %1930 = vmatprep.subr.bf16.mxu0 0
      %1931 = vmatpush1.bf16.msra.mxu0 0
      %1932 = vmatprep.subr.bf16.mxu0 0
      %1933 = vmatpush1.bf16.msra.mxu0 0
      %1934 = vmatprep.subr.bf16.mxu0 0
      %1935 = vmatpush1.bf16.msra.mxu0 0
      %1936 = vmatprep.mubr.bf16.mxu0 0
      %1937 = vmatmul.mubr.bf16.gmra.mrb[0].mxu0 %v1899
      %v1938 = vpop.f32.mrb[0].mxu0
      %v1939 = vadd.f32 0.0, %v1938
      %v1940 = vpop.f32.mrb[0].mxu0
      %v1941 = vpop.f32.mrb[0].mxu0
      %v1942 = vpop.f32.mrb[0].mxu0
      %1943 = vdwg.mxu0
      %v1945 = vsel %vm1614, %v1845, 0
      %v1948 = vsel %vm1854, %v1849, 0
      %1950 = vmatprep.subr.bf16.mxu0 0
      %1951 = vmatpush1.bf16.msra.mxu0 %v1948
      %1952 = vmatprep.subr.bf16.mxu0 0
      %1953 = vmatpush1.bf16.msra.mxu0 0
      %1954 = vmatprep.subr.bf16.mxu0 0
      %1955 = vmatpush1.bf16.msra.mxu0 0
      %1956 = vmatprep.subr.bf16.mxu0 0
      %1957 = vmatpush1.bf16.msra.mxu0 0
      %1958 = vmatprep.subr.bf16.mxu0 0
      %1959 = vmatpush1.bf16.msra.mxu0 0
      %1960 = vmatprep.subr.bf16.mxu0 0
      %1961 = vmatpush1.bf16.msra.mxu0 0
      %1962 = vmatprep.subr.bf16.mxu0 0
      %1963 = vmatpush1.bf16.msra.mxu0 0
      %1964 = vmatprep.subr.bf16.mxu0 0
      %1965 = vmatpush1.bf16.msra.mxu0 0
      %1966 = vmatprep.subr.bf16.mxu0 0
      %1967 = vmatpush1.bf16.msra.mxu0 0
      %1968 = vmatprep.subr.bf16.mxu0 0
      %1969 = vmatpush1.bf16.msra.mxu0 0
      %1970 = vmatprep.subr.bf16.mxu0 0
      %1971 = vmatpush1.bf16.msra.mxu0 0
      %1972 = vmatprep.subr.bf16.mxu0 0
      %1973 = vmatpush1.bf16.msra.mxu0 0
      %1974 = vmatprep.subr.bf16.mxu0 0
      %1975 = vmatpush1.bf16.msra.mxu0 0
      %1976 = vmatprep.subr.bf16.mxu0 0
      %1977 = vmatpush1.bf16.msra.mxu0 0
      %1978 = vmatprep.subr.bf16.mxu0 0
      %1979 = vmatpush1.bf16.msra.mxu0 0
      %1980 = vmatprep.subr.bf16.mxu0 0
      %1981 = vmatpush1.bf16.msra.mxu0 0
      %1982 = vmatprep.mubr.bf16.mxu0 0
      %1983 = vmatmul.mubr.bf16.gmra.mrb[0].mxu0 %v1945
      %v1984 = vpop.f32.mrb[0].mxu0
      %v1985 = vadd.f32 0.0, %v1984
      %v1986 = vpop.f32.mrb[0].mxu0
      %v1987 = vpop.f32.mrb[0].mxu0
      %v1988 = vpop.f32.mrb[0].mxu0
      %1989 = vdwg.mxu0
      %v1991 = vsel %vm1614, %v1846, 0
      %v1994 = vsel %vm1854, %v1850, 0
      %1996 = vmatprep.subr.bf16.mxu0 0
      %1997 = vmatpush1.bf16.msra.mxu0 %v1994
      %1998 = vmatprep.subr.bf16.mxu0 0
      %1999 = vmatpush1.bf16.msra.mxu0 0
      %2000 = vmatprep.subr.bf16.mxu0 0
      %2001 = vmatpush1.bf16.msra.mxu0 0
      %2002 = vmatprep.subr.bf16.mxu0 0
      %2003 = vmatpush1.bf16.msra.mxu0 0
      %2004 = vmatprep.subr.bf16.mxu0 0
      %2005 = vmatpush1.bf16.msra.mxu0 0
      %2006 = vmatprep.subr.bf16.mxu0 0
      %2007 = vmatpush1.bf16.msra.mxu0 0
      %2008 = vmatprep.subr.bf16.mxu0 0
      %2009 = vmatpush1.bf16.msra.mxu0 0
      %2010 = vmatprep.subr.bf16.mxu0 0
      %2011 = vmatpush1.bf16.msra.mxu0 0
      %2012 = vmatprep.subr.bf16.mxu0 0
      %2013 = vmatpush1.bf16.msra.mxu0 0
      %2014 = vmatprep.subr.bf16.mxu0 0
      %2015 = vmatpush1.bf16.msra.mxu0 0
      %2016 = vmatprep.subr.bf16.mxu0 0
      %2017 = vmatpush1.bf16.msra.mxu0 0
      %2018 = vmatprep.subr.bf16.mxu0 0
      %2019 = vmatpush1.bf16.msra.mxu0 0
      %2020 = vmatprep.subr.bf16.mxu0 0
      %2021 = vmatpush1.bf16.msra.mxu0 0
      %2022 = vmatprep.subr.bf16.mxu0 0
      %2023 = vmatpush1.bf16.msra.mxu0 0
      %2024 = vmatprep.subr.bf16.mxu0 0
      %2025 = vmatpush1.bf16.msra.mxu0 0
      %2026 = vmatprep.subr.bf16.mxu0 0
      %2027 = vmatpush1.bf16.msra.mxu0 0
      %2028 = vmatprep.mubr.bf16.mxu0 0
      %2029 = vmatmul.mubr.bf16.gmra.mrb[0].mxu0 %v1991
      %v2030 = vpop.f32.mrb[0].mxu0
      %v2031 = vadd.f32 0.0, %v2030
      %v2032 = vpop.f32.mrb[0].mxu0
      %v2033 = vpop.f32.mrb[0].mxu0
      %v2034 = vpop.f32.mrb[0].mxu0
      %2035 = vdwg.mxu0
      %2037 = vrot.lane.b32.xlu0 %v1939, 8
      %v2038 = vpop.permute.xlu0 %2037
      %2041 = vrot.lane.b32.xlu0 %v1985, 16
      %v2042 = vpop.permute.xlu0 %2041
      %2045 = vrot.lane.b32.xlu0 %v2031, 24
      %v2046 = vpop.permute.xlu0 %2045
      %v2048 = vsel %vm1614, %v1893, %v2038
      %vm2049 = vcmask 130048
      %v2050 = vsel %vm2049, %v2048, %v2042
      %vm2051 = vcmask 195584
      %v2052 = vsel %vm2051, %v2050, %v2046
      %v2053 = vpack.c.bf16 %v2052, %v2052
      %v2055 = vlaneseq
      %v2056 = vshrl.u32 %v2055, 7
      %v2057 = vsub.s32 0, %v2056
      %v2058 = vrot.slane %v1399, %v2057
      %v2064 = vunpack.c.l.b16 %v1395
      %v2065 = vunpack.c.l.b16 %v1396
      %v2066 = vunpack.c.l.b16 %v1397
      %v2067 = vunpack.c.l.b16 %v1398
      %v2068 = vpack.c.b16 %v2065, %v2064
      %v2069 = vpack.c.b16 %v2067, %v2066
      %v2073 = vsel %vm1468, %v2053, 0
      %2075 = vmatprep.subr.bf16.mxu0 0
      %2076 = vmatpush1.bf16.msra.mxu0 %v2068
      %2077 = vmatprep.subr.bf16.mxu0 0
      %2078 = vmatpush1.bf16.msra.mxu0 %v2069
      %2079 = vmatprep.subr.bf16.mxu0 0
      %2080 = vmatpush1.bf16.msra.mxu0 0
      %2081 = vmatprep.subr.bf16.mxu0 0
      %2082 = vmatpush1.bf16.msra.mxu0 0
      %2083 = vmatprep.subr.bf16.mxu0 0
      %2084 = vmatpush1.bf16.msra.mxu0 0
      %2085 = vmatprep.subr.bf16.mxu0 0
      %2086 = vmatpush1.bf16.msra.mxu0 0
      %2087 = vmatprep.subr.bf16.mxu0 0
      %2088 = vmatpush1.bf16.msra.mxu0 0
      %2089 = vmatprep.subr.bf16.mxu0 0
      %2090 = vmatpush1.bf16.msra.mxu0 0
      %2091 = vmatprep.subr.bf16.mxu0 0
      %2092 = vmatpush1.bf16.msra.mxu0 0
      %2093 = vmatprep.subr.bf16.mxu0 0
      %2094 = vmatpush1.bf16.msra.mxu0 0
      %2095 = vmatprep.subr.bf16.mxu0 0
      %2096 = vmatpush1.bf16.msra.mxu0 0
      %2097 = vmatprep.subr.bf16.mxu0 0
      %2098 = vmatpush1.bf16.msra.mxu0 0
      %2099 = vmatprep.subr.bf16.mxu0 0
      %2100 = vmatpush1.bf16.msra.mxu0 0
      %2101 = vmatprep.subr.bf16.mxu0 0
      %2102 = vmatpush1.bf16.msra.mxu0 0
      %2103 = vmatprep.subr.bf16.mxu0 0
      %2104 = vmatpush1.bf16.msra.mxu0 0
      %2105 = vmatprep.subr.bf16.mxu0 0
      %2106 = vmatpush1.bf16.msra.mxu0 0
      %2107 = vmatprep.mubr.bf16.mxu0 0
      %2108 = vmatmul.mubr.bf16.gmra.mrb[0].mxu0 %v2073
      %v2109 = vpop.f32.mrb[0].mxu0
      %v2110 = vadd.f32 %v2058, %v2109
      %v2111 = vpop.f32.mrb[0].mxu0
      %v2112 = vpop.f32.mrb[0].mxu0
      %v2113 = vpop.f32.mrb[0].mxu0
      %2114 = vdwg.mxu0
      %v2115 = vadd.f32 %v1440, %v2110
      %v2116 = vsel %vm1468, %v2115, 0.0
      %2117 = vadd.xlane.f32.xlu0 %v2116
      %v2118 = vpop.xlane.xlu0 %2117
      %v2119 = vrcp.pop 32.0
      %v2120 = vmul.f32 %v2118, %v2119
      %v2121 = vsub.f32 %v2115, %v2120
      %v2122 = vmul.f32 %v2121, %v2121
      %v2123 = vsel %vm1468, %v2122, 0.0
      %2124 = vadd.xlane.f32.xlu0 %v2123
      %v2125 = vpop.xlane.xlu0 %2124
      %v2126 = vmul.f32 %v2125, %v2119
      %v2127 = vadd.f32 %v2126, 1e-05
      %v2128 = vrsqrt.pop %v2127
      %v2129 = vmul.f32 %v2121, %v2128
      %v2131 = vlaneseq
      %v2132 = vshrl.u32 %v2131, 7
      %v2133 = vsub.s32 0, %v2132
      %v2134 = vrot.slane %v1434, %v2133
      %v2136 = vmul.f32 %v2129, %v2134
      %v2138 = vlaneseq
      %v2139 = vshrl.u32 %v2138, 7
      %v2140 = vsub.s32 0, %v2139
      %v2141 = vrot.slane %v1435, %v2140
      %v2143 = vadd.f32 %v2136, %v2141
      %v2144 = vadd.f32 %v2143, %v1445
      %v2145 = vpack.c.bf16 %v2144, %v2144
      %v2147 = vlaneseq
      %v2148 = vshrl.u32 %v2147, 7
      %v2149 = vsub.s32 0, %v2148
      %v2150 = vrot.slane %v1404, %v2149
      %v2156 = vunpack.c.l.b16 %v1400
      %v2157 = vunpack.c.l.b16 %v1401
      %v2158 = vunpack.c.l.b16 %v1402
      %v2159 = vunpack.c.l.b16 %v1403
      %v2160 = vpack.c.b16 %v2157, %v2156
      %v2161 = vpack.c.b16 %v2159, %v2158
      %v2165 = vsel %vm1468, %v2145, 0
      %2167 = vmatprep.subr.bf16.mxu0 0
      %2168 = vmatpush1.bf16.msra.mxu0 %v2160
      %2169 = vmatprep.subr.bf16.mxu0 0
      %2170 = vmatpush1.bf16.msra.mxu0 %v2161
      %2171 = vmatprep.subr.bf16.mxu0 0
      %2172 = vmatpush1.bf16.msra.mxu0 0
      %2173 = vmatprep.subr.bf16.mxu0 0
      %2174 = vmatpush1.bf16.msra.mxu0 0
      %2175 = vmatprep.subr.bf16.mxu0 0
      %2176 = vmatpush1.bf16.msra.mxu0 0
      %2177 = vmatprep.subr.bf16.mxu0 0
      %2178 = vmatpush1.bf16.msra.mxu0 0
      %2179 = vmatprep.subr.bf16.mxu0 0
      %2180 = vmatpush1.bf16.msra.mxu0 0
      %2181 = vmatprep.subr.bf16.mxu0 0
      %2182 = vmatpush1.bf16.msra.mxu0 0
      %2183 = vmatprep.subr.bf16.mxu0 0
      %2184 = vmatpush1.bf16.msra.mxu0 0
      %2185 = vmatprep.subr.bf16.mxu0 0
      %2186 = vmatpush1.bf16.msra.mxu0 0
      %2187 = vmatprep.subr.bf16.mxu0 0
      %2188 = vmatpush1.bf16.msra.mxu0 0
      %2189 = vmatprep.subr.bf16.mxu0 0
      %2190 = vmatpush1.bf16.msra.mxu0 0
      %2191 = vmatprep.subr.bf16.mxu0 0
      %2192 = vmatpush1.bf16.msra.mxu0 0
      %2193 = vmatprep.subr.bf16.mxu0 0
      %2194 = vmatpush1.bf16.msra.mxu0 0
      %2195 = vmatprep.subr.bf16.mxu0 0
      %2196 = vmatpush1.bf16.msra.mxu0 0
      %2197 = vmatprep.subr.bf16.mxu0 0
      %2198 = vmatpush1.bf16.msra.mxu0 0
      %2199 = vmatprep.mubr.bf16.mxu0 0
      %2200 = vmatmul.mubr.bf16.gmra.mrb[0].mxu0 %v2165
      %v2201 = vpop.f32.mrb[0].mxu0
      %v2202 = vadd.f32 %v2150, %v2201
      %v2203 = vpop.f32.mrb[0].mxu0
      %v2204 = vpop.f32.mrb[0].mxu0
      %v2205 = vpop.f32.mrb[0].mxu0
      %2206 = vdwg.mxu0
      %2208 = vrot.lane.b32.xlu0 %v2202, 120
      %v2209 = vpop.permute.xlu0 %2208
      %2211 = vrot.lane.b32.xlu0 %v2202, 112
      %v2212 = vpop.permute.xlu0 %2211
      %2214 = vrot.lane.b32.xlu0 %v2202, 104
      %v2215 = vpop.permute.xlu0 %2214
      %v2217 = vadd.f32 %v1441, %v1446
      %v2218 = vadd.f32 %v1442, %v1447
      %v2219 = vpack.c.bf16 %v2218, %v2217
      %v2221 = vlaneseq
      %v2222 = vshrl.u32 %v2221, 7
      %v2223 = vsub.s32 0, %v2222
      %v2224 = vrot.slane %v1409, %v2223
      %v2230 = vunpack.c.l.b16 %v1405
      %v2231 = vunpack.c.l.b16 %v1406
      %v2232 = vunpack.c.l.b16 %v1407
      %v2233 = vunpack.c.l.b16 %v1408
      %v2234 = vpack.c.b16 %v2231, %v2230
      %v2235 = vpack.c.b16 %v2233, %v2232
      %v2239 = vsel %vm1468, %v2219, 0
      %2241 = vmatprep.subr.bf16.mxu0 0
      %2242 = vmatpush1.bf16.msra.mxu0 %v2234
      %2243 = vmatprep.subr.bf16.mxu0 0
      %2244 = vmatpush1.bf16.msra.mxu0 %v2235
      %2245 = vmatprep.subr.bf16.mxu0 0
      %2246 = vmatpush1.bf16.msra.mxu0 0
      %2247 = vmatprep.subr.bf16.mxu0 0
      %2248 = vmatpush1.bf16.msra.mxu0 0
      %2249 = vmatprep.subr.bf16.mxu0 0
      %2250 = vmatpush1.bf16.msra.mxu0 0
      %2251 = vmatprep.subr.bf16.mxu0 0
      %2252 = vmatpush1.bf16.msra.mxu0 0
      %2253 = vmatprep.subr.bf16.mxu0 0
      %2254 = vmatpush1.bf16.msra.mxu0 0
      %2255 = vmatprep.subr.bf16.mxu0 0
      %2256 = vmatpush1.bf16.msra.mxu0 0
      %2257 = vmatprep.subr.bf16.mxu0 0
      %2258 = vmatpush1.bf16.msra.mxu0 0
      %2259 = vmatprep.subr.bf16.mxu0 0
      %2260 = vmatpush1.bf16.msra.mxu0 0
      %2261 = vmatprep.subr.bf16.mxu0 0
      %2262 = vmatpush1.bf16.msra.mxu0 0
      %2263 = vmatprep.subr.bf16.mxu0 0
      %2264 = vmatpush1.bf16.msra.mxu0 0
      %2265 = vmatprep.subr.bf16.mxu0 0
      %2266 = vmatpush1.bf16.msra.mxu0 0
      %2267 = vmatprep.subr.bf16.mxu0 0
      %2268 = vmatpush1.bf16.msra.mxu0 0
      %2269 = vmatprep.subr.bf16.mxu0 0
      %2270 = vmatpush1.bf16.msra.mxu0 0
      %2271 = vmatprep.subr.bf16.mxu0 0
      %2272 = vmatpush1.bf16.msra.mxu0 0
      %2273 = vmatprep.mubr.bf16.mxu0 0
      %2274 = vmatmul.mubr.bf16.gmra.mrb[0].mxu0 %v2239
      %v2275 = vpop.f32.mrb[0].mxu0
      %v2276 = vadd.f32 %v2224, %v2275
      %v2277 = vpop.f32.mrb[0].mxu0
      %v2278 = vpop.f32.mrb[0].mxu0
      %v2279 = vadd.f32 %v2224, %v2278
      %v2280 = vpop.f32.mrb[0].mxu0
      %2281 = vdwg.mxu0
      %2284 = vrot.lane.b32.xlu0 %v2276, 120
      %v2285 = vpop.permute.xlu0 %2284
      %2286 = vrot.lane.b32.xlu0 %v2279, 120
      %v2287 = vpop.permute.xlu0 %2286
      %2290 = vrot.lane.b32.xlu0 %v2276, 112
      %v2291 = vpop.permute.xlu0 %2290
      %2292 = vrot.lane.b32.xlu0 %v2279, 112
      %v2293 = vpop.permute.xlu0 %2292
      %2296 = vrot.lane.b32.xlu0 %v2276, 104
      %v2297 = vpop.permute.xlu0 %2296
      %2298 = vrot.lane.b32.xlu0 %v2279, 104
      %v2299 = vpop.permute.xlu0 %2298
      %v2302 = vpack.c.bf16 %v1444, %v1443
      %v2304 = vlaneseq
      %v2305 = vshrl.u32 %v2304, 7
      %v2306 = vsub.s32 0, %v2305
      %v2307 = vrot.slane %v1414, %v2306
      %v2313 = vunpack.c.l.b16 %v1410
      %v2314 = vunpack.c.l.b16 %v1411
      %v2315 = vunpack.c.l.b16 %v1412
      %v2316 = vunpack.c.l.b16 %v1413
      %v2317 = vpack.c.b16 %v2314, %v2313
      %v2318 = vpack.c.b16 %v2316, %v2315
      %v2322 = vsel %vm1468, %v2302, 0
      %2324 = vmatprep.subr.bf16.mxu0 0
      %2325 = vmatpush1.bf16.msra.mxu0 %v2317
      %2326 = vmatprep.subr.bf16.mxu0 0
      %2327 = vmatpush1.bf16.msra.mxu0 %v2318
      %2328 = vmatprep.subr.bf16.mxu0 0
      %2329 = vmatpush1.bf16.msra.mxu0 0
      %2330 = vmatprep.subr.bf16.mxu0 0
      %2331 = vmatpush1.bf16.msra.mxu0 0
      %2332 = vmatprep.subr.bf16.mxu0 0
      %2333 = vmatpush1.bf16.msra.mxu0 0
      %2334 = vmatprep.subr.bf16.mxu0 0
      %2335 = vmatpush1.bf16.msra.mxu0 0
      %2336 = vmatprep.subr.bf16.mxu0 0
      %2337 = vmatpush1.bf16.msra.mxu0 0
      %2338 = vmatprep.subr.bf16.mxu0 0
      %2339 = vmatpush1.bf16.msra.mxu0 0
      %2340 = vmatprep.subr.bf16.mxu0 0
      %2341 = vmatpush1.bf16.msra.mxu0 0
      %2342 = vmatprep.subr.bf16.mxu0 0
      %2343 = vmatpush1.bf16.msra.mxu0 0
      %2344 = vmatprep.subr.bf16.mxu0 0
      %2345 = vmatpush1.bf16.msra.mxu0 0
      %2346 = vmatprep.subr.bf16.mxu0 0
      %2347 = vmatpush1.bf16.msra.mxu0 0
      %2348 = vmatprep.subr.bf16.mxu0 0
      %2349 = vmatpush1.bf16.msra.mxu0 0
      %2350 = vmatprep.subr.bf16.mxu0 0
      %2351 = vmatpush1.bf16.msra.mxu0 0
      %2352 = vmatprep.subr.bf16.mxu0 0
      %2353 = vmatpush1.bf16.msra.mxu0 0
      %2354 = vmatprep.subr.bf16.mxu0 0
      %2355 = vmatpush1.bf16.msra.mxu0 0
      %2356 = vmatprep.mubr.bf16.mxu0 0
      %2357 = vmatmul.mubr.bf16.gmra.mrb[0].mxu0 %v2322
      %v2358 = vpop.f32.mrb[0].mxu0
      %v2359 = vadd.f32 %v2307, %v2358
      %v2360 = vpop.f32.mrb[0].mxu0
      %v2361 = vpop.f32.mrb[0].mxu0
      %v2362 = vadd.f32 %v2307, %v2361
      %v2363 = vpop.f32.mrb[0].mxu0
      %2364 = vdwg.mxu0
      %2367 = vrot.lane.b32.xlu0 %v2359, 120
      %v2368 = vpop.permute.xlu0 %2367
      %2369 = vrot.lane.b32.xlu0 %v2362, 120
      %v2370 = vpop.permute.xlu0 %2369
      %2373 = vrot.lane.b32.xlu0 %v2359, 112
      %v2374 = vpop.permute.xlu0 %2373
      %2375 = vrot.lane.b32.xlu0 %v2362, 112
      %v2376 = vpop.permute.xlu0 %2375
      %2379 = vrot.lane.b32.xlu0 %v2359, 104
      %v2380 = vpop.permute.xlu0 %2379
      %2381 = vrot.lane.b32.xlu0 %v2362, 104
      %v2382 = vpop.permute.xlu0 %2381
      %v2385 = vpack.c.bf16 %v2202, %v2202
      %v2386 = vpack.c.bf16 %v2209, %v2209
      %v2387 = vpack.c.bf16 %v2212, %v2212
      %v2388 = vpack.c.bf16 %v2215, %v2215
      %v2389 = vpack.c.bf16 %v2279, %v2276
      %v2390 = vpack.c.bf16 %v2287, %v2285
      %v2391 = vpack.c.bf16 %v2293, %v2291
      %v2392 = vpack.c.bf16 %v2299, %v2297
      %v2394 = vsel %vm1614, %v2385, 0
      %v2397 = vsel %vm1614, %v2389, 0
      %2399 = vmatprep.subr.bf16.mxu0 0
      %2400 = vmatpush1.bf16.xpose.msra.mxu0 %v2397
      %2401 = vmatprep.subr.bf16.mxu0 0
      %2402 = vmatpush1.bf16.xpose.msra.mxu0 0
      %2403 = vmatprep.subr.bf16.mxu0 0
      %2404 = vmatpush1.bf16.xpose.msra.mxu0 0
      %2405 = vmatprep.subr.bf16.mxu0 0
      %2406 = vmatpush1.bf16.xpose.msra.mxu0 0
      %2407 = vmatprep.subr.bf16.mxu0 0
      %2408 = vmatpush1.bf16.xpose.msra.mxu0 0
      %2409 = vmatprep.subr.bf16.mxu0 0
      %2410 = vmatpush1.bf16.xpose.msra.mxu0 0
      %2411 = vmatprep.subr.bf16.mxu0 0
      %2412 = vmatpush1.bf16.xpose.msra.mxu0 0
      %2413 = vmatprep.subr.bf16.mxu0 0
      %2414 = vmatpush1.bf16.xpose.msra.mxu0 0
      %2415 = vmatprep.subr.bf16.mxu0 0
      %2416 = vmatpush1.bf16.xpose.msra.mxu0 0
      %2417 = vmatprep.subr.bf16.mxu0 0
      %2418 = vmatpush1.bf16.xpose.msra.mxu0 0
      %2419 = vmatprep.subr.bf16.mxu0 0
      %2420 = vmatpush1.bf16.xpose.msra.mxu0 0
      %2421 = vmatprep.subr.bf16.mxu0 0
      %2422 = vmatpush1.bf16.xpose.msra.mxu0 0
      %2423 = vmatprep.subr.bf16.mxu0 0
      %2424 = vmatpush1.bf16.xpose.msra.mxu0 0
      %2425 = vmatprep.subr.bf16.mxu0 0
      %2426 = vmatpush1.bf16.xpose.msra.mxu0 0
      %2427 = vmatprep.subr.bf16.mxu0 0
      %2428 = vmatpush1.bf16.xpose.msra.mxu0 0
      %2429 = vmatprep.subr.bf16.mxu0 0
      %2430 = vmatpush1.bf16.xpose.msra.mxu0 0
      %2431 = vmatprep.mubr.bf16.mxu0 0
      %2432 = vmatmul.mubr.bf16.gmra.mrb[0].mxu0 %v2394
      %v2433 = vpop.f32.mrb[0].mxu0
      %v2434 = vadd.f32 0.0, %v2433
      %v2435 = vpop.f32.mrb[0].mxu0
      %v2436 = vpop.f32.mrb[0].mxu0
      %v2437 = vpop.f32.mrb[0].mxu0
      %2438 = vdwg.mxu0
      %v2440 = vsel %vm1614, %v2386, 0
      %v2443 = vsel %vm1614, %v2390, 0
      %2445 = vmatprep.subr.bf16.mxu0 0
      %2446 = vmatpush1.bf16.xpose.msra.mxu0 %v2443
      %2447 = vmatprep.subr.bf16.mxu0 0
      %2448 = vmatpush1.bf16.xpose.msra.mxu0 0
      %2449 = vmatprep.subr.bf16.mxu0 0
      %2450 = vmatpush1.bf16.xpose.msra.mxu0 0
      %2451 = vmatprep.subr.bf16.mxu0 0
      %2452 = vmatpush1.bf16.xpose.msra.mxu0 0
      %2453 = vmatprep.subr.bf16.mxu0 0
      %2454 = vmatpush1.bf16.xpose.msra.mxu0 0
      %2455 = vmatprep.subr.bf16.mxu0 0
      %2456 = vmatpush1.bf16.xpose.msra.mxu0 0
      %2457 = vmatprep.subr.bf16.mxu0 0
      %2458 = vmatpush1.bf16.xpose.msra.mxu0 0
      %2459 = vmatprep.subr.bf16.mxu0 0
      %2460 = vmatpush1.bf16.xpose.msra.mxu0 0
      %2461 = vmatprep.subr.bf16.mxu0 0
      %2462 = vmatpush1.bf16.xpose.msra.mxu0 0
      %2463 = vmatprep.subr.bf16.mxu0 0
      %2464 = vmatpush1.bf16.xpose.msra.mxu0 0
      %2465 = vmatprep.subr.bf16.mxu0 0
      %2466 = vmatpush1.bf16.xpose.msra.mxu0 0
      %2467 = vmatprep.subr.bf16.mxu0 0
      %2468 = vmatpush1.bf16.xpose.msra.mxu0 0
      %2469 = vmatprep.subr.bf16.mxu0 0
      %2470 = vmatpush1.bf16.xpose.msra.mxu0 0
      %2471 = vmatprep.subr.bf16.mxu0 0
      %2472 = vmatpush1.bf16.xpose.msra.mxu0 0
      %2473 = vmatprep.subr.bf16.mxu0 0
      %2474 = vmatpush1.bf16.xpose.msra.mxu0 0
      %2475 = vmatprep.subr.bf16.mxu0 0
      %2476 = vmatpush1.bf16.xpose.msra.mxu0 0
      %2477 = vmatprep.mubr.bf16.mxu0 0
      %2478 = vmatmul.mubr.bf16.gmra.mrb[0].mxu0 %v2440
      %v2479 = vpop.f32.mrb[0].mxu0
      %v2480 = vadd.f32 0.0, %v2479
      %v2481 = vpop.f32.mrb[0].mxu0
      %v2482 = vpop.f32.mrb[0].mxu0
      %v2483 = vpop.f32.mrb[0].mxu0
      %2484 = vdwg.mxu0
      %v2486 = vsel %vm1614, %v2387, 0
      %v2489 = vsel %vm1614, %v2391, 0
      %2491 = vmatprep.subr.bf16.mxu0 0
      %2492 = vmatpush1.bf16.xpose.msra.mxu0 %v2489
      %2493 = vmatprep.subr.bf16.mxu0 0
      %2494 = vmatpush1.bf16.xpose.msra.mxu0 0
      %2495 = vmatprep.subr.bf16.mxu0 0
      %2496 = vmatpush1.bf16.xpose.msra.mxu0 0
      %2497 = vmatprep.subr.bf16.mxu0 0
      %2498 = vmatpush1.bf16.xpose.msra.mxu0 0
      %2499 = vmatprep.subr.bf16.mxu0 0
      %2500 = vmatpush1.bf16.xpose.msra.mxu0 0
      %2501 = vmatprep.subr.bf16.mxu0 0
      %2502 = vmatpush1.bf16.xpose.msra.mxu0 0
      %2503 = vmatprep.subr.bf16.mxu0 0
      %2504 = vmatpush1.bf16.xpose.msra.mxu0 0
      %2505 = vmatprep.subr.bf16.mxu0 0
      %2506 = vmatpush1.bf16.xpose.msra.mxu0 0
      %2507 = vmatprep.subr.bf16.mxu0 0
      %2508 = vmatpush1.bf16.xpose.msra.mxu0 0
      %2509 = vmatprep.subr.bf16.mxu0 0
      %2510 = vmatpush1.bf16.xpose.msra.mxu0 0
      %2511 = vmatprep.subr.bf16.mxu0 0
      %2512 = vmatpush1.bf16.xpose.msra.mxu0 0
      %2513 = vmatprep.subr.bf16.mxu0 0
      %2514 = vmatpush1.bf16.xpose.msra.mxu0 0
      %2515 = vmatprep.subr.bf16.mxu0 0
      %2516 = vmatpush1.bf16.xpose.msra.mxu0 0
      %2517 = vmatprep.subr.bf16.mxu0 0
      %2518 = vmatpush1.bf16.xpose.msra.mxu0 0
      %2519 = vmatprep.subr.bf16.mxu0 0
      %2520 = vmatpush1.bf16.xpose.msra.mxu0 0
      %2521 = vmatprep.subr.bf16.mxu0 0
      %2522 = vmatpush1.bf16.xpose.msra.mxu0 0
      %2523 = vmatprep.mubr.bf16.mxu0 0
      %2524 = vmatmul.mubr.bf16.gmra.mrb[0].mxu0 %v2486
      %v2525 = vpop.f32.mrb[0].mxu0
      %v2526 = vadd.f32 0.0, %v2525
      %v2527 = vpop.f32.mrb[0].mxu0
      %v2528 = vpop.f32.mrb[0].mxu0
      %v2529 = vpop.f32.mrb[0].mxu0
      %2530 = vdwg.mxu0
      %v2532 = vsel %vm1614, %v2388, 0
      %v2535 = vsel %vm1614, %v2392, 0
      %2537 = vmatprep.subr.bf16.mxu0 0
      %2538 = vmatpush1.bf16.xpose.msra.mxu0 %v2535
      %2539 = vmatprep.subr.bf16.mxu0 0
      %2540 = vmatpush1.bf16.xpose.msra.mxu0 0
      %2541 = vmatprep.subr.bf16.mxu0 0
      %2542 = vmatpush1.bf16.xpose.msra.mxu0 0
      %2543 = vmatprep.subr.bf16.mxu0 0
      %2544 = vmatpush1.bf16.xpose.msra.mxu0 0
      %2545 = vmatprep.subr.bf16.mxu0 0
      %2546 = vmatpush1.bf16.xpose.msra.mxu0 0
      %2547 = vmatprep.subr.bf16.mxu0 0
      %2548 = vmatpush1.bf16.xpose.msra.mxu0 0
      %2549 = vmatprep.subr.bf16.mxu0 0
      %2550 = vmatpush1.bf16.xpose.msra.mxu0 0
      %2551 = vmatprep.subr.bf16.mxu0 0
      %2552 = vmatpush1.bf16.xpose.msra.mxu0 0
      %2553 = vmatprep.subr.bf16.mxu0 0
      %2554 = vmatpush1.bf16.xpose.msra.mxu0 0
      %2555 = vmatprep.subr.bf16.mxu0 0
      %2556 = vmatpush1.bf16.xpose.msra.mxu0 0
      %2557 = vmatprep.subr.bf16.mxu0 0
      %2558 = vmatpush1.bf16.xpose.msra.mxu0 0
      %2559 = vmatprep.subr.bf16.mxu0 0
      %2560 = vmatpush1.bf16.xpose.msra.mxu0 0
      %2561 = vmatprep.subr.bf16.mxu0 0
      %2562 = vmatpush1.bf16.xpose.msra.mxu0 0
      %2563 = vmatprep.subr.bf16.mxu0 0
      %2564 = vmatpush1.bf16.xpose.msra.mxu0 0
      %2565 = vmatprep.subr.bf16.mxu0 0
      %2566 = vmatpush1.bf16.xpose.msra.mxu0 0
      %2567 = vmatprep.subr.bf16.mxu0 0
      %2568 = vmatpush1.bf16.xpose.msra.mxu0 0
      %2569 = vmatprep.mubr.bf16.mxu0 0
      %2570 = vmatmul.mubr.bf16.gmra.mrb[0].mxu0 %v2532
      %v2571 = vpop.f32.mrb[0].mxu0
      %v2572 = vadd.f32 0.0, %v2571
      %v2573 = vpop.f32.mrb[0].mxu0
      %v2574 = vpop.f32.mrb[0].mxu0
      %v2575 = vpop.f32.mrb[0].mxu0
      %2576 = vdwg.mxu0
      %v2577 = vsel %vm2049, %v2434, -inf
      %2578 = vmax.xlane.f32.xlu0 %v2577
      %v2579 = vpop.xlane.xlu0 %2578
      %v2580 = vsel %vm2049, %v2480, -inf
      %2581 = vmax.xlane.f32.xlu0 %v2580
      %v2582 = vpop.xlane.xlu0 %2581
      %v2583 = vsel %vm2049, %v2526, -inf
      %2584 = vmax.xlane.f32.xlu0 %v2583
      %v2585 = vpop.xlane.xlu0 %2584
      %v2586 = vsel %vm2049, %v2572, -inf
      %2587 = vmax.xlane.f32.xlu0 %v2586
      %v2588 = vpop.xlane.xlu0 %2587
      %v2589 = vsub.f32 %v2434, %v2579
      %v2590 = vsub.f32 %v2480, %v2582
      %v2591 = vsub.f32 %v2526, %v2585
      %v2592 = vsub.f32 %v2572, %v2588
      %v2593 = vmul.f32 %v2589, 1.442695
      %v2594 = vpow.pop %v2593
      %v2595 = vmul.f32 %v2590, 1.442695
      %v2596 = vpow.pop %v2595
      %v2597 = vmul.f32 %v2591, 1.442695
      %v2598 = vpow.pop %v2597
      %v2599 = vmul.f32 %v2592, 1.442695
      %v2600 = vpow.pop %v2599
      %v2601 = vsel %vm2049, %v2594, 0.0
      %2602 = vadd.xlane.f32.xlu0 %v2601
      %v2603 = vpop.xlane.xlu0 %2602
      %v2604 = vsel %vm2049, %v2596, 0.0
      %2605 = vadd.xlane.f32.xlu0 %v2604
      %v2606 = vpop.xlane.xlu0 %2605
      %v2607 = vsel %vm2049, %v2598, 0.0
      %2608 = vadd.xlane.f32.xlu0 %v2607
      %v2609 = vpop.xlane.xlu0 %2608
      %v2610 = vsel %vm2049, %v2600, 0.0
      %2611 = vadd.xlane.f32.xlu0 %v2610
      %v2612 = vpop.xlane.xlu0 %2611
      %v2613 = vrcp.pop %v2603
      %v2614 = vrcp.pop %v2606
      %v2615 = vrcp.pop %v2609
      %v2616 = vrcp.pop %v2612
      %v2617 = vmul.f32 %v2594, %v2613
      %v2618 = vmul.f32 %v2596, %v2614
      %v2619 = vmul.f32 %v2598, %v2615
      %v2620 = vmul.f32 %v2600, %v2616
      %v2621 = vpack.c.bf16 %v2617, %v2617
      %v2622 = vpack.c.bf16 %v2618, %v2618
      %v2623 = vpack.c.bf16 %v2619, %v2619
      %v2624 = vpack.c.bf16 %v2620, %v2620
      %v2625 = vpack.c.bf16 %v2362, %v2359
      %v2626 = vpack.c.bf16 %v2370, %v2368
      %v2627 = vpack.c.bf16 %v2376, %v2374
      %v2628 = vpack.c.bf16 %v2382, %v2380
      %v2630 = vsel %vm2049, %v2621, 0
      %2632 = vmatprep.subr.bf16.mxu0 0
      %2633 = vmatpush1.bf16.msra.mxu0 %v2625
      %2634 = vmatprep.subr.bf16.mxu0 0
      %2635 = vmatpush1.bf16.msra.mxu0 0
      %2636 = vmatprep.subr.bf16.mxu0 0
      %2637 = vmatpush1.bf16.msra.mxu0 0
      %2638 = vmatprep.subr.bf16.mxu0 0
      %2639 = vmatpush1.bf16.msra.mxu0 0
      %2640 = vmatprep.subr.bf16.mxu0 0
      %2641 = vmatpush1.bf16.msra.mxu0 0
      %2642 = vmatprep.subr.bf16.mxu0 0
      %2643 = vmatpush1.bf16.msra.mxu0 0
      %2644 = vmatprep.subr.bf16.mxu0 0
      %2645 = vmatpush1.bf16.msra.mxu0 0
      %2646 = vmatprep.subr.bf16.mxu0 0
      %2647 = vmatpush1.bf16.msra.mxu0 0
      %2648 = vmatprep.subr.bf16.mxu0 0
      %2649 = vmatpush1.bf16.msra.mxu0 0
      %2650 = vmatprep.subr.bf16.mxu0 0
      %2651 = vmatpush1.bf16.msra.mxu0 0
      %2652 = vmatprep.subr.bf16.mxu0 0
      %2653 = vmatpush1.bf16.msra.mxu0 0
      %2654 = vmatprep.subr.bf16.mxu0 0
      %2655 = vmatpush1.bf16.msra.mxu0 0
      %2656 = vmatprep.subr.bf16.mxu0 0
      %2657 = vmatpush1.bf16.msra.mxu0 0
      %2658 = vmatprep.subr.bf16.mxu0 0
      %2659 = vmatpush1.bf16.msra.mxu0 0
      %2660 = vmatprep.subr.bf16.mxu0 0
      %2661 = vmatpush1.bf16.msra.mxu0 0
      %2662 = vmatprep.subr.bf16.mxu0 0
      %2663 = vmatpush1.bf16.msra.mxu0 0
      %2664 = vmatprep.mubr.bf16.mxu0 0
      %2665 = vmatmul.mubr.bf16.gmra.mrb[0].mxu0 %v2630
      %v2666 = vpop.f32.mrb[0].mxu0
      %v2667 = vadd.f32 0.0, %v2666
      %v2668 = vpop.f32.mrb[0].mxu0
      %v2669 = vpop.f32.mrb[0].mxu0
      %v2670 = vpop.f32.mrb[0].mxu0
      %2671 = vdwg.mxu0
      %v2673 = vsel %vm2049, %v2622, 0
      %2675 = vmatprep.subr.bf16.mxu0 0
      %2676 = vmatpush1.bf16.msra.mxu0 %v2626
      %2677 = vmatprep.subr.bf16.mxu0 0
      %2678 = vmatpush1.bf16.msra.mxu0 0
      %2679 = vmatprep.subr.bf16.mxu0 0
      %2680 = vmatpush1.bf16.msra.mxu0 0
      %2681 = vmatprep.subr.bf16.mxu0 0
      %2682 = vmatpush1.bf16.msra.mxu0 0
      %2683 = vmatprep.subr.bf16.mxu0 0
      %2684 = vmatpush1.bf16.msra.mxu0 0
      %2685 = vmatprep.subr.bf16.mxu0 0
      %2686 = vmatpush1.bf16.msra.mxu0 0
      %2687 = vmatprep.subr.bf16.mxu0 0
      %2688 = vmatpush1.bf16.msra.mxu0 0
      %2689 = vmatprep.subr.bf16.mxu0 0
      %2690 = vmatpush1.bf16.msra.mxu0 0
      %2691 = vmatprep.subr.bf16.mxu0 0
      %2692 = vmatpush1.bf16.msra.mxu0 0
      %2693 = vmatprep.subr.bf16.mxu0 0
      %2694 = vmatpush1.bf16.msra.mxu0 0
      %2695 = vmatprep.subr.bf16.mxu0 0
      %2696 = vmatpush1.bf16.msra.mxu0 0
      %2697 = vmatprep.subr.bf16.mxu0 0
      %2698 = vmatpush1.bf16.msra.mxu0 0
      %2699 = vmatprep.subr.bf16.mxu0 0
      %2700 = vmatpush1.bf16.msra.mxu0 0
      %2701 = vmatprep.subr.bf16.mxu0 0
      %2702 = vmatpush1.bf16.msra.mxu0 0
      %2703 = vmatprep.subr.bf16.mxu0 0
      %2704 = vmatpush1.bf16.msra.mxu0 0
      %2705 = vmatprep.subr.bf16.mxu0 0
      %2706 = vmatpush1.bf16.msra.mxu0 0
      %2707 = vmatprep.mubr.bf16.mxu0 0
      %2708 = vmatmul.mubr.bf16.gmra.mrb[0].mxu0 %v2673
      %v2709 = vpop.f32.mrb[0].mxu0
      %v2710 = vadd.f32 0.0, %v2709
      %v2711 = vpop.f32.mrb[0].mxu0
      %v2712 = vpop.f32.mrb[0].mxu0
      %v2713 = vpop.f32.mrb[0].mxu0
      %2714 = vdwg.mxu0
      %v2716 = vsel %vm2049, %v2623, 0
      %2718 = vmatprep.subr.bf16.mxu0 0
      %2719 = vmatpush1.bf16.msra.mxu0 %v2627
      %2720 = vmatprep.subr.bf16.mxu0 0
      %2721 = vmatpush1.bf16.msra.mxu0 0
      %2722 = vmatprep.subr.bf16.mxu0 0
      %2723 = vmatpush1.bf16.msra.mxu0 0
      %2724 = vmatprep.subr.bf16.mxu0 0
      %2725 = vmatpush1.bf16.msra.mxu0 0
      %2726 = vmatprep.subr.bf16.mxu0 0
      %2727 = vmatpush1.bf16.msra.mxu0 0
      %2728 = vmatprep.subr.bf16.mxu0 0
      %2729 = vmatpush1.bf16.msra.mxu0 0
      %2730 = vmatprep.subr.bf16.mxu0 0
      %2731 = vmatpush1.bf16.msra.mxu0 0
      %2732 = vmatprep.subr.bf16.mxu0 0
      %2733 = vmatpush1.bf16.msra.mxu0 0
      %2734 = vmatprep.subr.bf16.mxu0 0
      %2735 = vmatpush1.bf16.msra.mxu0 0
      %2736 = vmatprep.subr.bf16.mxu0 0
      %2737 = vmatpush1.bf16.msra.mxu0 0
      %2738 = vmatprep.subr.bf16.mxu0 0
      %2739 = vmatpush1.bf16.msra.mxu0 0
      %2740 = vmatprep.subr.bf16.mxu0 0
      %2741 = vmatpush1.bf16.msra.mxu0 0
      %2742 = vmatprep.subr.bf16.mxu0 0
      %2743 = vmatpush1.bf16.msra.mxu0 0
      %2744 = vmatprep.subr.bf16.mxu0 0
      %2745 = vmatpush1.bf16.msra.mxu0 0
      %2746 = vmatprep.subr.bf16.mxu0 0
      %2747 = vmatpush1.bf16.msra.mxu0 0
      %2748 = vmatprep.subr.bf16.mxu0 0
      %2749 = vmatpush1.bf16.msra.mxu0 0
      %2750 = vmatprep.mubr.bf16.mxu0 0
      %2751 = vmatmul.mubr.bf16.gmra.mrb[0].mxu0 %v2716
      %v2752 = vpop.f32.mrb[0].mxu0
      %v2753 = vadd.f32 0.0, %v2752
      %v2754 = vpop.f32.mrb[0].mxu0
      %v2755 = vpop.f32.mrb[0].mxu0
      %v2756 = vpop.f32.mrb[0].mxu0
      %2757 = vdwg.mxu0
      %v2759 = vsel %vm2049, %v2624, 0
      %2761 = vmatprep.subr.bf16.mxu0 0
      %2762 = vmatpush1.bf16.msra.mxu0 %v2628
      %2763 = vmatprep.subr.bf16.mxu0 0
      %2764 = vmatpush1.bf16.msra.mxu0 0
      %2765 = vmatprep.subr.bf16.mxu0 0
      %2766 = vmatpush1.bf16.msra.mxu0 0
      %2767 = vmatprep.subr.bf16.mxu0 0
      %2768 = vmatpush1.bf16.msra.mxu0 0
      %2769 = vmatprep.subr.bf16.mxu0 0
      %2770 = vmatpush1.bf16.msra.mxu0 0
      %2771 = vmatprep.subr.bf16.mxu0 0
      %2772 = vmatpush1.bf16.msra.mxu0 0
      %2773 = vmatprep.subr.bf16.mxu0 0
      %2774 = vmatpush1.bf16.msra.mxu0 0
      %2775 = vmatprep.subr.bf16.mxu0 0
      %2776 = vmatpush1.bf16.msra.mxu0 0
      %2777 = vmatprep.subr.bf16.mxu0 0
      %2778 = vmatpush1.bf16.msra.mxu0 0
      %2779 = vmatprep.subr.bf16.mxu0 0
      %2780 = vmatpush1.bf16.msra.mxu0 0
      %2781 = vmatprep.subr.bf16.mxu0 0
      %2782 = vmatpush1.bf16.msra.mxu0 0
      %2783 = vmatprep.subr.bf16.mxu0 0
      %2784 = vmatpush1.bf16.msra.mxu0 0
      %2785 = vmatprep.subr.bf16.mxu0 0
      %2786 = vmatpush1.bf16.msra.mxu0 0
      %2787 = vmatprep.subr.bf16.mxu0 0
      %2788 = vmatpush1.bf16.msra.mxu0 0
      %2789 = vmatprep.subr.bf16.mxu0 0
      %2790 = vmatpush1.bf16.msra.mxu0 0
      %2791 = vmatprep.subr.bf16.mxu0 0
      %2792 = vmatpush1.bf16.msra.mxu0 0
      %2793 = vmatprep.mubr.bf16.mxu0 0
      %2794 = vmatmul.mubr.bf16.gmra.mrb[0].mxu0 %v2759
      %v2795 = vpop.f32.mrb[0].mxu0
      %v2796 = vadd.f32 0.0, %v2795
      %v2797 = vpop.f32.mrb[0].mxu0
      %v2798 = vpop.f32.mrb[0].mxu0
      %v2799 = vpop.f32.mrb[0].mxu0
      %2800 = vdwg.mxu0
      %2802 = vrot.lane.b32.xlu0 %v2710, 8
      %v2803 = vpop.permute.xlu0 %2802
      %2806 = vrot.lane.b32.xlu0 %v2753, 16
      %v2807 = vpop.permute.xlu0 %2806
      %2810 = vrot.lane.b32.xlu0 %v2796, 24
      %v2811 = vpop.permute.xlu0 %2810
      %v2813 = vsel %vm1614, %v2667, %v2803
      %v2814 = vsel %vm2049, %v2813, %v2807
      %v2815 = vsel %vm2051, %v2814, %v2811
      %v2816 = vpack.c.bf16 %v2815, %v2815
      %v2818 = vlaneseq
      %v2819 = vshrl.u32 %v2818, 7
      %v2820 = vsub.s32 0, %v2819
      %v2821 = vrot.slane %v1419, %v2820
      %v2827 = vunpack.c.l.b16 %v1415
      %v2828 = vunpack.c.l.b16 %v1416
      %v2829 = vunpack.c.l.b16 %v1417
      %v2830 = vunpack.c.l.b16 %v1418
      %v2831 = vpack.c.b16 %v2828, %v2827
      %v2832 = vpack.c.b16 %v2830, %v2829
      %v2836 = vsel %vm1468, %v2816, 0
      %2838 = vmatprep.subr.bf16.mxu0 0
      %2839 = vmatpush1.bf16.msra.mxu0 %v2831
      %2840 = vmatprep.subr.bf16.mxu0 0
      %2841 = vmatpush1.bf16.msra.mxu0 %v2832
      %2842 = vmatprep.subr.bf16.mxu0 0
      %2843 = vmatpush1.bf16.msra.mxu0 0
      %2844 = vmatprep.subr.bf16.mxu0 0
      %2845 = vmatpush1.bf16.msra.mxu0 0
      %2846 = vmatprep.subr.bf16.mxu0 0
      %2847 = vmatpush1.bf16.msra.mxu0 0
      %2848 = vmatprep.subr.bf16.mxu0 0
      %2849 = vmatpush1.bf16.msra.mxu0 0
      %2850 = vmatprep.subr.bf16.mxu0 0
      %2851 = vmatpush1.bf16.msra.mxu0 0
      %2852 = vmatprep.subr.bf16.mxu0 0
      %2853 = vmatpush1.bf16.msra.mxu0 0
      %2854 = vmatprep.subr.bf16.mxu0 0
      %2855 = vmatpush1.bf16.msra.mxu0 0
      %2856 = vmatprep.subr.bf16.mxu0 0
      %2857 = vmatpush1.bf16.msra.mxu0 0
      %2858 = vmatprep.subr.bf16.mxu0 0
      %2859 = vmatpush1.bf16.msra.mxu0 0
      %2860 = vmatprep.subr.bf16.mxu0 0
      %2861 = vmatpush1.bf16.msra.mxu0 0
      %2862 = vmatprep.subr.bf16.mxu0 0
      %2863 = vmatpush1.bf16.msra.mxu0 0
      %2864 = vmatprep.subr.bf16.mxu0 0
      %2865 = vmatpush1.bf16.msra.mxu0 0
      %2866 = vmatprep.subr.bf16.mxu0 0
      %2867 = vmatpush1.bf16.msra.mxu0 0
      %2868 = vmatprep.subr.bf16.mxu0 0
      %2869 = vmatpush1.bf16.msra.mxu0 0
      %2870 = vmatprep.mubr.bf16.mxu0 0
      %2871 = vmatmul.mubr.bf16.gmra.mrb[0].mxu0 %v2836
      %v2872 = vpop.f32.mrb[0].mxu0
      %v2873 = vadd.f32 %v2821, %v2872
      %v2874 = vpop.f32.mrb[0].mxu0
      %v2875 = vpop.f32.mrb[0].mxu0
      %v2876 = vpop.f32.mrb[0].mxu0
      %2877 = vdwg.mxu0
      %v2878 = vadd.f32 %v2143, %v2873
      %v2879 = vsel %vm1468, %v2878, 0.0
      %2880 = vadd.xlane.f32.xlu0 %v2879
      %v2881 = vpop.xlane.xlu0 %2880
      %v2882 = vmul.f32 %v2881, %v2119
      %v2883 = vsub.f32 %v2878, %v2882
      %v2884 = vmul.f32 %v2883, %v2883
      %v2885 = vsel %vm1468, %v2884, 0.0
      %2886 = vadd.xlane.f32.xlu0 %v2885
      %v2887 = vpop.xlane.xlu0 %2886
      %v2888 = vmul.f32 %v2887, %v2119
      %v2889 = vadd.f32 %v2888, 1e-05
      %v2890 = vrsqrt.pop %v2889
      %v2891 = vmul.f32 %v2883, %v2890
      %v2893 = vlaneseq
      %v2894 = vshrl.u32 %v2893, 7
      %v2895 = vsub.s32 0, %v2894
      %v2896 = vrot.slane %v1436, %v2895
      %v2898 = vmul.f32 %v2891, %v2896
      %v2900 = vlaneseq
      %v2901 = vshrl.u32 %v2900, 7
      %v2902 = vsub.s32 0, %v2901
      %v2903 = vrot.slane %v1437, %v2902
      %v2905 = vadd.f32 %v2898, %v2903
      %v2906 = vpack.c.bf16 %v2905, %v2905
      %v2908 = vlaneseq
      %v2909 = vshrl.u32 %v2908, 7
      %v2910 = vsub.s32 0, %v2909
      %v2911 = vrot.slane %v1424, %v2910
      %v2917 = vunpack.c.l.b16 %v1420
      %v2918 = vunpack.c.l.b16 %v1421
      %v2919 = vunpack.c.l.b16 %v1422
      %v2920 = vunpack.c.l.b16 %v1423
      %v2921 = vpack.c.b16 %v2918, %v2917
      %v2922 = vpack.c.b16 %v2920, %v2919
      %v2926 = vsel %vm1468, %v2906, 0
      %2928 = vmatprep.subr.bf16.mxu0 0
      %2929 = vmatpush1.bf16.msra.mxu0 %v2921
      %2930 = vmatprep.subr.bf16.mxu0 0
      %2931 = vmatpush1.bf16.msra.mxu0 %v2922
      %2932 = vmatprep.subr.bf16.mxu0 0
      %2933 = vmatpush1.bf16.msra.mxu0 0
      %2934 = vmatprep.subr.bf16.mxu0 0
      %2935 = vmatpush1.bf16.msra.mxu0 0
      %2936 = vmatprep.subr.bf16.mxu0 0
      %2937 = vmatpush1.bf16.msra.mxu0 0
      %2938 = vmatprep.subr.bf16.mxu0 0
      %2939 = vmatpush1.bf16.msra.mxu0 0
      %2940 = vmatprep.subr.bf16.mxu0 0
      %2941 = vmatpush1.bf16.msra.mxu0 0
      %2942 = vmatprep.subr.bf16.mxu0 0
      %2943 = vmatpush1.bf16.msra.mxu0 0
      %2944 = vmatprep.subr.bf16.mxu0 0
      %2945 = vmatpush1.bf16.msra.mxu0 0
      %2946 = vmatprep.subr.bf16.mxu0 0
      %2947 = vmatpush1.bf16.msra.mxu0 0
      %2948 = vmatprep.subr.bf16.mxu0 0
      %2949 = vmatpush1.bf16.msra.mxu0 0
      %2950 = vmatprep.subr.bf16.mxu0 0
      %2951 = vmatpush1.bf16.msra.mxu0 0
      %2952 = vmatprep.subr.bf16.mxu0 0
      %2953 = vmatpush1.bf16.msra.mxu0 0
      %2954 = vmatprep.subr.bf16.mxu0 0
      %2955 = vmatpush1.bf16.msra.mxu0 0
      %2956 = vmatprep.subr.bf16.mxu0 0
      %2957 = vmatpush1.bf16.msra.mxu0 0
      %2958 = vmatprep.subr.bf16.mxu0 0
      %2959 = vmatpush1.bf16.msra.mxu0 0
      %2960 = vmatprep.mubr.bf16.mxu0 0
      %2961 = vmatmul.mubr.bf16.gmra.mrb[0].mxu0 %v2926
      %v2962 = vpop.f32.mrb[0].mxu0
      %v2963 = vadd.f32 %v2911, %v2962
      %v2964 = vpop.f32.mrb[0].mxu0
      %v2965 = vpop.f32.mrb[0].mxu0
      %v2966 = vpop.f32.mrb[0].mxu0
      %2967 = vdwg.mxu0
      %v2968 = vmax.f32 %v2963, 0.0
      %v2969 = vpack.c.bf16 %v2968, %v2968
      %v2971 = vlaneseq
      %v2972 = vshrl.u32 %v2971, 7
      %v2973 = vsub.s32 0, %v2972
      %v2974 = vrot.slane %v1433, %v2973
      %v2984 = vunpack.c.l.b16 %v1425
      %v2985 = vunpack.c.l.b16 %v1426
      %v2986 = vunpack.c.l.b16 %v1427
      %v2987 = vunpack.c.l.b16 %v1428
      %v2988 = vunpack.c.l.b16 %v1429
      %v2989 = vunpack.c.l.b16 %v1430
      %v2990 = vunpack.c.l.b16 %v1431
      %v2991 = vunpack.c.l.b16 %v1432
      %v2992 = vpack.c.b16 %v2985, %v2984
      %v2993 = vpack.c.b16 %v2987, %v2986
      %v2994 = vpack.c.b16 %v2989, %v2988
      %v2995 = vpack.c.b16 %v2991, %v2990
      %vm3000 = vcmask 523264
      %v3002 = vsel %vm3000, %v2969, 0
      %3004 = vmatprep.subr.bf16.mxu0 0
      %3005 = vmatpush1.bf16.msra.mxu0 %v2992
      %3006 = vmatprep.subr.bf16.mxu0 0
      %3007 = vmatpush1.bf16.msra.mxu0 %v2993
      %3008 = vmatprep.subr.bf16.mxu0 0
      %3009 = vmatpush1.bf16.msra.mxu0 %v2994
      %3010 = vmatprep.subr.bf16.mxu0 0
      %3011 = vmatpush1.bf16.msra.mxu0 %v2995
      %3012 = vmatprep.subr.bf16.mxu0 0
      %3013 = vmatpush1.bf16.msra.mxu0 0
      %3014 = vmatprep.subr.bf16.mxu0 0
      %3015 = vmatpush1.bf16.msra.mxu0 0
      %3016 = vmatprep.subr.bf16.mxu0 0
      %3017 = vmatpush1.bf16.msra.mxu0 0
      %3018 = vmatprep.subr.bf16.mxu0 0
      %3019 = vmatpush1.bf16.msra.mxu0 0
      %3020 = vmatprep.subr.bf16.mxu0 0
      %3021 = vmatpush1.bf16.msra.mxu0 0
      %3022 = vmatprep.subr.bf16.mxu0 0
      %3023 = vmatpush1.bf16.msra.mxu0 0
      %3024 = vmatprep.subr.bf16.mxu0 0
      %3025 = vmatpush1.bf16.msra.mxu0 0
      %3026 = vmatprep.subr.bf16.mxu0 0
      %3027 = vmatpush1.bf16.msra.mxu0 0
      %3028 = vmatprep.subr.bf16.mxu0 0
      %3029 = vmatpush1.bf16.msra.mxu0 0
      %3030 = vmatprep.subr.bf16.mxu0 0
      %3031 = vmatpush1.bf16.msra.mxu0 0
      %3032 = vmatprep.subr.bf16.mxu0 0
      %3033 = vmatpush1.bf16.msra.mxu0 0
      %3034 = vmatprep.subr.bf16.mxu0 0
      %3035 = vmatpush1.bf16.msra.mxu0 0
      %3036 = vmatprep.mubr.bf16.mxu0 0
      %3037 = vmatmul.mubr.bf16.gmra.mrb[0].mxu0 %v3002
      %v3038 = vpop.f32.mrb[0].mxu0
      %v3039 = vadd.f32 %v2974, %v3038
      %v3040 = vpop.f32.mrb[0].mxu0
      %v3041 = vpop.f32.mrb[0].mxu0
      %v3042 = vpop.f32.mrb[0].mxu0
      %3043 = vdwg.mxu0
      %v3044 = vadd.f32 %v2905, %v3039
      %v3045 = vsel %vm1468, %v3044, 0.0
      %3046 = vadd.xlane.f32.xlu0 %v3045
      %v3047 = vpop.xlane.xlu0 %3046
      %v3048 = vmul.f32 %v3047, %v2119
      %v3049 = vsub.f32 %v3044, %v3048
      %v3050 = vmul.f32 %v3049, %v3049
      %v3051 = vsel %vm1468, %v3050, 0.0
      %3052 = vadd.xlane.f32.xlu0 %v3051
      %v3053 = vpop.xlane.xlu0 %3052
      %v3054 = vmul.f32 %v3053, %v2119
      %v3055 = vadd.f32 %v3054, 1e-05
      %v3056 = vrsqrt.pop %v3055
      %v3057 = vmul.f32 %v3049, %v3056
      %v3059 = vlaneseq
      %v3060 = vshrl.u32 %v3059, 7
      %v3061 = vsub.s32 0, %v3060
      %v3062 = vrot.slane %v1438, %v3061
      %v3064 = vmul.f32 %v3057, %v3062
      %v3066 = vlaneseq
      %v3067 = vshrl.u32 %v3066, 7
      %v3068 = vsub.s32 0, %v3067
      %v3069 = vrot.slane %v1439, %v3068
      %v3071 = vadd.f32 %v3064, %v3069
      %3072 = vst.msk [vmem:[#allocation2] sm:$0xff] %vm1468, %v3071
      %p3073 = scmp.eq.s32.totalorder %s75, 1
      // Predicated region
      $region141: #{transformer_layer_sequence.1} parent=135 // pred_check
        %p3074 = pneg %p3073
      $region142: #{transformer_layer_sequence.1} parent=135 // pred_check_branch
        %3076 = sbr.rel (%p3074) target = $region144
      $region143: #{transformer_layer_sequence.1} parent=135 // pred_region
        %3077 = vst.msk [vmem:[%s1376] sm:$0xff] %vm1468, %v3071
      $region144: #{transformer_layer_sequence.1} parent=135 // pred_fallthru
        _
      %p3078 = scmp.lt.s32.totalorder %s74, 1
      %s3079 = scalar_select %p3078, %s74, 1
      %s3080 = smul.addr %s3079, 8
      %s3081 = scalar_lea.vmem %s59, %s3080
      // Predicated region
      $region145: #{transformer_layer_sequence.1} parent=135 // pred_check
        %p3082 = pneg %p854
      $region146: #{transformer_layer_sequence.1} parent=135 // pred_check_branch
        %3084 = sbr.rel (%p3082) target = $region148
      $region147: #{transformer_layer_sequence.1} parent=135 // pred_region
        _
      $region148: #{transformer_layer_sequence.1} parent=135 // pred_fallthru
        _
    $region136: #{transformer_layer_sequence.1} parent=5 // pred_fallthru
      _
    %p3085 = scmp.le.s32.totalorder 2, %s65
    // Predicated region
    $region149: #{transformer_layer_sequence.1} parent=5 // pred_check
      %p3086 = pneg %p3085
    $region150: #{transformer_layer_sequence.1} parent=5 // pred_check_branch
      %3088 = sbr.rel (%p3086) target = $region152
    $region151: #{transformer_layer_sequence.1} parent=5 // pred_region
      %s3089 = ssub.s32 %s65, 2
      // Predicated region
      $region153: #{transformer_layer_sequence.1} parent=151 // pred_check
        %p3090 = pneg %p860
      $region154: #{transformer_layer_sequence.1} parent=151 // pred_check_branch
        %3092 = sbr.rel (%p3090) target = $region156
      $region155: #{transformer_layer_sequence.1} parent=151 // pred_region
        %p3093 = scmp.lt.s32.totalorder %s76, 1
        %s3094 = scalar_select %p3093, %s76, 1
        %s3095 = smul.addr %s3094, 8
        %s3096 = scalar_lea.vmem %s59, %s3095
      $region156: #{transformer_layer_sequence.1} parent=151 // pred_fallthru
        _
    $region152: #{transformer_layer_sequence.1} parent=5 // pred_fallthru
      _
  $region6: #{transformer_layer_sequence.1} parent=0 // loop_footer
    %s69 = sadd.s32 1, %s65
  $region7: #{transformer_layer_sequence.1} parent=0 // loop_footer_branch
    %64 = sbr.rel target = $region3
  $region8: #{transformer_layer_sequence.1} parent=0 // loop_exit
    _

</llo_original>
